<compile_context>
chip_gen: v7x
topology: tpu7x:2x2x1
jax: 0.10.0
libtpu: 0.0.40
codegen_flags: <defaults>
</compile_context>

<pallas_src>
import math

import numpy as np
import jax
import jax.numpy as jnp
from jax.experimental import pallas as pl
from jax.experimental.pallas import tpu as pltpu

D_MODEL = 128  # embednet default d_model


def _bilinear_matrix(out_size: int, in_size: int) -> np.ndarray:
    """Row-interpolation matrix matching F.interpolate(mode='bilinear',
    align_corners=False): out = M @ in (per column)."""
    M = np.zeros((out_size, in_size), dtype=np.float32)
    scale = in_size / out_size
    for i in range(out_size):
        src = (i + 0.5) * scale - 0.5
        src = max(src, 0.0)
        i0 = min(int(math.floor(src)), in_size - 1)
        i1 = min(i0 + 1, in_size - 1)
        frac = src - i0
        M[i, i0] += 1.0 - frac
        M[i, i1] += frac
    return M


def embednet_kernel(x_ref, lh_ref, lwt_ref, wqkv_ref, bqkv_ref, wo_ref, bo_ref, o_ref):
    D = D_MODEL
    C, Hin, Win = x_ref.shape[1], x_ref.shape[2], x_ref.shape[3]

    x = x_ref[0].astype(jnp.bfloat16)                                  # [C, Hin, Win]

    # --- Bilinear resize (separable), batched over C with shared (broadcast) matrices ---
    lh_b = jnp.broadcast_to(lh_ref[...], (C, D, Hin))                  # bf16 [C, D, Hin]
    lwt_b = jnp.broadcast_to(lwt_ref[...], (C, Win, D))                # bf16 [C, Win, D]
    t1 = jax.lax.dot_general(lh_b, x, (((2,), (1,)), ((0,), (0,))),
                             preferred_element_type=jnp.float32)       # [C, D, Win]
    t = jax.lax.dot_general(t1.astype(jnp.bfloat16), lwt_b,
                            (((2,), (1,)), ((0,), (0,))),
                            preferred_element_type=jnp.float32)        # [C, D, D]

    # --- Fused QKV projection: stack the C slices along rows -> one [C*D, 3D] matmul ---
    t2 = t.astype(jnp.bfloat16).reshape(C * D, D)
    qkv = jnp.dot(t2, wqkv_ref[...],
                  preferred_element_type=jnp.float32) + bqkv_ref[...]  # [C*D, 3D] f32
    # 1/sqrt(d_k) is already folded into the Wq / bq portion of wqkv / bqkv.
    q = qkv[:, 0:D].reshape(C, D, D).astype(jnp.bfloat16)
    k = qkv[:, D:2 * D].reshape(C, D, D).astype(jnp.bfloat16)
    v = qkv[:, 2 * D:3 * D].reshape(C, D, D).astype(jnp.bfloat16)

    # --- Scaled dot-product attention, per slice (batch dim = C) ---
    scores = jax.lax.dot_general(q, k, (((2,), (2,)), ((0,), (0,))),
                                 preferred_element_type=jnp.float32)   # [C, D, D] = q @ k^T
    # Numerically stable softmax in f32; reciprocal on the EUP slot.
    m = jnp.max(scores, axis=-1, keepdims=True)
    e = jnp.exp(scores - m)
    p = e * pl.reciprocal(jnp.sum(e, axis=-1, keepdims=True), approx=True)
    # TODO(synk): dropout on p_attn omitted (eval-mode identity).
    ctx = jax.lax.dot_general(p.astype(jnp.bfloat16), v,
                              (((2,), (1,)), ((0,), (0,))),
                              preferred_element_type=jnp.float32)      # [C, D, D]

    # --- Output projection, stacked along rows again ---
    y = jnp.dot(ctx.astype(jnp.bfloat16).reshape(C * D, D), wo_ref[...],
                preferred_element_type=jnp.float32) + bo_ref[...]      # [C*D, D]
    o_ref[0] = y.reshape(C, D, D).astype(o_ref.dtype)


def embednet_forward(x, params):
    B, C, Hin, Win = x.shape
    D = D_MODEL
    scale = 1.0 / math.sqrt(D)

    # Pack parameters for the kernel: bf16 MXU operands, QKV fusion, scale folded into Wq/bq.
    lh = params['lh'].astype(jnp.bfloat16)                              # [D, Hin]
    lwt = params['lwt'].astype(jnp.bfloat16)                            # [Win, D]
    wqkv = jnp.concatenate([params['wq'] * scale, params['wk'], params['wv']],
                           axis=1).astype(jnp.bfloat16)                 # [D, 3D]
    bqkv = jnp.concatenate([params['bq'] * scale, params['bk'], params['bv']],
                           axis=1).astype(jnp.float32)                  # [1, 3D]
    wo = params['wo'].astype(jnp.bfloat16)                              # [D, D]
    bo = params['bo'].astype(jnp.float32)                               # [1, D]

    const2 = lambda b: (0, 0)
    return pl.pallas_call(
        embednet_kernel,
        out_shape=jax.ShapeDtypeStruct((B, C, D, D), jnp.float32),
        grid=(B,),
        in_specs=[
            pl.BlockSpec((1, C, Hin, Win), lambda b: (b, 0, 0, 0)),     # x for batch b
            pl.BlockSpec((D, Hin), const2),                             # Lh
            pl.BlockSpec((Win, D), const2),                             # Lw^T
            pl.BlockSpec((D, 3 * D), const2),                           # [Wq*s | Wk | Wv]
            pl.BlockSpec((1, 3 * D), const2),                           # [bq*s | bk | bv]
            pl.BlockSpec((D, D), const2),                               # Wo
            pl.BlockSpec((1, D), const2),                               # bo
        ],
        out_specs=pl.BlockSpec((1, C, D, D), lambda b: (b, 0, 0, 0)),
        compiler_params=pltpu.CompilerParams(
            dimension_semantics=("parallel",)),
    )(x, lh, lwt, wqkv, bqkv, wo, bo)


def embednet_ref(x, params):
    """Pure-JAX f32 reference of the same math, for a correctness check."""
    D = D_MODEL
    t = jnp.einsum('dh,bchw->bcdw', params['lh'], x)
    t = jnp.einsum('bcdw,we->bcde', t, params['lwt'])
    q = t @ params['wq'] + params['bq']
    k = t @ params['wk'] + params['bk']
    v = t @ params['wv'] + params['bv']
    scores = jnp.einsum('bcqd,bckd->bcqk', q, k) / math.sqrt(D)
    p = jax.nn.softmax(scores, axis=-1)
    ctx = jnp.einsum('bcqk,bckd->bcqd', p, v)
    return ctx @ params['wo'] + params['bo']


def init_params(key, Hin, Win):
    """Deterministic parameter init (PyTorch nn.Linear default U(-1/sqrt(in), 1/sqrt(in)));
    linear weights stored pre-transposed as [in, out]."""
    D = D_MODEL
    bound = 1.0 / math.sqrt(D)
    ks = jax.random.split(key, 8)

    def lin(kw, kb):
        w_t = jax.random.uniform(kw, (D, D), jnp.float32, -bound, bound)
        b = jax.random.uniform(kb, (1, D), jnp.float32, -bound, bound)
        return w_t, b

    wq, bq = lin(ks[0], ks[1])
    wk, bk = lin(ks[2], ks[3])
    wv, bv = lin(ks[4], ks[5])
    wo, bo = lin(ks[6], ks[7])
    return dict(
        lh=jnp.asarray(_bilinear_matrix(D, Hin)),        # [D, Hin]
        lwt=jnp.asarray(_bilinear_matrix(D, Win)).T,     # [Win, D]
        wq=wq, bq=bq, wk=wk, bk=bk, wv=wv, bv=bv, wo=wo, bo=bo)


if __name__ == "__main__":
    B, C, Hin, Win = 2, 4, 16, 16
    key = jax.random.PRNGKey(0)
    kx, kp = jax.random.split(key)
    x = jax.random.normal(kx, (B, C, Hin, Win), jnp.float32)
    params = init_params(kp, Hin, Win)

    out = jax.block_until_ready(embednet_forward(x, params))
    ref = jax.block_until_ready(embednet_ref(x, params))

    assert out.shape == (B, C, D_MODEL, D_MODEL)
    np.testing.assert_allclose(np.asarray(out), np.asarray(ref), rtol=2e-2, atol=2e-2)

    print("KERNEL_OK")
</pallas_src>

<mosaic_0001>
module attributes {stable_mosaic.version = 11 : i64} {
  func.func @embednet_kernel(%arg0: i32, %arg1: memref<1x4x16x16xf32, #tpu.memory_space<vmem>>, %arg2: memref<128x16xbf16, #tpu.memory_space<vmem>>, %arg3: memref<16x128xbf16, #tpu.memory_space<vmem>>, %arg4: memref<128x384xbf16, #tpu.memory_space<vmem>>, %arg5: memref<1x384xf32, #tpu.memory_space<vmem>>, %arg6: memref<128x128xbf16, #tpu.memory_space<vmem>>, %arg7: memref<1x128xf32, #tpu.memory_space<vmem>>, %arg8: memref<1x4x128x128xf32, #tpu.memory_space<vmem>>) attributes {dimension_semantics = [#tpu.dimension_semantics<parallel>], iteration_bounds = array<i64: 2>, scalar_prefetch = 0 : i64, scratch_operands = 0 : i64, tpu.core_type = #tpu.core_type<tc>, window_params = [{transform_indices = @transform_0, window_bounds = array<i64: 1, 4, 16, 16>}, {pipeline_mode = #tpu.pipeline_mode<synchronous>, transform_indices = @transform_1, window_bounds = array<i64: 128, 16>}, {pipeline_mode = #tpu.pipeline_mode<synchronous>, transform_indices = @transform_2, window_bounds = array<i64: 16, 128>}, {pipeline_mode = #tpu.pipeline_mode<synchronous>, transform_indices = @transform_3, window_bounds = array<i64: 128, 384>}, {pipeline_mode = #tpu.pipeline_mode<synchronous>, transform_indices = @transform_4, window_bounds = array<i64: 1, 384>}, {pipeline_mode = #tpu.pipeline_mode<synchronous>, transform_indices = @transform_5, window_bounds = array<i64: 128, 128>}, {pipeline_mode = #tpu.pipeline_mode<synchronous>, transform_indices = @transform_6, window_bounds = array<i64: 1, 128>}, {transform_indices = @transform_7, window_bounds = array<i64: 1, 4, 128, 128>}]} {
    %c0 = arith.constant 0 : index
    %c0_0 = arith.constant 0 : index
    %c0_1 = arith.constant 0 : index
    %c0_2 = arith.constant 0 : index
    %0 = vector.load %arg1[%c0, %c0_0, %c0_1, %c0_2] : memref<1x4x16x16xf32, #tpu.memory_space<vmem>>, vector<1x4x16x16xf32>
    %1 = vector.shape_cast %0 : vector<1x4x16x16xf32> to vector<4x16x16xf32>
    %2 = arith.truncf %1 : vector<4x16x16xf32> to vector<4x16x16xbf16>
    %c0_3 = arith.constant 0 : index
    %c0_4 = arith.constant 0 : index
    %3 = vector.load %arg2[%c0_3, %c0_4] : memref<128x16xbf16, #tpu.memory_space<vmem>>, vector<128x16xbf16>
    %4 = vector.shape_cast %3 : vector<128x16xbf16> to vector<1x128x16xbf16>
    %5 = vector.broadcast %4 : vector<1x128x16xbf16> to vector<4x128x16xbf16>
    %c0_5 = arith.constant 0 : index
    %c0_6 = arith.constant 0 : index
    %6 = vector.load %arg3[%c0_5, %c0_6] : memref<16x128xbf16, #tpu.memory_space<vmem>>, vector<16x128xbf16>
    %7 = vector.shape_cast %6 : vector<16x128xbf16> to vector<1x16x128xbf16>
    %8 = vector.broadcast %7 : vector<1x16x128xbf16> to vector<4x16x128xbf16>
    %cst = arith.constant dense<0.000000e+00> : vector<4x128x16xf32>
    %9 = tpu.matmul %5, %2, %cst {dimension_numbers = #tpu.dot_dimension_numbers<[2], [1], [1], [2], [0, 0, 0, 1, 1, 2], [0], [0]>} : vector<4x128x16xbf16>, vector<4x16x16xbf16>, vector<4x128x16xf32> -> vector<4x128x16xf32>
    %10 = arith.truncf %9 : vector<4x128x16xf32> to vector<4x128x16xbf16>
    %cst_7 = arith.constant dense<0.000000e+00> : vector<4x128x128xf32>
    %11 = tpu.matmul %10, %8, %cst_7 {dimension_numbers = #tpu.dot_dimension_numbers<[2], [1], [1], [2], [0, 0, 0, 1, 1, 2], [0], [0]>} : vector<4x128x16xbf16>, vector<4x16x128xbf16>, vector<4x128x128xf32> -> vector<4x128x128xf32>
    %12 = arith.truncf %11 : vector<4x128x128xf32> to vector<4x128x128xbf16>
    %13 = vector.shape_cast %12 : vector<4x128x128xbf16> to vector<512x128xbf16>
    %c0_8 = arith.constant 0 : index
    %c0_9 = arith.constant 0 : index
    %14 = vector.load %arg4[%c0_8, %c0_9] : memref<128x384xbf16, #tpu.memory_space<vmem>>, vector<128x384xbf16>
    %cst_10 = arith.constant dense<0.000000e+00> : vector<512x384xf32>
    %15 = tpu.matmul %13, %14, %cst_10 {dimension_numbers = #tpu.dot_dimension_numbers<[1], [0], [0], [1], [0, 0, 1, 1], [], []>} : vector<512x128xbf16>, vector<128x384xbf16>, vector<512x384xf32> -> vector<512x384xf32>
    %c0_11 = arith.constant 0 : index
    %c0_12 = arith.constant 0 : index
    %16 = vector.load %arg5[%c0_11, %c0_12] : memref<1x384xf32, #tpu.memory_space<vmem>>, vector<1x384xf32>
    %17 = vector.broadcast %16 : vector<1x384xf32> to vector<512x384xf32>
    %18 = arith.addf %15, %17 : vector<512x384xf32>
    %19 = vector.extract_strided_slice %18 {offsets = [0, 0], sizes = [512, 128], strides = [1, 1]} : vector<512x384xf32> to vector<512x128xf32>
    %20 = vector.shape_cast %19 : vector<512x128xf32> to vector<4x128x128xf32>
    %21 = arith.truncf %20 : vector<4x128x128xf32> to vector<4x128x128xbf16>
    %22 = vector.extract_strided_slice %18 {offsets = [0, 128], sizes = [512, 128], strides = [1, 1]} : vector<512x384xf32> to vector<512x128xf32>
    %23 = vector.shape_cast %22 : vector<512x128xf32> to vector<4x128x128xf32>
    %24 = arith.truncf %23 : vector<4x128x128xf32> to vector<4x128x128xbf16>
    %25 = vector.extract_strided_slice %18 {offsets = [0, 256], sizes = [512, 128], strides = [1, 1]} : vector<512x384xf32> to vector<512x128xf32>
    %26 = vector.shape_cast %25 : vector<512x128xf32> to vector<4x128x128xf32>
    %27 = arith.truncf %26 : vector<4x128x128xf32> to vector<4x128x128xbf16>
    %cst_13 = arith.constant dense<0.000000e+00> : vector<4x128x128xf32>
    %28 = tpu.matmul %21, %24, %cst_13 {dimension_numbers = #tpu.dot_dimension_numbers<[2], [2], [1], [1], [0, 0, 0, 1, 1, 1], [0], [0]>} : vector<4x128x128xbf16>, vector<4x128x128xbf16>, vector<4x128x128xf32> -> vector<4x128x128xf32>
    %cst_14 = arith.constant dense<0xFF800000> : vector<4x128xf32>
    %29 = vector.multi_reduction <maximumf>, %28, %cst_14 [2] : vector<4x128x128xf32> to vector<4x128xf32>
    %30 = vector.shape_cast %29 : vector<4x128xf32> to vector<4x128x1xf32>
    %31 = vector.broadcast %30 : vector<4x128x1xf32> to vector<4x128x128xf32>
    %32 = arith.subf %28, %31 : vector<4x128x128xf32>
    %33 = math.exp %32 : vector<4x128x128xf32>
    %cst_15 = arith.constant dense<0.000000e+00> : vector<4x128xf32>
    %34 = vector.multi_reduction <add>, %33, %cst_15 [2] : vector<4x128x128xf32> to vector<4x128xf32>
    %35 = vector.shape_cast %34 : vector<4x128xf32> to vector<4x128x1xf32>
    %36 = tpu.reciprocal %35 {approx = true} : vector<4x128x1xf32> -> vector<4x128x1xf32>
    %37 = vector.broadcast %36 : vector<4x128x1xf32> to vector<4x128x128xf32>
    %38 = arith.mulf %33, %37 : vector<4x128x128xf32>
    %39 = arith.truncf %38 : vector<4x128x128xf32> to vector<4x128x128xbf16>
    %cst_16 = arith.constant dense<0.000000e+00> : vector<4x128x128xf32>
    %40 = tpu.matmul %39, %27, %cst_16 {dimension_numbers = #tpu.dot_dimension_numbers<[2], [1], [1], [2], [0, 0, 0, 1, 1, 2], [0], [0]>} : vector<4x128x128xbf16>, vector<4x128x128xbf16>, vector<4x128x128xf32> -> vector<4x128x128xf32>
    %41 = arith.truncf %40 : vector<4x128x128xf32> to vector<4x128x128xbf16>
    %42 = vector.shape_cast %41 : vector<4x128x128xbf16> to vector<512x128xbf16>
    %c0_17 = arith.constant 0 : index
    %c0_18 = arith.constant 0 : index
    %43 = vector.load %arg6[%c0_17, %c0_18] : memref<128x128xbf16, #tpu.memory_space<vmem>>, vector<128x128xbf16>
    %cst_19 = arith.constant dense<0.000000e+00> : vector<512x128xf32>
    %44 = tpu.matmul %42, %43, %cst_19 {dimension_numbers = #tpu.dot_dimension_numbers<[1], [0], [0], [1], [0, 0, 1, 1], [], []>} : vector<512x128xbf16>, vector<128x128xbf16>, vector<512x128xf32> -> vector<512x128xf32>
    %c0_20 = arith.constant 0 : index
    %c0_21 = arith.constant 0 : index
    %45 = vector.load %arg7[%c0_20, %c0_21] : memref<1x128xf32, #tpu.memory_space<vmem>>, vector<1x128xf32>
    %46 = vector.broadcast %45 : vector<1x128xf32> to vector<512x128xf32>
    %47 = arith.addf %44, %46 : vector<512x128xf32>
    %48 = vector.shape_cast %47 : vector<512x128xf32> to vector<4x128x128xf32>
    %c0_22 = arith.constant 0 : index
    %c0_23 = arith.constant 0 : index
    %c0_24 = arith.constant 0 : index
    %c0_25 = arith.constant 0 : index
    %49 = vector.load %arg8[%c0_22, %c0_23, %c0_24, %c0_25] : memref<1x4x128x128xf32, #tpu.memory_space<vmem>>, vector<1x4x128x128xf32>
    %50 = vector.shape_cast %49 : vector<1x4x128x128xf32> to vector<4x128x128xf32>
    %51 = vector.shape_cast %48 : vector<4x128x128xf32> to vector<1x4x128x128xf32>
    tpu.vector_store %arg8[%c0_22, %c0_23, %c0_24, %c0_25], %51 {strides = array<i32>} : memref<1x4x128x128xf32, #tpu.memory_space<vmem>>, vector<1x4x128x128xf32>,
    return
  }
  func.func @transform_0(%arg0: i32) -> (i32, i32, i32, i32) {
    %c0_i32 = arith.constant 0 : i32
    %c0_i32_0 = arith.constant 0 : i32
    %c0_i32_1 = arith.constant 0 : i32
    %c0_i32_2 = arith.constant 0 : i32
    return %arg0, %c0_i32, %c0_i32_0, %c0_i32_1 : i32, i32, i32, i32
  }
  func.func @transform_1(%arg0: i32) -> (i32, i32) {
    %c0_i32 = arith.constant 0 : i32
    %c0_i32_0 = arith.constant 0 : i32
    %c0_i32_1 = arith.constant 0 : i32
    return %c0_i32, %c0_i32_0 : i32, i32
  }
  func.func @transform_2(%arg0: i32) -> (i32, i32) {
    %c0_i32 = arith.constant 0 : i32
    %c0_i32_0 = arith.constant 0 : i32
    %c0_i32_1 = arith.constant 0 : i32
    return %c0_i32, %c0_i32_0 : i32, i32
  }
  func.func @transform_3(%arg0: i32) -> (i32, i32) {
    %c0_i32 = arith.constant 0 : i32
    %c0_i32_0 = arith.constant 0 : i32
    %c0_i32_1 = arith.constant 0 : i32
    return %c0_i32, %c0_i32_0 : i32, i32
  }
  func.func @transform_4(%arg0: i32) -> (i32, i32) {
    %c0_i32 = arith.constant 0 : i32
    %c0_i32_0 = arith.constant 0 : i32
    %c0_i32_1 = arith.constant 0 : i32
    return %c0_i32, %c0_i32_0 : i32, i32
  }
  func.func @transform_5(%arg0: i32) -> (i32, i32) {
    %c0_i32 = arith.constant 0 : i32
    %c0_i32_0 = arith.constant 0 : i32
    %c0_i32_1 = arith.constant 0 : i32
    return %c0_i32, %c0_i32_0 : i32, i32
  }
  func.func @transform_6(%arg0: i32) -> (i32, i32) {
    %c0_i32 = arith.constant 0 : i32
    %c0_i32_0 = arith.constant 0 : i32
    %c0_i32_1 = arith.constant 0 : i32
    return %c0_i32, %c0_i32_0 : i32, i32
  }
  func.func @transform_7(%arg0: i32) -> (i32, i32, i32, i32) {
    %c0_i32 = arith.constant 0 : i32
    %c0_i32_0 = arith.constant 0 : i32
    %c0_i32_1 = arith.constant 0 : i32
    %c0_i32_2 = arith.constant 0 : i32
    return %arg0, %c0_i32, %c0_i32_0, %c0_i32_1 : i32, i32, i32, i32
  }
}

</mosaic_0001>

<llo_original>
// kernel: tpu_custom_call.1
$region0: #{tpu_custom_call.1}
  #allocation0 [shape = 'u32[]', space=smem, size = 0x4, offset = 0x4, fixed_abs, tag = 'smem constant byte address 0x4 - core index']
  #allocation1 [shape = 'u32[144,128]{1,0:T(1,128)}', space=vmem, size = 0x12000, scoped, tag = 'internal scratch']
  %s0 = inlined_call_operand.hbm [shape: f32[2,4,16,16], index: 0, kind: input, shape index: {}]
  %s1 = inlined_call_operand.vmem [shape: bf16[128,16], index: 1, kind: input, shape index: {}]
  %s2 = inlined_call_operand.vmem [shape: bf16[16,128], index: 2, kind: input, shape index: {}]
  %s3 = inlined_call_operand.hbm [shape: bf16[128,384], index: 3, kind: input, shape index: {}]
  %s4 = inlined_call_operand.vmem [shape: f32[1,384], index: 4, kind: input, shape index: {}]
  %s5 = inlined_call_operand.vmem [shape: bf16[128,128], index: 5, kind: input, shape index: {}]
  %s6 = inlined_call_operand.vmem [shape: f32[1,128], index: 6, kind: input, shape index: {}]
  %s7 = inlined_call_operand.hbm [shape: f32[2,4,128,128], index: 7, kind: output, shape index: {}]
  %s8 = sld [smem:[#allocation0]]
  $region69: #{tpu_custom_call.1} parent=0
    _
  %s10 = ssub.s32 1, %s8
  %s11 = scalar_select 0, %s10, %s8
  $region1: #{tpu_custom_call.1} parent=0
    #allocation2 [shape = 'u8[65536]{0}', space=vmem, size = 0x10000, scoped, tag = 'input window, operand 0']
    #allocation3 [shape = 's32[2]{0}', space=sflag, size = 0x8, scoped, tag = 'scoped memory for tpu_custom_call.1']
    #allocation4 [shape = 's32[2]{0}', space=sflag, size = 0x8, scoped, tag = 'scoped memory for tpu_custom_call.1']
    #allocation5 [shape = 'u8[98304]{0}', space=vmem, size = 0x18000, scoped, tag = 'input window, operand 3, single buffered']
    #allocation6 [shape = 's32[1]{0}', space=sflag, size = 0x4, scoped, tag = 'scoped memory for tpu_custom_call.1']
    #allocation7 [shape = 'u8[524288]{0}', space=vmem, size = 0x80000, scoped, tag = 'output window, operand 0']
    %12 = vsyncpa [#allocation3], 0
    %s13 = scalar_lea.sflag [#allocation3], 1
    %14 = vsyncpa %s13, 0
    %15 = vsyncpa [#allocation6], 0
    %16 = vsyncpa [#allocation4], 0
    %s17 = scalar_lea.sflag [#allocation4], 1
    %18 = vsyncpa %s17, 0
    loop: start=0, step=1, limit=4
    $region2: #{tpu_custom_call.1} parent=1 // loop_pre_header
      _
    $region3: #{tpu_custom_call.1} parent=1 // loop_header
      %s20 = sphi 0, %s24
      %p21 = scmp.ge.s32.totalorder %s20, 4
      %s30 = sphi 0, %s32
      %s33 = sphi 0, %s30
      %s34 = sphi 0, %s33
      %s50 = sphi 0, %s34
      %s54 = sphi 0, %s54
      %s56 = sphi 0, %s54
      %s57 = sphi 0, %s56
      %s71 = sphi 0, %s57
      %s75 = sphi 0, %s75
      %s77 = sphi 0, %s75
      %s78 = sphi 0, %s77
      %s92 = sphi 0, %s78
      %s96 = sphi 0, %s96
      %s98 = sphi 0, %s96
      %s99 = sphi 0, %s98
      %s113 = sphi 0, %s99
      %s117 = sphi 0, %s117
      %s119 = sphi 0, %s117
      %s120 = sphi 0, %s119
      %s134 = sphi 0, %s120
      %s138 = sphi 0, %s138
      %s140 = sphi 0, %s138
      %s141 = sphi 0, %s140
      %s155 = sphi 0, %s141
      %s159 = sphi 0, %s159
      %s161 = sphi 0, %s159
      %s162 = sphi 0, %s161
      %s176 = sphi 0, %s162
      %s182 = sphi 0, %s184
      %s185 = sphi 0, %s182
      %s186 = sphi 0, %s185
      %s202 = sphi 0, %s186
    $region4: #{tpu_custom_call.1} parent=1 // loop_header_branch
      %23 = sbr.rel (%p21) target = $region8
    $region5: #{tpu_custom_call.1} parent=1 // loop_body
      %s25 = ssub.s32 %s20, 1
      %s26 = ssub.s32 %s20, 2
      %s27 = sadd.s32 %s20, 1
      %s28 = ssub.s32 %s20, %s27
      %p29 = scmp.eq.s32.totalorder %s28, 0
      %s31 = sadd.s32 %s30, 1
      %s32 = scalar_select %p29, %s30, %s31
      %p35 = pneg %p29
      %p36 = scmp.eq.s32.totalorder %s20, 1
      %p37 = por %p35, %p36
      %p38 = scmp.ne.s32.totalorder %s30, %s33
      %p39 = scmp.eq.s32.totalorder %s20, 0
      %p40 = por %p38, %p39
      %p41 = scmp.ne.s32.totalorder %s30, %s33
      %p42 = scmp.eq.s32.totalorder %s25, 1
      %p43 = por %p41, %p42
      %p44 = scmp.ne.s32.totalorder %s33, %s34
      %p45 = scmp.eq.s32.totalorder %s25, 0
      %p46 = por %p44, %p45
      %p47 = scmp.ne.s32.totalorder %s33, %s34
      %p48 = scmp.eq.s32.totalorder %s26, 1
      %p49 = por %p47, %p48
      %p51 = scmp.ne.s32.totalorder %s34, %s50
      %p52 = scmp.eq.s32.totalorder %s26, 0
      %p53 = por %p51, %p52
      %s55 = sadd.s32 %s54, 1
      %p58 = scmp.eq.s32.totalorder %s20, 1
      %p59 = scmp.ne.s32.totalorder %s54, %s56
      %p60 = scmp.eq.s32.totalorder %s20, 0
      %p61 = por %p59, %p60
      %p62 = scmp.ne.s32.totalorder %s54, %s56
      %p63 = scmp.eq.s32.totalorder %s25, 1
      %p64 = por %p62, %p63
      %p65 = scmp.ne.s32.totalorder %s56, %s57
      %p66 = scmp.eq.s32.totalorder %s25, 0
      %p67 = por %p65, %p66
      %p68 = scmp.ne.s32.totalorder %s56, %s57
      %p69 = scmp.eq.s32.totalorder %s26, 1
      %p70 = por %p68, %p69
      %p72 = scmp.ne.s32.totalorder %s57, %s71
      %p73 = scmp.eq.s32.totalorder %s26, 0
      %p74 = por %p72, %p73
      %s76 = sadd.s32 %s75, 1
      %p79 = scmp.eq.s32.totalorder %s20, 1
      %p80 = scmp.ne.s32.totalorder %s75, %s77
      %p81 = scmp.eq.s32.totalorder %s20, 0
      %p82 = por %p80, %p81
      %p83 = scmp.ne.s32.totalorder %s75, %s77
      %p84 = scmp.eq.s32.totalorder %s25, 1
      %p85 = por %p83, %p84
      %p86 = scmp.ne.s32.totalorder %s77, %s78
      %p87 = scmp.eq.s32.totalorder %s25, 0
      %p88 = por %p86, %p87
      %p89 = scmp.ne.s32.totalorder %s77, %s78
      %p90 = scmp.eq.s32.totalorder %s26, 1
      %p91 = por %p89, %p90
      %p93 = scmp.ne.s32.totalorder %s78, %s92
      %p94 = scmp.eq.s32.totalorder %s26, 0
      %p95 = por %p93, %p94
      %s97 = sadd.s32 %s96, 1
      %p100 = scmp.eq.s32.totalorder %s20, 1
      %p101 = scmp.ne.s32.totalorder %s96, %s98
      %p102 = scmp.eq.s32.totalorder %s20, 0
      %p103 = por %p101, %p102
      %p104 = scmp.ne.s32.totalorder %s96, %s98
      %p105 = scmp.eq.s32.totalorder %s25, 1
      %p106 = por %p104, %p105
      %p107 = scmp.ne.s32.totalorder %s98, %s99
      %p108 = scmp.eq.s32.totalorder %s25, 0
      %p109 = por %p107, %p108
      %p110 = scmp.ne.s32.totalorder %s98, %s99
      %p111 = scmp.eq.s32.totalorder %s26, 1
      %p112 = por %p110, %p111
      %p114 = scmp.ne.s32.totalorder %s99, %s113
      %p115 = scmp.eq.s32.totalorder %s26, 0
      %p116 = por %p114, %p115
      %s118 = sadd.s32 %s117, 1
      %p121 = scmp.eq.s32.totalorder %s20, 1
      %p122 = scmp.ne.s32.totalorder %s117, %s119
      %p123 = scmp.eq.s32.totalorder %s20, 0
      %p124 = por %p122, %p123
      %p125 = scmp.ne.s32.totalorder %s117, %s119
      %p126 = scmp.eq.s32.totalorder %s25, 1
      %p127 = por %p125, %p126
      %p128 = scmp.ne.s32.totalorder %s119, %s120
      %p129 = scmp.eq.s32.totalorder %s25, 0
      %p130 = por %p128, %p129
      %p131 = scmp.ne.s32.totalorder %s119, %s120
      %p132 = scmp.eq.s32.totalorder %s26, 1
      %p133 = por %p131, %p132
      %p135 = scmp.ne.s32.totalorder %s120, %s134
      %p136 = scmp.eq.s32.totalorder %s26, 0
      %p137 = por %p135, %p136
      %s139 = sadd.s32 %s138, 1
      %p142 = scmp.eq.s32.totalorder %s20, 1
      %p143 = scmp.ne.s32.totalorder %s138, %s140
      %p144 = scmp.eq.s32.totalorder %s20, 0
      %p145 = por %p143, %p144
      %p146 = scmp.ne.s32.totalorder %s138, %s140
      %p147 = scmp.eq.s32.totalorder %s25, 1
      %p148 = por %p146, %p147
      %p149 = scmp.ne.s32.totalorder %s140, %s141
      %p150 = scmp.eq.s32.totalorder %s25, 0
      %p151 = por %p149, %p150
      %p152 = scmp.ne.s32.totalorder %s140, %s141
      %p153 = scmp.eq.s32.totalorder %s26, 1
      %p154 = por %p152, %p153
      %p156 = scmp.ne.s32.totalorder %s141, %s155
      %p157 = scmp.eq.s32.totalorder %s26, 0
      %p158 = por %p156, %p157
      %s160 = sadd.s32 %s159, 1
      %p163 = scmp.eq.s32.totalorder %s20, 1
      %p164 = scmp.ne.s32.totalorder %s159, %s161
      %p165 = scmp.eq.s32.totalorder %s20, 0
      %p166 = por %p164, %p165
      %p167 = scmp.ne.s32.totalorder %s159, %s161
      %p168 = scmp.eq.s32.totalorder %s25, 1
      %p169 = por %p167, %p168
      %p170 = scmp.ne.s32.totalorder %s161, %s162
      %p171 = scmp.eq.s32.totalorder %s25, 0
      %p172 = por %p170, %p171
      %p173 = scmp.ne.s32.totalorder %s161, %s162
      %p174 = scmp.eq.s32.totalorder %s26, 1
      %p175 = por %p173, %p174
      %p177 = scmp.ne.s32.totalorder %s162, %s176
      %p178 = scmp.eq.s32.totalorder %s26, 0
      %p179 = por %p177, %p178
      %s180 = ssub.s32 %s20, %s27
      %p181 = scmp.eq.s32.totalorder %s180, 0
      %s183 = sadd.s32 %s182, 1
      %s184 = scalar_select %p181, %s182, %s183
      %p187 = pneg %p181
      %p188 = scmp.eq.s32.totalorder %s20, 1
      %p189 = por %p187, %p188
      %p190 = scmp.ne.s32.totalorder %s182, %s185
      %p191 = scmp.eq.s32.totalorder %s20, 0
      %p192 = por %p190, %p191
      %p193 = scmp.ne.s32.totalorder %s182, %s185
      %p194 = scmp.eq.s32.totalorder %s25, 1
      %p195 = por %p193, %p194
      %p196 = scmp.ne.s32.totalorder %s185, %s186
      %p197 = scmp.eq.s32.totalorder %s25, 0
      %p198 = por %p196, %p197
      %p199 = scmp.ne.s32.totalorder %s185, %s186
      %p200 = scmp.eq.s32.totalorder %s26, 1
      %p201 = por %p199, %p200
      %p203 = scmp.ne.s32.totalorder %s186, %s202
      %p204 = scmp.eq.s32.totalorder %s26, 0
      %p205 = por %p203, %p204
      %p206 = scmp.le.s32.totalorder 1, %s20
      %p207 = scmp.lt.s32.totalorder %s20, 3
      %p208 = pnand %p206, %p207
      %p209 = pneg %p208
      // Predicated region
      $region9: #{tpu_custom_call.1} parent=5 // pred_check
        _
      $region10: #{tpu_custom_call.1} parent=5 // pred_check_branch
        %211 = sbr.rel (%p208) target = $region12
      $region11: #{tpu_custom_call.1} parent=5 // pred_region
        %s212 = ssub.s32 %s20, 1
        // Predicated region
        $region13: #{tpu_custom_call.1} parent=11 // pred_check
          %p213 = pneg %p67
        $region14: #{tpu_custom_call.1} parent=11 // pred_check_branch
          %215 = sbr.rel (%p213) target = $region16
        $region15: #{tpu_custom_call.1} parent=11 // pred_region
          _
        $region16: #{tpu_custom_call.1} parent=11 // pred_fallthru
          _
        // Predicated region
        $region17: #{tpu_custom_call.1} parent=11 // pred_check
          %p216 = pneg %p88
        $region18: #{tpu_custom_call.1} parent=11 // pred_check_branch
          %218 = sbr.rel (%p216) target = $region20
        $region19: #{tpu_custom_call.1} parent=11 // pred_region
          _
        $region20: #{tpu_custom_call.1} parent=11 // pred_fallthru
          _
        // Predicated region
        $region21: #{tpu_custom_call.1} parent=11 // pred_check
          %p219 = pneg %p109
        $region22: #{tpu_custom_call.1} parent=11 // pred_check_branch
          %221 = sbr.rel (%p219) target = $region24
        $region23: #{tpu_custom_call.1} parent=11 // pred_region
          %s223 = ssub.s32 3072, 3072
          %224 = vsyncadd [#allocation6], %s223
          %s225 = sshll.u32 [#allocation5], 4
          %s226 = int_to_ptr.vmem [resolvable:$true] %s225
          %231 = dma.hbm_to_vmem [thread:$0]  %s3, 3072, %s226, [#allocation6], 192, 192, 12
        $region24: #{tpu_custom_call.1} parent=11 // pred_fallthru
          _
        // Predicated region
        $region25: #{tpu_custom_call.1} parent=11 // pred_check
          %p232 = pneg %p130
        $region26: #{tpu_custom_call.1} parent=11 // pred_check_branch
          %234 = sbr.rel (%p232) target = $region28
        $region27: #{tpu_custom_call.1} parent=11 // pred_region
          _
        $region28: #{tpu_custom_call.1} parent=11 // pred_fallthru
          _
        // Predicated region
        $region29: #{tpu_custom_call.1} parent=11 // pred_check
          %p235 = pneg %p151
        $region30: #{tpu_custom_call.1} parent=11 // pred_check_branch
          %237 = sbr.rel (%p235) target = $region32
        $region31: #{tpu_custom_call.1} parent=11 // pred_region
          _
        $region32: #{tpu_custom_call.1} parent=11 // pred_fallthru
          _
        // Predicated region
        $region33: #{tpu_custom_call.1} parent=11 // pred_check
          %p238 = pneg %p172
        $region34: #{tpu_custom_call.1} parent=11 // pred_check_branch
          %240 = sbr.rel (%p238) target = $region36
        $region35: #{tpu_custom_call.1} parent=11 // pred_region
          _
        $region36: #{tpu_custom_call.1} parent=11 // pred_fallthru
          _
      $region12: #{tpu_custom_call.1} parent=5 // pred_fallthru
        _
      %p241 = scmp.lt.s32.totalorder %s20, 2
      // Predicated region
      $region37: #{tpu_custom_call.1} parent=5 // pred_check
        %p242 = pneg %p241
      $region38: #{tpu_custom_call.1} parent=5 // pred_check_branch
        %244 = sbr.rel (%p242) target = $region40
      $region39: #{tpu_custom_call.1} parent=5 // pred_region
        // Predicated region
        $region41: #{tpu_custom_call.1} parent=39 // pred_check
          %p245 = pneg %p40
        $region42: #{tpu_custom_call.1} parent=39 // pred_check_branch
          %247 = sbr.rel (%p245) target = $region44
        $region43: #{tpu_custom_call.1} parent=39 // pred_region
          %s248 = sand.u32 %s30, 1
          %s249 = scalar_lea.sflag [#allocation3], %s248
          %s250 = sand.u32 %s30, 1
          %s251 = smul.addr %s250, 64
          %s252 = scalar_lea.vmem [#allocation2], %s251
          %s254 = ssub.s32 1024, 1024
          %255 = vsyncadd %s249, %s254
          %s256 = smul.addr %s20, 8
          %s257 = smul.addr %s256, 128
          %s258 = scalar_lea.hbm %s0, %s257
          %s259 = sshll.u32 %s252, 4
          %s260 = int_to_ptr.vmem [resolvable:$true] %s259
          %265 = dma.hbm_to_vmem [thread:$0]  %s258, 1024, %s260, %s249, 128, 128, 8
        $region44: #{tpu_custom_call.1} parent=39 // pred_fallthru
          _
      $region40: #{tpu_custom_call.1} parent=5 // pred_fallthru
        _
      %p266 = scmp.le.s32.totalorder 1, %s20
      %p267 = scmp.lt.s32.totalorder %s20, 3
      %p268 = pnand %p266, %p267
      %p269 = pneg %p268
      // Predicated region
      $region45: #{tpu_custom_call.1} parent=5 // pred_check
        _
      $region46: #{tpu_custom_call.1} parent=5 // pred_check_branch
        %271 = sbr.rel (%p268) target = $region48
      $region47: #{tpu_custom_call.1} parent=5 // pred_region
        %s272 = ssub.s32 %s20, 1
        %s273 = sand.u32 %s33, 1
        %s274 = scalar_lea.sflag [#allocation3], %s273
        %s275 = sand.u32 %s33, 1
        %s276 = smul.addr %s275, 64
        %s277 = scalar_lea.vmem [#allocation2], %s276
        // Predicated region
        $region49: #{tpu_custom_call.1} parent=47 // pred_check
          %p278 = pneg %p46
        $region50: #{tpu_custom_call.1} parent=47 // pred_check_branch
          %280 = sbr.rel (%p278) target = $region52
        $region51: #{tpu_custom_call.1} parent=47 // pred_region
          %281 = dma.done %s274, 1024
        $region52: #{tpu_custom_call.1} parent=47 // pred_fallthru
          _
        // Predicated region
        $region53: #{tpu_custom_call.1} parent=47 // pred_check
          %p282 = pneg %p109
        $region54: #{tpu_custom_call.1} parent=47 // pred_check_branch
          %284 = sbr.rel (%p282) target = $region56
        $region55: #{tpu_custom_call.1} parent=47 // pred_region
          %285 = dma.done [#allocation6], 3072
        $region56: #{tpu_custom_call.1} parent=47 // pred_fallthru
          _
        %s286 = sand.u32 %s33, 1
        %s287 = scalar_lea.sflag [#allocation3], %s286
        %s288 = sand.u32 %s33, 1
        %s289 = smul.addr %s288, 64
        %s290 = scalar_lea.vmem [#allocation2], %s289
        %p291 = pneg %p46
        %p292 = pneg %p43
        %p293 = pneg %p67
        %p294 = pneg %p64
        %p295 = pneg %p88
        %p296 = pneg %p85
        %p297 = pneg %p109
        %p298 = pneg %p106
        %p299 = pneg %p130
        %p300 = pneg %p127
        %p301 = pneg %p151
        %p302 = pneg %p148
        %p303 = pneg %p172
        %p304 = pneg %p169
        %p305 = pneg %p198
        %p306 = pneg %p195
        %s307 = sand.u32 %s185, 1
        %s308 = scalar_lea.sflag [#allocation4], %s307
        %s309 = sand.u32 %s185, 1
        %s310 = smul.addr %s309, 512
        %s311 = scalar_lea.vmem [#allocation7], %s310
        %v313 = vld [vmem:[%s277] sm:$0xff]
        %v314 = vld [vmem:[%s277 + $0x8] sm:$0xff]
        %v315 = vld [vmem:[%s277 + $0x10] sm:$0xff]
        %v316 = vld [vmem:[%s277 + $0x18] sm:$0xff]
        %v317 = vld [vmem:[%s277 + $0x20] sm:$0xff]
        %v318 = vld [vmem:[%s277 + $0x28] sm:$0xff]
        %v319 = vld [vmem:[%s277 + $0x30] sm:$0xff]
        %v320 = vld [vmem:[%s277 + $0x38] sm:$0xff]
        %v321 = vpack.c.bf16 %v314, %v313
        %v322 = vpack.c.bf16 %v316, %v315
        %v323 = vpack.c.bf16 %v318, %v317
        %v324 = vpack.c.bf16 %v320, %v319
        %v325 = vld [vmem:[%s1] sm:$0xf]
        %v326 = vld [vmem:[%s1 + $0x4] sm:$0xf]
        %v327 = vld [vmem:[%s1 + $0x8] sm:$0xf]
        %v328 = vld [vmem:[%s1 + $0xc] sm:$0xf]
        %v329 = vld [vmem:[%s1 + $0x10] sm:$0xf]
        %v330 = vld [vmem:[%s1 + $0x14] sm:$0xf]
        %v331 = vld [vmem:[%s1 + $0x18] sm:$0xf]
        %v332 = vld [vmem:[%s1 + $0x1c] sm:$0xf]
        %v333 = vld [vmem:[%s1 + $0x20] sm:$0xf]
        %v334 = vld [vmem:[%s1 + $0x24] sm:$0xf]
        %v335 = vld [vmem:[%s1 + $0x28] sm:$0xf]
        %v336 = vld [vmem:[%s1 + $0x2c] sm:$0xf]
        %v337 = vld [vmem:[%s1 + $0x30] sm:$0xf]
        %v338 = vld [vmem:[%s1 + $0x34] sm:$0xf]
        %v339 = vld [vmem:[%s1 + $0x38] sm:$0xf]
        %v340 = vld [vmem:[%s1 + $0x3c] sm:$0xf]
        %v341 = vld [vmem:[%s2] sm:$0xf]
        %v342 = vld [vmem:[%s2 + $0x4] sm:$0xf]
        %v359 = vunpack.c.l.b16 %v325
        %v360 = vunpack.c.l.b16 %v326
        %v361 = vunpack.c.l.b16 %v327
        %v362 = vunpack.c.l.b16 %v328
        %v363 = vunpack.c.l.b16 %v329
        %v364 = vunpack.c.l.b16 %v330
        %v365 = vunpack.c.l.b16 %v331
        %v366 = vunpack.c.l.b16 %v332
        %v367 = vunpack.c.l.b16 %v333
        %v368 = vunpack.c.l.b16 %v334
        %v369 = vunpack.c.l.b16 %v335
        %v370 = vunpack.c.l.b16 %v336
        %v371 = vunpack.c.l.b16 %v337
        %v372 = vunpack.c.l.b16 %v338
        %v373 = vunpack.c.l.b16 %v339
        %v374 = vunpack.c.l.b16 %v340
        %v375 = vpack.c.b16 %v360, %v359
        %v376 = vpack.c.b16 %v362, %v361
        %v377 = vpack.c.b16 %v364, %v363
        %v378 = vpack.c.b16 %v366, %v365
        %v379 = vpack.c.b16 %v368, %v367
        %v380 = vpack.c.b16 %v370, %v369
        %v381 = vpack.c.b16 %v372, %v371
        %v382 = vpack.c.b16 %v374, %v373
        %vm383 = vcmask 130048
        %v385 = vsel %vm383, %v375, 0
        %v388 = vsel %vm383, %v376, 0
        %v391 = vsel %vm383, %v377, 0
        %v394 = vsel %vm383, %v378, 0
        %v397 = vsel %vm383, %v379, 0
        %v400 = vsel %vm383, %v380, 0
        %v403 = vsel %vm383, %v381, 0
        %v406 = vsel %vm383, %v382, 0
        %408 = vmatprep.subr.bf16.mxu0 0
        %409 = vmatpush1.bf16.msra.mxu0 %v321
        %410 = vmatprep.subr.bf16.mxu0 0
        %411 = vmatpush1.bf16.msra.mxu0 0
        %412 = vmatprep.subr.bf16.mxu0 0
        %413 = vmatpush1.bf16.msra.mxu0 0
        %414 = vmatprep.subr.bf16.mxu0 0
        %415 = vmatpush1.bf16.msra.mxu0 0
        %416 = vmatprep.subr.bf16.mxu0 0
        %417 = vmatpush1.bf16.msra.mxu0 0
        %418 = vmatprep.subr.bf16.mxu0 0
        %419 = vmatpush1.bf16.msra.mxu0 0
        %420 = vmatprep.subr.bf16.mxu0 0
        %421 = vmatpush1.bf16.msra.mxu0 0
        %422 = vmatprep.subr.bf16.mxu0 0
        %423 = vmatpush1.bf16.msra.mxu0 0
        %424 = vmatprep.subr.bf16.mxu0 0
        %425 = vmatpush1.bf16.msra.mxu0 0
        %426 = vmatprep.subr.bf16.mxu0 0
        %427 = vmatpush1.bf16.msra.mxu0 0
        %428 = vmatprep.subr.bf16.mxu0 0
        %429 = vmatpush1.bf16.msra.mxu0 0
        %430 = vmatprep.subr.bf16.mxu0 0
        %431 = vmatpush1.bf16.msra.mxu0 0
        %432 = vmatprep.subr.bf16.mxu0 0
        %433 = vmatpush1.bf16.msra.mxu0 0
        %434 = vmatprep.subr.bf16.mxu0 0
        %435 = vmatpush1.bf16.msra.mxu0 0
        %436 = vmatprep.subr.bf16.mxu0 0
        %437 = vmatpush1.bf16.msra.mxu0 0
        %438 = vmatprep.subr.bf16.mxu0 0
        %439 = vmatpush1.bf16.msra.mxu0 0
        %440 = vmatprep.mubr.bf16.mxu0 0
        %441 = vmatmul.mubr.bf16.gmra.mrb[0].mxu0 %v385
        %v442 = vpop.f32.mrb[0].mxu0
        %v443 = vadd.f32 0.0, %v442
        %v444 = vpop.f32.mrb[0].mxu0
        %v445 = vpop.f32.mrb[0].mxu0
        %v446 = vadd.f32 0.0, %v445
        %v447 = vpop.f32.mrb[0].mxu0
        %448 = vmatprep.mubr.bf16.mxu0 0
        %449 = vmatmul.mubr.bf16.gmra.mrb[0].mxu0 %v388
        %v450 = vpop.f32.mrb[0].mxu0
        %v451 = vadd.f32 0.0, %v450
        %v452 = vpop.f32.mrb[0].mxu0
        %v453 = vpop.f32.mrb[0].mxu0
        %v454 = vadd.f32 0.0, %v453
        %v455 = vpop.f32.mrb[0].mxu0
        %456 = vmatprep.mubr.bf16.mxu0 0
        %457 = vmatmul.mubr.bf16.gmra.mrb[0].mxu0 %v391
        %v458 = vpop.f32.mrb[0].mxu0
        %v459 = vadd.f32 0.0, %v458
        %v460 = vpop.f32.mrb[0].mxu0
        %v461 = vpop.f32.mrb[0].mxu0
        %v462 = vadd.f32 0.0, %v461
        %v463 = vpop.f32.mrb[0].mxu0
        %464 = vmatprep.mubr.bf16.mxu0 0
        %465 = vmatmul.mubr.bf16.gmra.mrb[0].mxu0 %v394
        %v466 = vpop.f32.mrb[0].mxu0
        %v467 = vadd.f32 0.0, %v466
        %v468 = vpop.f32.mrb[0].mxu0
        %v469 = vpop.f32.mrb[0].mxu0
        %v470 = vadd.f32 0.0, %v469
        %v471 = vpop.f32.mrb[0].mxu0
        %472 = vmatprep.mubr.bf16.mxu0 0
        %473 = vmatmul.mubr.bf16.gmra.mrb[0].mxu0 %v397
        %v474 = vpop.f32.mrb[0].mxu0
        %v475 = vadd.f32 0.0, %v474
        %v476 = vpop.f32.mrb[0].mxu0
        %v477 = vpop.f32.mrb[0].mxu0
        %v478 = vadd.f32 0.0, %v477
        %v479 = vpop.f32.mrb[0].mxu0
        %480 = vmatprep.mubr.bf16.mxu0 0
        %481 = vmatmul.mubr.bf16.gmra.mrb[0].mxu0 %v400
        %v482 = vpop.f32.mrb[0].mxu0
        %v483 = vadd.f32 0.0, %v482
        %v484 = vpop.f32.mrb[0].mxu0
        %v485 = vpop.f32.mrb[0].mxu0
        %v486 = vadd.f32 0.0, %v485
        %v487 = vpop.f32.mrb[0].mxu0
        %488 = vmatprep.mubr.bf16.mxu0 0
        %489 = vmatmul.mubr.bf16.gmra.mrb[0].mxu0 %v403
        %v490 = vpop.f32.mrb[0].mxu0
        %v491 = vadd.f32 0.0, %v490
        %v492 = vpop.f32.mrb[0].mxu0
        %v493 = vpop.f32.mrb[0].mxu0
        %v494 = vadd.f32 0.0, %v493
        %v495 = vpop.f32.mrb[0].mxu0
        %496 = vmatprep.mubr.bf16.mxu0 0
        %497 = vmatmul.mubr.bf16.gmra.mrb[0].mxu0 %v406
        %v498 = vpop.f32.mrb[0].mxu0
        %v499 = vadd.f32 0.0, %v498
        %v500 = vpop.f32.mrb[0].mxu0
        %v501 = vpop.f32.mrb[0].mxu0
        %v502 = vadd.f32 0.0, %v501
        %v503 = vpop.f32.mrb[0].mxu0
        %504 = vdwg.mxu0
        %505 = vmatprep.subr.bf16.mxu0 0
        %506 = vmatpush1.bf16.msra.mxu0 %v322
        %507 = vmatprep.subr.bf16.mxu0 0
        %508 = vmatpush1.bf16.msra.mxu0 0
        %509 = vmatprep.subr.bf16.mxu0 0
        %510 = vmatpush1.bf16.msra.mxu0 0
        %511 = vmatprep.subr.bf16.mxu0 0
        %512 = vmatpush1.bf16.msra.mxu0 0
        %513 = vmatprep.subr.bf16.mxu0 0
        %514 = vmatpush1.bf16.msra.mxu0 0
        %515 = vmatprep.subr.bf16.mxu0 0
        %516 = vmatpush1.bf16.msra.mxu0 0
        %517 = vmatprep.subr.bf16.mxu0 0
        %518 = vmatpush1.bf16.msra.mxu0 0
        %519 = vmatprep.subr.bf16.mxu0 0
        %520 = vmatpush1.bf16.msra.mxu0 0
        %521 = vmatprep.subr.bf16.mxu0 0
        %522 = vmatpush1.bf16.msra.mxu0 0
        %523 = vmatprep.subr.bf16.mxu0 0
        %524 = vmatpush1.bf16.msra.mxu0 0
        %525 = vmatprep.subr.bf16.mxu0 0
        %526 = vmatpush1.bf16.msra.mxu0 0
        %527 = vmatprep.subr.bf16.mxu0 0
        %528 = vmatpush1.bf16.msra.mxu0 0
        %529 = vmatprep.subr.bf16.mxu0 0
        %530 = vmatpush1.bf16.msra.mxu0 0
        %531 = vmatprep.subr.bf16.mxu0 0
        %532 = vmatpush1.bf16.msra.mxu0 0
        %533 = vmatprep.subr.bf16.mxu0 0
        %534 = vmatpush1.bf16.msra.mxu0 0
        %535 = vmatprep.subr.bf16.mxu0 0
        %536 = vmatpush1.bf16.msra.mxu0 0
        %537 = vmatprep.mubr.bf16.mxu0 0
        %538 = vmatmul.mubr.bf16.gmra.mrb[0].mxu0 %v385
        %v539 = vpop.f32.mrb[0].mxu0
        %v540 = vadd.f32 0.0, %v539
        %v541 = vpop.f32.mrb[0].mxu0
        %v542 = vpop.f32.mrb[0].mxu0
        %v543 = vadd.f32 0.0, %v542
        %v544 = vpop.f32.mrb[0].mxu0
        %545 = vmatprep.mubr.bf16.mxu0 0
        %546 = vmatmul.mubr.bf16.gmra.mrb[0].mxu0 %v388
        %v547 = vpop.f32.mrb[0].mxu0
        %v548 = vadd.f32 0.0, %v547
        %v549 = vpop.f32.mrb[0].mxu0
        %v550 = vpop.f32.mrb[0].mxu0
        %v551 = vadd.f32 0.0, %v550
        %v552 = vpop.f32.mrb[0].mxu0
        %553 = vmatprep.mubr.bf16.mxu0 0
        %554 = vmatmul.mubr.bf16.gmra.mrb[0].mxu0 %v391
        %v555 = vpop.f32.mrb[0].mxu0
        %v556 = vadd.f32 0.0, %v555
        %v557 = vpop.f32.mrb[0].mxu0
        %v558 = vpop.f32.mrb[0].mxu0
        %v559 = vadd.f32 0.0, %v558
        %v560 = vpop.f32.mrb[0].mxu0
        %561 = vmatprep.mubr.bf16.mxu0 0
        %562 = vmatmul.mubr.bf16.gmra.mrb[0].mxu0 %v394
        %v563 = vpop.f32.mrb[0].mxu0
        %v564 = vadd.f32 0.0, %v563
        %v565 = vpop.f32.mrb[0].mxu0
        %v566 = vpop.f32.mrb[0].mxu0
        %v567 = vadd.f32 0.0, %v566
        %v568 = vpop.f32.mrb[0].mxu0
        %569 = vmatprep.mubr.bf16.mxu0 0
        %570 = vmatmul.mubr.bf16.gmra.mrb[0].mxu0 %v397
        %v571 = vpop.f32.mrb[0].mxu0
        %v572 = vadd.f32 0.0, %v571
        %v573 = vpop.f32.mrb[0].mxu0
        %v574 = vpop.f32.mrb[0].mxu0
        %v575 = vadd.f32 0.0, %v574
        %v576 = vpop.f32.mrb[0].mxu0
        %577 = vmatprep.mubr.bf16.mxu0 0
        %578 = vmatmul.mubr.bf16.gmra.mrb[0].mxu0 %v400
        %v579 = vpop.f32.mrb[0].mxu0
        %v580 = vadd.f32 0.0, %v579
        %v581 = vpop.f32.mrb[0].mxu0
        %v582 = vpop.f32.mrb[0].mxu0
        %v583 = vadd.f32 0.0, %v582
        %v584 = vpop.f32.mrb[0].mxu0
        %585 = vmatprep.mubr.bf16.mxu0 0
        %586 = vmatmul.mubr.bf16.gmra.mrb[0].mxu0 %v403
        %v587 = vpop.f32.mrb[0].mxu0
        %v588 = vadd.f32 0.0, %v587
        %v589 = vpop.f32.mrb[0].mxu0
        %v590 = vpop.f32.mrb[0].mxu0
        %v591 = vadd.f32 0.0, %v590
        %v592 = vpop.f32.mrb[0].mxu0
        %593 = vmatprep.mubr.bf16.mxu0 0
        %594 = vmatmul.mubr.bf16.gmra.mrb[0].mxu0 %v406
        %v595 = vpop.f32.mrb[0].mxu0
        %v596 = vadd.f32 0.0, %v595
        %v597 = vpop.f32.mrb[0].mxu0
        %v598 = vpop.f32.mrb[0].mxu0
        %v599 = vadd.f32 0.0, %v598
        %v600 = vpop.f32.mrb[0].mxu0
        %601 = vdwg.mxu0
        %602 = vmatprep.subr.bf16.mxu0 0
        %603 = vmatpush1.bf16.msra.mxu0 %v323
        %604 = vmatprep.subr.bf16.mxu0 0
        %605 = vmatpush1.bf16.msra.mxu0 0
        %606 = vmatprep.subr.bf16.mxu0 0
        %607 = vmatpush1.bf16.msra.mxu0 0
        %608 = vmatprep.subr.bf16.mxu0 0
        %609 = vmatpush1.bf16.msra.mxu0 0
        %610 = vmatprep.subr.bf16.mxu0 0
        %611 = vmatpush1.bf16.msra.mxu0 0
        %612 = vmatprep.subr.bf16.mxu0 0
        %613 = vmatpush1.bf16.msra.mxu0 0
        %614 = vmatprep.subr.bf16.mxu0 0
        %615 = vmatpush1.bf16.msra.mxu0 0
        %616 = vmatprep.subr.bf16.mxu0 0
        %617 = vmatpush1.bf16.msra.mxu0 0
        %618 = vmatprep.subr.bf16.mxu0 0
        %619 = vmatpush1.bf16.msra.mxu0 0
        %620 = vmatprep.subr.bf16.mxu0 0
        %621 = vmatpush1.bf16.msra.mxu0 0
        %622 = vmatprep.subr.bf16.mxu0 0
        %623 = vmatpush1.bf16.msra.mxu0 0
        %624 = vmatprep.subr.bf16.mxu0 0
        %625 = vmatpush1.bf16.msra.mxu0 0
        %626 = vmatprep.subr.bf16.mxu0 0
        %627 = vmatpush1.bf16.msra.mxu0 0
        %628 = vmatprep.subr.bf16.mxu0 0
        %629 = vmatpush1.bf16.msra.mxu0 0
        %630 = vmatprep.subr.bf16.mxu0 0
        %631 = vmatpush1.bf16.msra.mxu0 0
        %632 = vmatprep.subr.bf16.mxu0 0
        %633 = vmatpush1.bf16.msra.mxu0 0
        %634 = vmatprep.mubr.bf16.mxu0 0
        %635 = vmatmul.mubr.bf16.gmra.mrb[0].mxu0 %v385
        %v636 = vpop.f32.mrb[0].mxu0
        %v637 = vadd.f32 0.0, %v636
        %v638 = vpop.f32.mrb[0].mxu0
        %v639 = vpop.f32.mrb[0].mxu0
        %v640 = vadd.f32 0.0, %v639
        %v641 = vpop.f32.mrb[0].mxu0
        %642 = vmatprep.mubr.bf16.mxu0 0
        %643 = vmatmul.mubr.bf16.gmra.mrb[0].mxu0 %v388
        %v644 = vpop.f32.mrb[0].mxu0
        %v645 = vadd.f32 0.0, %v644
        %v646 = vpop.f32.mrb[0].mxu0
        %v647 = vpop.f32.mrb[0].mxu0
        %v648 = vadd.f32 0.0, %v647
        %v649 = vpop.f32.mrb[0].mxu0
        %650 = vmatprep.mubr.bf16.mxu0 0
        %651 = vmatmul.mubr.bf16.gmra.mrb[0].mxu0 %v391
        %v652 = vpop.f32.mrb[0].mxu0
        %v653 = vadd.f32 0.0, %v652
        %v654 = vpop.f32.mrb[0].mxu0
        %v655 = vpop.f32.mrb[0].mxu0
        %v656 = vadd.f32 0.0, %v655
        %v657 = vpop.f32.mrb[0].mxu0
        %658 = vmatprep.mubr.bf16.mxu0 0
        %659 = vmatmul.mubr.bf16.gmra.mrb[0].mxu0 %v394
        %v660 = vpop.f32.mrb[0].mxu0
        %v661 = vadd.f32 0.0, %v660
        %v662 = vpop.f32.mrb[0].mxu0
        %v663 = vpop.f32.mrb[0].mxu0
        %v664 = vadd.f32 0.0, %v663
        %v665 = vpop.f32.mrb[0].mxu0
        %666 = vmatprep.mubr.bf16.mxu0 0
        %667 = vmatmul.mubr.bf16.gmra.mrb[0].mxu0 %v397
        %v668 = vpop.f32.mrb[0].mxu0
        %v669 = vadd.f32 0.0, %v668
        %v670 = vpop.f32.mrb[0].mxu0
        %v671 = vpop.f32.mrb[0].mxu0
        %v672 = vadd.f32 0.0, %v671
        %v673 = vpop.f32.mrb[0].mxu0
        %674 = vmatprep.mubr.bf16.mxu0 0
        %675 = vmatmul.mubr.bf16.gmra.mrb[0].mxu0 %v400
        %v676 = vpop.f32.mrb[0].mxu0
        %v677 = vadd.f32 0.0, %v676
        %v678 = vpop.f32.mrb[0].mxu0
        %v679 = vpop.f32.mrb[0].mxu0
        %v680 = vadd.f32 0.0, %v679
        %v681 = vpop.f32.mrb[0].mxu0
        %682 = vmatprep.mubr.bf16.mxu0 0
        %683 = vmatmul.mubr.bf16.gmra.mrb[0].mxu0 %v403
        %v684 = vpop.f32.mrb[0].mxu0
        %v685 = vadd.f32 0.0, %v684
        %v686 = vpop.f32.mrb[0].mxu0
        %v687 = vpop.f32.mrb[0].mxu0
        %v688 = vadd.f32 0.0, %v687
        %v689 = vpop.f32.mrb[0].mxu0
        %690 = vmatprep.mubr.bf16.mxu0 0
        %691 = vmatmul.mubr.bf16.gmra.mrb[0].mxu0 %v406
        %v692 = vpop.f32.mrb[0].mxu0
        %v693 = vadd.f32 0.0, %v692
        %v694 = vpop.f32.mrb[0].mxu0
        %v695 = vpop.f32.mrb[0].mxu0
        %v696 = vadd.f32 0.0, %v695
        %v697 = vpop.f32.mrb[0].mxu0
        %698 = vdwg.mxu0
        %699 = vmatprep.subr.bf16.mxu0 0
        %700 = vmatpush1.bf16.msra.mxu0 %v324
        %701 = vmatprep.subr.bf16.mxu0 0
        %702 = vmatpush1.bf16.msra.mxu0 0
        %703 = vmatprep.subr.bf16.mxu0 0
        %704 = vmatpush1.bf16.msra.mxu0 0
        %705 = vmatprep.subr.bf16.mxu0 0
        %706 = vmatpush1.bf16.msra.mxu0 0
        %707 = vmatprep.subr.bf16.mxu0 0
        %708 = vmatpush1.bf16.msra.mxu0 0
        %709 = vmatprep.subr.bf16.mxu0 0
        %710 = vmatpush1.bf16.msra.mxu0 0
        %711 = vmatprep.subr.bf16.mxu0 0
        %712 = vmatpush1.bf16.msra.mxu0 0
        %713 = vmatprep.subr.bf16.mxu0 0
        %714 = vmatpush1.bf16.msra.mxu0 0
        %715 = vmatprep.subr.bf16.mxu0 0
        %716 = vmatpush1.bf16.msra.mxu0 0
        %717 = vmatprep.subr.bf16.mxu0 0
        %718 = vmatpush1.bf16.msra.mxu0 0
        %719 = vmatprep.subr.bf16.mxu0 0
        %720 = vmatpush1.bf16.msra.mxu0 0
        %721 = vmatprep.subr.bf16.mxu0 0
        %722 = vmatpush1.bf16.msra.mxu0 0
        %723 = vmatprep.subr.bf16.mxu0 0
        %724 = vmatpush1.bf16.msra.mxu0 0
        %725 = vmatprep.subr.bf16.mxu0 0
        %726 = vmatpush1.bf16.msra.mxu0 0
        %727 = vmatprep.subr.bf16.mxu0 0
        %728 = vmatpush1.bf16.msra.mxu0 0
        %729 = vmatprep.subr.bf16.mxu0 0
        %730 = vmatpush1.bf16.msra.mxu0 0
        %731 = vmatprep.mubr.bf16.mxu0 0
        %732 = vmatmul.mubr.bf16.gmra.mrb[0].mxu0 %v385
        %v733 = vpop.f32.mrb[0].mxu0
        %v734 = vadd.f32 0.0, %v733
        %v735 = vpop.f32.mrb[0].mxu0
        %v736 = vpop.f32.mrb[0].mxu0
        %v737 = vadd.f32 0.0, %v736
        %v738 = vpop.f32.mrb[0].mxu0
        %739 = vmatprep.mubr.bf16.mxu0 0
        %740 = vmatmul.mubr.bf16.gmra.mrb[0].mxu0 %v388
        %v741 = vpop.f32.mrb[0].mxu0
        %v742 = vadd.f32 0.0, %v741
        %v743 = vpop.f32.mrb[0].mxu0
        %v744 = vpop.f32.mrb[0].mxu0
        %v745 = vadd.f32 0.0, %v744
        %v746 = vpop.f32.mrb[0].mxu0
        %747 = vmatprep.mubr.bf16.mxu0 0
        %748 = vmatmul.mubr.bf16.gmra.mrb[0].mxu0 %v391
        %v749 = vpop.f32.mrb[0].mxu0
        %v750 = vadd.f32 0.0, %v749
        %v751 = vpop.f32.mrb[0].mxu0
        %v752 = vpop.f32.mrb[0].mxu0
        %v753 = vadd.f32 0.0, %v752
        %v754 = vpop.f32.mrb[0].mxu0
        %755 = vmatprep.mubr.bf16.mxu0 0
        %756 = vmatmul.mubr.bf16.gmra.mrb[0].mxu0 %v394
        %v757 = vpop.f32.mrb[0].mxu0
        %v758 = vadd.f32 0.0, %v757
        %v759 = vpop.f32.mrb[0].mxu0
        %v760 = vpop.f32.mrb[0].mxu0
        %v761 = vadd.f32 0.0, %v760
        %v762 = vpop.f32.mrb[0].mxu0
        %763 = vmatprep.mubr.bf16.mxu0 0
        %764 = vmatmul.mubr.bf16.gmra.mrb[0].mxu0 %v397
        %v765 = vpop.f32.mrb[0].mxu0
        %v766 = vadd.f32 0.0, %v765
        %v767 = vpop.f32.mrb[0].mxu0
        %v768 = vpop.f32.mrb[0].mxu0
        %v769 = vadd.f32 0.0, %v768
        %v770 = vpop.f32.mrb[0].mxu0
        %771 = vmatprep.mubr.bf16.mxu0 0
        %772 = vmatmul.mubr.bf16.gmra.mrb[0].mxu0 %v400
        %v773 = vpop.f32.mrb[0].mxu0
        %v774 = vadd.f32 0.0, %v773
        %v775 = vpop.f32.mrb[0].mxu0
        %v776 = vpop.f32.mrb[0].mxu0
        %v777 = vadd.f32 0.0, %v776
        %v778 = vpop.f32.mrb[0].mxu0
        %779 = vmatprep.mubr.bf16.mxu0 0
        %780 = vmatmul.mubr.bf16.gmra.mrb[0].mxu0 %v403
        %v781 = vpop.f32.mrb[0].mxu0
        %v782 = vadd.f32 0.0, %v781
        %v783 = vpop.f32.mrb[0].mxu0
        %v784 = vpop.f32.mrb[0].mxu0
        %v785 = vadd.f32 0.0, %v784
        %v786 = vpop.f32.mrb[0].mxu0
        %787 = vmatprep.mubr.bf16.mxu0 0
        %788 = vmatmul.mubr.bf16.gmra.mrb[0].mxu0 %v406
        %v789 = vpop.f32.mrb[0].mxu0
        %v790 = vadd.f32 0.0, %v789
        %v791 = vpop.f32.mrb[0].mxu0
        %v792 = vpop.f32.mrb[0].mxu0
        %v793 = vadd.f32 0.0, %v792
        %v794 = vpop.f32.mrb[0].mxu0
        %795 = vdwg.mxu0
        %v796 = vpack.c.bf16 %v446, %v443
        %v797 = vpack.c.bf16 %v454, %v451
        %v798 = vpack.c.bf16 %v462, %v459
        %v799 = vpack.c.bf16 %v470, %v467
        %v800 = vpack.c.bf16 %v478, %v475
        %v801 = vpack.c.bf16 %v486, %v483
        %v802 = vpack.c.bf16 %v494, %v491
        %v803 = vpack.c.bf16 %v502, %v499
        %v804 = vpack.c.bf16 %v543, %v540
        %v805 = vpack.c.bf16 %v551, %v548
        %v806 = vpack.c.bf16 %v559, %v556
        %v807 = vpack.c.bf16 %v567, %v564
        %v808 = vpack.c.bf16 %v575, %v572
        %v809 = vpack.c.bf16 %v583, %v580
        %v810 = vpack.c.bf16 %v591, %v588
        %v811 = vpack.c.bf16 %v599, %v596
        %v812 = vpack.c.bf16 %v640, %v637
        %v813 = vpack.c.bf16 %v648, %v645
        %v814 = vpack.c.bf16 %v656, %v653
        %v815 = vpack.c.bf16 %v664, %v661
        %v816 = vpack.c.bf16 %v672, %v669
        %v817 = vpack.c.bf16 %v680, %v677
        %v818 = vpack.c.bf16 %v688, %v685
        %v819 = vpack.c.bf16 %v696, %v693
        %v820 = vpack.c.bf16 %v737, %v734
        %v821 = vpack.c.bf16 %v745, %v742
        %v822 = vpack.c.bf16 %v753, %v750
        %v823 = vpack.c.bf16 %v761, %v758
        %v824 = vpack.c.bf16 %v769, %v766
        %v825 = vpack.c.bf16 %v777, %v774
        %v826 = vpack.c.bf16 %v785, %v782
        %v827 = vpack.c.bf16 %v793, %v790
        %v830 = vunpack.c.l.b16 %v341
        %v831 = vunpack.c.l.b16 %v342
        %v832 = vpack.c.b16 %v831, %v830
        %v835 = vsel %vm383, %v796, 0
        %v838 = vsel %vm383, %v797, 0
        %v841 = vsel %vm383, %v798, 0
        %v844 = vsel %vm383, %v799, 0
        %v847 = vsel %vm383, %v800, 0
        %v850 = vsel %vm383, %v801, 0
        %v853 = vsel %vm383, %v802, 0
        %v856 = vsel %vm383, %v803, 0
        %858 = vmatprep.subr.bf16.mxu0 0
        %859 = vmatpush1.bf16.msra.mxu0 %v832
        %860 = vmatprep.subr.bf16.mxu0 0
        %861 = vmatpush1.bf16.msra.mxu0 0
        %862 = vmatprep.subr.bf16.mxu0 0
        %863 = vmatpush1.bf16.msra.mxu0 0
        %864 = vmatprep.subr.bf16.mxu0 0
        %865 = vmatpush1.bf16.msra.mxu0 0
        %866 = vmatprep.subr.bf16.mxu0 0
        %867 = vmatpush1.bf16.msra.mxu0 0
        %868 = vmatprep.subr.bf16.mxu0 0
        %869 = vmatpush1.bf16.msra.mxu0 0
        %870 = vmatprep.subr.bf16.mxu0 0
        %871 = vmatpush1.bf16.msra.mxu0 0
        %872 = vmatprep.subr.bf16.mxu0 0
        %873 = vmatpush1.bf16.msra.mxu0 0
        %874 = vmatprep.subr.bf16.mxu0 0
        %875 = vmatpush1.bf16.msra.mxu0 0
        %876 = vmatprep.subr.bf16.mxu0 0
        %877 = vmatpush1.bf16.msra.mxu0 0
        %878 = vmatprep.subr.bf16.mxu0 0
        %879 = vmatpush1.bf16.msra.mxu0 0
        %880 = vmatprep.subr.bf16.mxu0 0
        %881 = vmatpush1.bf16.msra.mxu0 0
        %882 = vmatprep.subr.bf16.mxu0 0
        %883 = vmatpush1.bf16.msra.mxu0 0
        %884 = vmatprep.subr.bf16.mxu0 0
        %885 = vmatpush1.bf16.msra.mxu0 0
        %886 = vmatprep.subr.bf16.mxu0 0
        %887 = vmatpush1.bf16.msra.mxu0 0
        %888 = vmatprep.subr.bf16.mxu0 0
        %889 = vmatpush1.bf16.msra.mxu0 0
        %890 = vmatprep.mubr.bf16.mxu0 0
        %891 = vmatmul.mubr.bf16.gmra.mrb[0].mxu0 %v835
        %v892 = vpop.f32.mrb[0].mxu0
        %v893 = vadd.f32 0.0, %v892
        %v894 = vpop.f32.mrb[0].mxu0
        %v895 = vpop.f32.mrb[0].mxu0
        %v896 = vadd.f32 0.0, %v895
        %v897 = vpop.f32.mrb[0].mxu0
        %898 = vmatprep.mubr.bf16.mxu0 0
        %899 = vmatmul.mubr.bf16.gmra.mrb[0].mxu0 %v838
        %v900 = vpop.f32.mrb[0].mxu0
        %v901 = vadd.f32 0.0, %v900
        %v902 = vpop.f32.mrb[0].mxu0
        %v903 = vpop.f32.mrb[0].mxu0
        %v904 = vadd.f32 0.0, %v903
        %v905 = vpop.f32.mrb[0].mxu0
        %906 = vmatprep.mubr.bf16.mxu0 0
        %907 = vmatmul.mubr.bf16.gmra.mrb[0].mxu0 %v841
        %v908 = vpop.f32.mrb[0].mxu0
        %v909 = vadd.f32 0.0, %v908
        %v910 = vpop.f32.mrb[0].mxu0
        %v911 = vpop.f32.mrb[0].mxu0
        %v912 = vadd.f32 0.0, %v911
        %v913 = vpop.f32.mrb[0].mxu0
        %914 = vmatprep.mubr.bf16.mxu0 0
        %915 = vmatmul.mubr.bf16.gmra.mrb[0].mxu0 %v844
        %v916 = vpop.f32.mrb[0].mxu0
        %v917 = vadd.f32 0.0, %v916
        %v918 = vpop.f32.mrb[0].mxu0
        %v919 = vpop.f32.mrb[0].mxu0
        %v920 = vadd.f32 0.0, %v919
        %v921 = vpop.f32.mrb[0].mxu0
        %922 = vmatprep.mubr.bf16.mxu0 0
        %923 = vmatmul.mubr.bf16.gmra.mrb[0].mxu0 %v847
        %v924 = vpop.f32.mrb[0].mxu0
        %v925 = vadd.f32 0.0, %v924
        %v926 = vpop.f32.mrb[0].mxu0
        %v927 = vpop.f32.mrb[0].mxu0
        %v928 = vadd.f32 0.0, %v927
        %v929 = vpop.f32.mrb[0].mxu0
        %930 = vmatprep.mubr.bf16.mxu0 0
        %931 = vmatmul.mubr.bf16.gmra.mrb[0].mxu0 %v850
        %v932 = vpop.f32.mrb[0].mxu0
        %v933 = vadd.f32 0.0, %v932
        %v934 = vpop.f32.mrb[0].mxu0
        %v935 = vpop.f32.mrb[0].mxu0
        %v936 = vadd.f32 0.0, %v935
        %v937 = vpop.f32.mrb[0].mxu0
        %938 = vmatprep.mubr.bf16.mxu0 0
        %939 = vmatmul.mubr.bf16.gmra.mrb[0].mxu0 %v853
        %v940 = vpop.f32.mrb[0].mxu0
        %v941 = vadd.f32 0.0, %v940
        %v942 = vpop.f32.mrb[0].mxu0
        %v943 = vpop.f32.mrb[0].mxu0
        %v944 = vadd.f32 0.0, %v943
        %v945 = vpop.f32.mrb[0].mxu0
        %946 = vmatprep.mubr.bf16.mxu0 0
        %947 = vmatmul.mubr.bf16.gmra.mrb[0].mxu0 %v856
        %v948 = vpop.f32.mrb[0].mxu0
        %v949 = vadd.f32 0.0, %v948
        %v950 = vpop.f32.mrb[0].mxu0
        %v951 = vpop.f32.mrb[0].mxu0
        %v952 = vadd.f32 0.0, %v951
        %v953 = vpop.f32.mrb[0].mxu0
        %954 = vdwg.mxu0
        %v956 = vsel %vm383, %v804, 0
        %v959 = vsel %vm383, %v805, 0
        %v962 = vsel %vm383, %v806, 0
        %v965 = vsel %vm383, %v807, 0
        %v968 = vsel %vm383, %v808, 0
        %v971 = vsel %vm383, %v809, 0
        %v974 = vsel %vm383, %v810, 0
        %v977 = vsel %vm383, %v811, 0
        %979 = vmatprep.subr.bf16.mxu0 0
        %980 = vmatpush1.bf16.msra.mxu0 %v832
        %981 = vmatprep.subr.bf16.mxu0 0
        %982 = vmatpush1.bf16.msra.mxu0 0
        %983 = vmatprep.subr.bf16.mxu0 0
        %984 = vmatpush1.bf16.msra.mxu0 0
        %985 = vmatprep.subr.bf16.mxu0 0
        %986 = vmatpush1.bf16.msra.mxu0 0
        %987 = vmatprep.subr.bf16.mxu0 0
        %988 = vmatpush1.bf16.msra.mxu0 0
        %989 = vmatprep.subr.bf16.mxu0 0
        %990 = vmatpush1.bf16.msra.mxu0 0
        %991 = vmatprep.subr.bf16.mxu0 0
        %992 = vmatpush1.bf16.msra.mxu0 0
        %993 = vmatprep.subr.bf16.mxu0 0
        %994 = vmatpush1.bf16.msra.mxu0 0
        %995 = vmatprep.subr.bf16.mxu0 0
        %996 = vmatpush1.bf16.msra.mxu0 0
        %997 = vmatprep.subr.bf16.mxu0 0
        %998 = vmatpush1.bf16.msra.mxu0 0
        %999 = vmatprep.subr.bf16.mxu0 0
        %1000 = vmatpush1.bf16.msra.mxu0 0
        %1001 = vmatprep.subr.bf16.mxu0 0
        %1002 = vmatpush1.bf16.msra.mxu0 0
        %1003 = vmatprep.subr.bf16.mxu0 0
        %1004 = vmatpush1.bf16.msra.mxu0 0
        %1005 = vmatprep.subr.bf16.mxu0 0
        %1006 = vmatpush1.bf16.msra.mxu0 0
        %1007 = vmatprep.subr.bf16.mxu0 0
        %1008 = vmatpush1.bf16.msra.mxu0 0
        %1009 = vmatprep.subr.bf16.mxu0 0
        %1010 = vmatpush1.bf16.msra.mxu0 0
        %1011 = vmatprep.mubr.bf16.mxu0 0
        %1012 = vmatmul.mubr.bf16.gmra.mrb[0].mxu0 %v956
        %v1013 = vpop.f32.mrb[0].mxu0
        %v1014 = vadd.f32 0.0, %v1013
        %v1015 = vpop.f32.mrb[0].mxu0
        %v1016 = vpop.f32.mrb[0].mxu0
        %v1017 = vadd.f32 0.0, %v1016
        %v1018 = vpop.f32.mrb[0].mxu0
        %1019 = vmatprep.mubr.bf16.mxu0 0
        %1020 = vmatmul.mubr.bf16.gmra.mrb[0].mxu0 %v959
        %v1021 = vpop.f32.mrb[0].mxu0
        %v1022 = vadd.f32 0.0, %v1021
        %v1023 = vpop.f32.mrb[0].mxu0
        %v1024 = vpop.f32.mrb[0].mxu0
        %v1025 = vadd.f32 0.0, %v1024
        %v1026 = vpop.f32.mrb[0].mxu0
        %1027 = vmatprep.mubr.bf16.mxu0 0
        %1028 = vmatmul.mubr.bf16.gmra.mrb[0].mxu0 %v962
        %v1029 = vpop.f32.mrb[0].mxu0
        %v1030 = vadd.f32 0.0, %v1029
        %v1031 = vpop.f32.mrb[0].mxu0
        %v1032 = vpop.f32.mrb[0].mxu0
        %v1033 = vadd.f32 0.0, %v1032
        %v1034 = vpop.f32.mrb[0].mxu0
        %1035 = vmatprep.mubr.bf16.mxu0 0
        %1036 = vmatmul.mubr.bf16.gmra.mrb[0].mxu0 %v965
        %v1037 = vpop.f32.mrb[0].mxu0
        %v1038 = vadd.f32 0.0, %v1037
        %v1039 = vpop.f32.mrb[0].mxu0
        %v1040 = vpop.f32.mrb[0].mxu0
        %v1041 = vadd.f32 0.0, %v1040
        %v1042 = vpop.f32.mrb[0].mxu0
        %1043 = vmatprep.mubr.bf16.mxu0 0
        %1044 = vmatmul.mubr.bf16.gmra.mrb[0].mxu0 %v968
        %v1045 = vpop.f32.mrb[0].mxu0
        %v1046 = vadd.f32 0.0, %v1045
        %v1047 = vpop.f32.mrb[0].mxu0
        %v1048 = vpop.f32.mrb[0].mxu0
        %v1049 = vadd.f32 0.0, %v1048
        %v1050 = vpop.f32.mrb[0].mxu0
        %1051 = vmatprep.mubr.bf16.mxu0 0
        %1052 = vmatmul.mubr.bf16.gmra.mrb[0].mxu0 %v971
        %v1053 = vpop.f32.mrb[0].mxu0
        %v1054 = vadd.f32 0.0, %v1053
        %v1055 = vpop.f32.mrb[0].mxu0
        %v1056 = vpop.f32.mrb[0].mxu0
        %v1057 = vadd.f32 0.0, %v1056
        %v1058 = vpop.f32.mrb[0].mxu0
        %1059 = vmatprep.mubr.bf16.mxu0 0
        %1060 = vmatmul.mubr.bf16.gmra.mrb[0].mxu0 %v974
        %v1061 = vpop.f32.mrb[0].mxu0
        %v1062 = vadd.f32 0.0, %v1061
        %v1063 = vpop.f32.mrb[0].mxu0
        %v1064 = vpop.f32.mrb[0].mxu0
        %v1065 = vadd.f32 0.0, %v1064
        %v1066 = vpop.f32.mrb[0].mxu0
        %1067 = vmatprep.mubr.bf16.mxu0 0
        %1068 = vmatmul.mubr.bf16.gmra.mrb[0].mxu0 %v977
        %v1069 = vpop.f32.mrb[0].mxu0
        %v1070 = vadd.f32 0.0, %v1069
        %v1071 = vpop.f32.mrb[0].mxu0
        %v1072 = vpop.f32.mrb[0].mxu0
        %v1073 = vadd.f32 0.0, %v1072
        %v1074 = vpop.f32.mrb[0].mxu0
        %1075 = vdwg.mxu0
        %v1077 = vsel %vm383, %v812, 0
        %v1080 = vsel %vm383, %v813, 0
        %v1083 = vsel %vm383, %v814, 0
        %v1086 = vsel %vm383, %v815, 0
        %v1089 = vsel %vm383, %v816, 0
        %v1092 = vsel %vm383, %v817, 0
        %v1095 = vsel %vm383, %v818, 0
        %v1098 = vsel %vm383, %v819, 0
        %1100 = vmatprep.subr.bf16.mxu0 0
        %1101 = vmatpush1.bf16.msra.mxu0 %v832
        %1102 = vmatprep.subr.bf16.mxu0 0
        %1103 = vmatpush1.bf16.msra.mxu0 0
        %1104 = vmatprep.subr.bf16.mxu0 0
        %1105 = vmatpush1.bf16.msra.mxu0 0
        %1106 = vmatprep.subr.bf16.mxu0 0
        %1107 = vmatpush1.bf16.msra.mxu0 0
        %1108 = vmatprep.subr.bf16.mxu0 0
        %1109 = vmatpush1.bf16.msra.mxu0 0
        %1110 = vmatprep.subr.bf16.mxu0 0
        %1111 = vmatpush1.bf16.msra.mxu0 0
        %1112 = vmatprep.subr.bf16.mxu0 0
        %1113 = vmatpush1.bf16.msra.mxu0 0
        %1114 = vmatprep.subr.bf16.mxu0 0
        %1115 = vmatpush1.bf16.msra.mxu0 0
        %1116 = vmatprep.subr.bf16.mxu0 0
        %1117 = vmatpush1.bf16.msra.mxu0 0
        %1118 = vmatprep.subr.bf16.mxu0 0
        %1119 = vmatpush1.bf16.msra.mxu0 0
        %1120 = vmatprep.subr.bf16.mxu0 0
        %1121 = vmatpush1.bf16.msra.mxu0 0
        %1122 = vmatprep.subr.bf16.mxu0 0
        %1123 = vmatpush1.bf16.msra.mxu0 0
        %1124 = vmatprep.subr.bf16.mxu0 0
        %1125 = vmatpush1.bf16.msra.mxu0 0
        %1126 = vmatprep.subr.bf16.mxu0 0
        %1127 = vmatpush1.bf16.msra.mxu0 0
        %1128 = vmatprep.subr.bf16.mxu0 0
        %1129 = vmatpush1.bf16.msra.mxu0 0
        %1130 = vmatprep.subr.bf16.mxu0 0
        %1131 = vmatpush1.bf16.msra.mxu0 0
        %1132 = vmatprep.mubr.bf16.mxu0 0
        %1133 = vmatmul.mubr.bf16.gmra.mrb[0].mxu0 %v1077
        %v1134 = vpop.f32.mrb[0].mxu0
        %v1135 = vadd.f32 0.0, %v1134
        %v1136 = vpop.f32.mrb[0].mxu0
        %v1137 = vpop.f32.mrb[0].mxu0
        %v1138 = vadd.f32 0.0, %v1137
        %v1139 = vpop.f32.mrb[0].mxu0
        %1140 = vmatprep.mubr.bf16.mxu0 0
        %1141 = vmatmul.mubr.bf16.gmra.mrb[0].mxu0 %v1080
        %v1142 = vpop.f32.mrb[0].mxu0
        %v1143 = vadd.f32 0.0, %v1142
        %v1144 = vpop.f32.mrb[0].mxu0
        %v1145 = vpop.f32.mrb[0].mxu0
        %v1146 = vadd.f32 0.0, %v1145
        %v1147 = vpop.f32.mrb[0].mxu0
        %1148 = vmatprep.mubr.bf16.mxu0 0
        %1149 = vmatmul.mubr.bf16.gmra.mrb[0].mxu0 %v1083
        %v1150 = vpop.f32.mrb[0].mxu0
        %v1151 = vadd.f32 0.0, %v1150
        %v1152 = vpop.f32.mrb[0].mxu0
        %v1153 = vpop.f32.mrb[0].mxu0
        %v1154 = vadd.f32 0.0, %v1153
        %v1155 = vpop.f32.mrb[0].mxu0
        %1156 = vmatprep.mubr.bf16.mxu0 0
        %1157 = vmatmul.mubr.bf16.gmra.mrb[0].mxu0 %v1086
        %v1158 = vpop.f32.mrb[0].mxu0
        %v1159 = vadd.f32 0.0, %v1158
        %v1160 = vpop.f32.mrb[0].mxu0
        %v1161 = vpop.f32.mrb[0].mxu0
        %v1162 = vadd.f32 0.0, %v1161
        %v1163 = vpop.f32.mrb[0].mxu0
        %1164 = vmatprep.mubr.bf16.mxu0 0
        %1165 = vmatmul.mubr.bf16.gmra.mrb[0].mxu0 %v1089
        %v1166 = vpop.f32.mrb[0].mxu0
        %v1167 = vadd.f32 0.0, %v1166
        %v1168 = vpop.f32.mrb[0].mxu0
        %v1169 = vpop.f32.mrb[0].mxu0
        %v1170 = vadd.f32 0.0, %v1169
        %v1171 = vpop.f32.mrb[0].mxu0
        %1172 = vmatprep.mubr.bf16.mxu0 0
        %1173 = vmatmul.mubr.bf16.gmra.mrb[0].mxu0 %v1092
        %v1174 = vpop.f32.mrb[0].mxu0
        %v1175 = vadd.f32 0.0, %v1174
        %v1176 = vpop.f32.mrb[0].mxu0
        %v1177 = vpop.f32.mrb[0].mxu0
        %v1178 = vadd.f32 0.0, %v1177
        %v1179 = vpop.f32.mrb[0].mxu0
        %1180 = vmatprep.mubr.bf16.mxu0 0
        %1181 = vmatmul.mubr.bf16.gmra.mrb[0].mxu0 %v1095
        %v1182 = vpop.f32.mrb[0].mxu0
        %v1183 = vadd.f32 0.0, %v1182
        %v1184 = vpop.f32.mrb[0].mxu0
        %v1185 = vpop.f32.mrb[0].mxu0
        %v1186 = vadd.f32 0.0, %v1185
        %v1187 = vpop.f32.mrb[0].mxu0
        %1188 = vmatprep.mubr.bf16.mxu0 0
        %1189 = vmatmul.mubr.bf16.gmra.mrb[0].mxu0 %v1098
        %v1190 = vpop.f32.mrb[0].mxu0
        %v1191 = vadd.f32 0.0, %v1190
        %v1192 = vpop.f32.mrb[0].mxu0
        %v1193 = vpop.f32.mrb[0].mxu0
        %v1194 = vadd.f32 0.0, %v1193
        %v1195 = vpop.f32.mrb[0].mxu0
        %1196 = vdwg.mxu0
        %v1198 = vsel %vm383, %v820, 0
        %v1201 = vsel %vm383, %v821, 0
        %v1204 = vsel %vm383, %v822, 0
        %v1207 = vsel %vm383, %v823, 0
        %v1210 = vsel %vm383, %v824, 0
        %v1213 = vsel %vm383, %v825, 0
        %v1216 = vsel %vm383, %v826, 0
        %v1219 = vsel %vm383, %v827, 0
        %1221 = vmatprep.subr.bf16.mxu0 0
        %1222 = vmatpush1.bf16.msra.mxu0 %v832
        %1223 = vmatprep.subr.bf16.mxu0 0
        %1224 = vmatpush1.bf16.msra.mxu0 0
        %1225 = vmatprep.subr.bf16.mxu0 0
        %1226 = vmatpush1.bf16.msra.mxu0 0
        %1227 = vmatprep.subr.bf16.mxu0 0
        %1228 = vmatpush1.bf16.msra.mxu0 0
        %1229 = vmatprep.subr.bf16.mxu0 0
        %1230 = vmatpush1.bf16.msra.mxu0 0
        %1231 = vmatprep.subr.bf16.mxu0 0
        %1232 = vmatpush1.bf16.msra.mxu0 0
        %1233 = vmatprep.subr.bf16.mxu0 0
        %1234 = vmatpush1.bf16.msra.mxu0 0
        %1235 = vmatprep.subr.bf16.mxu0 0
        %1236 = vmatpush1.bf16.msra.mxu0 0
        %1237 = vmatprep.subr.bf16.mxu0 0
        %1238 = vmatpush1.bf16.msra.mxu0 0
        %1239 = vmatprep.subr.bf16.mxu0 0
        %1240 = vmatpush1.bf16.msra.mxu0 0
        %1241 = vmatprep.subr.bf16.mxu0 0
        %1242 = vmatpush1.bf16.msra.mxu0 0
        %1243 = vmatprep.subr.bf16.mxu0 0
        %1244 = vmatpush1.bf16.msra.mxu0 0
        %1245 = vmatprep.subr.bf16.mxu0 0
        %1246 = vmatpush1.bf16.msra.mxu0 0
        %1247 = vmatprep.subr.bf16.mxu0 0
        %1248 = vmatpush1.bf16.msra.mxu0 0
        %1249 = vmatprep.subr.bf16.mxu0 0
        %1250 = vmatpush1.bf16.msra.mxu0 0
        %1251 = vmatprep.subr.bf16.mxu0 0
        %1252 = vmatpush1.bf16.msra.mxu0 0
        %1253 = vmatprep.mubr.bf16.mxu0 0
        %1254 = vmatmul.mubr.bf16.gmra.mrb[0].mxu0 %v1198
        %v1255 = vpop.f32.mrb[0].mxu0
        %v1256 = vadd.f32 0.0, %v1255
        %v1257 = vpop.f32.mrb[0].mxu0
        %v1258 = vpop.f32.mrb[0].mxu0
        %v1259 = vadd.f32 0.0, %v1258
        %v1260 = vpop.f32.mrb[0].mxu0
        %1261 = vmatprep.mubr.bf16.mxu0 0
        %1262 = vmatmul.mubr.bf16.gmra.mrb[0].mxu0 %v1201
        %v1263 = vpop.f32.mrb[0].mxu0
        %v1264 = vadd.f32 0.0, %v1263
        %v1265 = vpop.f32.mrb[0].mxu0
        %v1266 = vpop.f32.mrb[0].mxu0
        %v1267 = vadd.f32 0.0, %v1266
        %v1268 = vpop.f32.mrb[0].mxu0
        %1269 = vmatprep.mubr.bf16.mxu0 0
        %1270 = vmatmul.mubr.bf16.gmra.mrb[0].mxu0 %v1204
        %v1271 = vpop.f32.mrb[0].mxu0
        %v1272 = vadd.f32 0.0, %v1271
        %v1273 = vpop.f32.mrb[0].mxu0
        %v1274 = vpop.f32.mrb[0].mxu0
        %v1275 = vadd.f32 0.0, %v1274
        %v1276 = vpop.f32.mrb[0].mxu0
        %1277 = vmatprep.mubr.bf16.mxu0 0
        %1278 = vmatmul.mubr.bf16.gmra.mrb[0].mxu0 %v1207
        %v1279 = vpop.f32.mrb[0].mxu0
        %v1280 = vadd.f32 0.0, %v1279
        %v1281 = vpop.f32.mrb[0].mxu0
        %v1282 = vpop.f32.mrb[0].mxu0
        %v1283 = vadd.f32 0.0, %v1282
        %v1284 = vpop.f32.mrb[0].mxu0
        %1285 = vmatprep.mubr.bf16.mxu0 0
        %1286 = vmatmul.mubr.bf16.gmra.mrb[0].mxu0 %v1210
        %v1287 = vpop.f32.mrb[0].mxu0
        %v1288 = vadd.f32 0.0, %v1287
        %v1289 = vpop.f32.mrb[0].mxu0
        %v1290 = vpop.f32.mrb[0].mxu0
        %v1291 = vadd.f32 0.0, %v1290
        %v1292 = vpop.f32.mrb[0].mxu0
        %1293 = vmatprep.mubr.bf16.mxu0 0
        %1294 = vmatmul.mubr.bf16.gmra.mrb[0].mxu0 %v1213
        %v1295 = vpop.f32.mrb[0].mxu0
        %v1296 = vadd.f32 0.0, %v1295
        %v1297 = vpop.f32.mrb[0].mxu0
        %v1298 = vpop.f32.mrb[0].mxu0
        %v1299 = vadd.f32 0.0, %v1298
        %v1300 = vpop.f32.mrb[0].mxu0
        %1301 = vmatprep.mubr.bf16.mxu0 0
        %1302 = vmatmul.mubr.bf16.gmra.mrb[0].mxu0 %v1216
        %v1303 = vpop.f32.mrb[0].mxu0
        %v1304 = vadd.f32 0.0, %v1303
        %v1305 = vpop.f32.mrb[0].mxu0
        %v1306 = vpop.f32.mrb[0].mxu0
        %v1307 = vadd.f32 0.0, %v1306
        %v1308 = vpop.f32.mrb[0].mxu0
        %1309 = vmatprep.mubr.bf16.mxu0 0
        %1310 = vmatmul.mubr.bf16.gmra.mrb[0].mxu0 %v1219
        %v1311 = vpop.f32.mrb[0].mxu0
        %v1312 = vadd.f32 0.0, %v1311
        %v1313 = vpop.f32.mrb[0].mxu0
        %v1314 = vpop.f32.mrb[0].mxu0
        %v1315 = vadd.f32 0.0, %v1314
        %v1316 = vpop.f32.mrb[0].mxu0
        %1317 = vdwg.mxu0
        %v1318 = vpack.c.bf16 %v896, %v893
        %v1319 = vpack.c.bf16 %v904, %v901
        %v1320 = vpack.c.bf16 %v912, %v909
        %v1321 = vpack.c.bf16 %v920, %v917
        %v1322 = vpack.c.bf16 %v928, %v925
        %v1323 = vpack.c.bf16 %v936, %v933
        %v1324 = vpack.c.bf16 %v944, %v941
        %v1325 = vpack.c.bf16 %v952, %v949
        %v1326 = vpack.c.bf16 %v1017, %v1014
        %v1327 = vpack.c.bf16 %v1025, %v1022
        %v1328 = vpack.c.bf16 %v1033, %v1030
        %v1329 = vpack.c.bf16 %v1041, %v1038
        %v1330 = vpack.c.bf16 %v1049, %v1046
        %v1331 = vpack.c.bf16 %v1057, %v1054
        %v1332 = vpack.c.bf16 %v1065, %v1062
        %v1333 = vpack.c.bf16 %v1073, %v1070
        %v1334 = vpack.c.bf16 %v1138, %v1135
        %v1335 = vpack.c.bf16 %v1146, %v1143
        %v1336 = vpack.c.bf16 %v1154, %v1151
        %v1337 = vpack.c.bf16 %v1162, %v1159
        %v1338 = vpack.c.bf16 %v1170, %v1167
        %v1339 = vpack.c.bf16 %v1178, %v1175
        %v1340 = vpack.c.bf16 %v1186, %v1183
        %v1341 = vpack.c.bf16 %v1194, %v1191
        %v1342 = vpack.c.bf16 %v1259, %v1256
        %v1343 = vpack.c.bf16 %v1267, %v1264
        %v1344 = vpack.c.bf16 %v1275, %v1272
        %v1345 = vpack.c.bf16 %v1283, %v1280
        %v1346 = vpack.c.bf16 %v1291, %v1288
        %v1347 = vpack.c.bf16 %v1299, %v1296
        %v1348 = vpack.c.bf16 %v1307, %v1304
        %v1349 = vpack.c.bf16 %v1315, %v1312
        %v1350 = vld [vmem:[#allocation5] sm:$0xff]
        %v1351 = vld [vmem:[#allocation5 + $0x8] sm:$0xf]
        %v1352 = vld [vmem:[#allocation5 + $0xc] sm:$0xff]
        %v1353 = vld [vmem:[#allocation5 + $0x14] sm:$0xf]
        %v1354 = vld [vmem:[#allocation5 + $0x18] sm:$0xff]
        %v1355 = vld [vmem:[#allocation5 + $0x20] sm:$0xf]
        %v1356 = vld [vmem:[#allocation5 + $0x24] sm:$0xff]
        %v1357 = vld [vmem:[#allocation5 + $0x2c] sm:$0xf]
        %v1358 = vld [vmem:[#allocation5 + $0x30] sm:$0xff]
        %v1359 = vld [vmem:[#allocation5 + $0x38] sm:$0xf]
        %v1360 = vld [vmem:[#allocation5 + $0x3c] sm:$0xff]
        %v1361 = vld [vmem:[#allocation5 + $0x44] sm:$0xf]
        %v1362 = vld [vmem:[#allocation5 + $0x48] sm:$0xff]
        %v1363 = vld [vmem:[#allocation5 + $0x50] sm:$0xf]
        %v1364 = vld [vmem:[#allocation5 + $0x54] sm:$0xff]
        %v1365 = vld [vmem:[#allocation5 + $0x5c] sm:$0xf]
        %v1366 = vld [vmem:[#allocation5 + $0x60] sm:$0xff]
        %v1367 = vld [vmem:[#allocation5 + $0x68] sm:$0xf]
        %v1368 = vld [vmem:[#allocation5 + $0x6c] sm:$0xff]
        %v1369 = vld [vmem:[#allocation5 + $0x74] sm:$0xf]
        %v1370 = vld [vmem:[#allocation5 + $0x78] sm:$0xff]
        %v1371 = vld [vmem:[#allocation5 + $0x80] sm:$0xf]
        %v1372 = vld [vmem:[#allocation5 + $0x84] sm:$0xff]
        %v1373 = vld [vmem:[#allocation5 + $0x8c] sm:$0xf]
        %v1374 = vld [vmem:[#allocation5 + $0x90] sm:$0xff]
        %v1375 = vld [vmem:[#allocation5 + $0x98] sm:$0xf]
        %v1376 = vld [vmem:[#allocation5 + $0x9c] sm:$0xff]
        %v1377 = vld [vmem:[#allocation5 + $0xa4] sm:$0xf]
        %v1378 = vld [vmem:[#allocation5 + $0xa8] sm:$0xff]
        %v1379 = vld [vmem:[#allocation5 + $0xb0] sm:$0xf]
        %v1380 = vld [vmem:[#allocation5 + $0xb4] sm:$0xff]
        %v1381 = vld [vmem:[#allocation5 + $0xbc] sm:$0xf]
        %v1382 = vld [vmem:[%s4] sm:$0x7]
        %v1384 = vlaneseq
        %v1385 = vshrl.u32 %v1384, 7
        %v1386 = vsub.s32 0, %v1385
        %v1387 = vrot.slane %v1382, %v1386
        %v1388 = vlaneseq
        %v1389 = vshrl.u32 %v1388, 7
        %v1390 = vsub.s32 1, %v1389
        %v1391 = vrot.slane %v1382, %v1390
        %v1392 = vlaneseq
        %v1393 = vshrl.u32 %v1392, 7
        %v1394 = vsub.s32 2, %v1393
        %v1395 = vrot.slane %v1382, %v1394
        %v1431 = vunpack.c.l.b16 %v1350
        %v1432 = vunpack.c.h.b16 %v1350
        %v1433 = vunpack.c.l.b16 %v1351
        %v1434 = vunpack.c.l.b16 %v1352
        %v1435 = vunpack.c.h.b16 %v1352
        %v1436 = vunpack.c.l.b16 %v1353
        %v1437 = vunpack.c.l.b16 %v1354
        %v1438 = vunpack.c.h.b16 %v1354
        %v1439 = vunpack.c.l.b16 %v1355
        %v1440 = vunpack.c.l.b16 %v1356
        %v1441 = vunpack.c.h.b16 %v1356
        %v1442 = vunpack.c.l.b16 %v1357
        %v1443 = vunpack.c.l.b16 %v1358
        %v1444 = vunpack.c.h.b16 %v1358
        %v1445 = vunpack.c.l.b16 %v1359
        %v1446 = vunpack.c.l.b16 %v1360
        %v1447 = vunpack.c.h.b16 %v1360
        %v1448 = vunpack.c.l.b16 %v1361
        %v1449 = vunpack.c.l.b16 %v1362
        %v1450 = vunpack.c.h.b16 %v1362
        %v1451 = vunpack.c.l.b16 %v1363
        %v1452 = vunpack.c.l.b16 %v1364
        %v1453 = vunpack.c.h.b16 %v1364
        %v1454 = vunpack.c.l.b16 %v1365
        %v1455 = vunpack.c.l.b16 %v1366
        %v1456 = vunpack.c.h.b16 %v1366
        %v1457 = vunpack.c.l.b16 %v1367
        %v1458 = vunpack.c.l.b16 %v1368
        %v1459 = vunpack.c.h.b16 %v1368
        %v1460 = vunpack.c.l.b16 %v1369
        %v1461 = vunpack.c.l.b16 %v1370
        %v1462 = vunpack.c.h.b16 %v1370
        %v1463 = vunpack.c.l.b16 %v1371
        %v1464 = vunpack.c.l.b16 %v1372
        %v1465 = vunpack.c.h.b16 %v1372
        %v1466 = vunpack.c.l.b16 %v1373
        %v1467 = vunpack.c.l.b16 %v1374
        %v1468 = vunpack.c.h.b16 %v1374
        %v1469 = vunpack.c.l.b16 %v1375
        %v1470 = vunpack.c.l.b16 %v1376
        %v1471 = vunpack.c.h.b16 %v1376
        %v1472 = vunpack.c.l.b16 %v1377
        %v1473 = vunpack.c.l.b16 %v1378
        %v1474 = vunpack.c.h.b16 %v1378
        %v1475 = vunpack.c.l.b16 %v1379
        %v1476 = vunpack.c.l.b16 %v1380
        %v1477 = vunpack.c.h.b16 %v1380
        %v1478 = vunpack.c.l.b16 %v1381
        %v1479 = vpack.c.b16 %v1434, %v1431
        %v1480 = vpack.c.b16 %v1435, %v1432
        %v1481 = vpack.c.b16 %v1436, %v1433
        %v1482 = vpack.c.b16 %v1440, %v1437
        %v1483 = vpack.c.b16 %v1441, %v1438
        %v1484 = vpack.c.b16 %v1442, %v1439
        %v1485 = vpack.c.b16 %v1446, %v1443
        %v1486 = vpack.c.b16 %v1447, %v1444
        %v1487 = vpack.c.b16 %v1448, %v1445
        %v1488 = vpack.c.b16 %v1452, %v1449
        %v1489 = vpack.c.b16 %v1453, %v1450
        %v1490 = vpack.c.b16 %v1454, %v1451
        %v1491 = vpack.c.b16 %v1458, %v1455
        %v1492 = vpack.c.b16 %v1459, %v1456
        %v1493 = vpack.c.b16 %v1460, %v1457
        %v1494 = vpack.c.b16 %v1464, %v1461
        %v1495 = vpack.c.b16 %v1465, %v1462
        %v1496 = vpack.c.b16 %v1466, %v1463
        %v1497 = vpack.c.b16 %v1470, %v1467
        %v1498 = vpack.c.b16 %v1471, %v1468
        %v1499 = vpack.c.b16 %v1472, %v1469
        %v1500 = vpack.c.b16 %v1476, %v1473
        %v1501 = vpack.c.b16 %v1477, %v1474
        %v1502 = vpack.c.b16 %v1478, %v1475
        %1527 = vmatprep.subr.bf16.mxu0 %v1480
        %1528 = vmatpush1.bf16.msra.mxu0 %v1479
        %1529 = vmatprep.subr.bf16.mxu0 %v1483
        %1530 = vmatpush1.bf16.msra.mxu0 %v1482
        %1531 = vmatprep.subr.bf16.mxu0 %v1486
        %1532 = vmatpush1.bf16.msra.mxu0 %v1485
        %1533 = vmatprep.subr.bf16.mxu0 %v1489
        %1534 = vmatpush1.bf16.msra.mxu0 %v1488
        %1535 = vmatprep.subr.bf16.mxu0 %v1492
        %1536 = vmatpush1.bf16.msra.mxu0 %v1491
        %1537 = vmatprep.subr.bf16.mxu0 %v1495
        %1538 = vmatpush1.bf16.msra.mxu0 %v1494
        %1539 = vmatprep.subr.bf16.mxu0 %v1498
        %1540 = vmatpush1.bf16.msra.mxu0 %v1497
        %1541 = vmatprep.subr.bf16.mxu0 %v1501
        %1542 = vmatpush1.bf16.msra.mxu0 %v1500
        %1543 = vmatprep.subr.bf16.mxu0 0
        %1544 = vmatpush1.bf16.msra.mxu0 0
        %1545 = vmatprep.subr.bf16.mxu0 0
        %1546 = vmatpush1.bf16.msra.mxu0 0
        %1547 = vmatprep.subr.bf16.mxu0 0
        %1548 = vmatpush1.bf16.msra.mxu0 0
        %1549 = vmatprep.subr.bf16.mxu0 0
        %1550 = vmatpush1.bf16.msra.mxu0 0
        %1551 = vmatprep.subr.bf16.mxu0 0
        %1552 = vmatpush1.bf16.msra.mxu0 0
        %1553 = vmatprep.subr.bf16.mxu0 0
        %1554 = vmatpush1.bf16.msra.mxu0 0
        %1555 = vmatprep.subr.bf16.mxu0 0
        %1556 = vmatpush1.bf16.msra.mxu0 0
        %1557 = vmatprep.subr.bf16.mxu0 0
        %1558 = vmatpush1.bf16.msra.mxu0 0
        %1559 = vmatprep.mubr.bf16.mxu0 0
        %1560 = vmatmul.mubr.bf16.gmra.mrb[0].mxu0 %v1318
        %v1561 = vpop.f32.mrb[0].mxu0
        %v1562 = vadd.f32 %v1387, %v1561
        %v1563 = vpop.f32.mrb[0].mxu0
        %v1564 = vadd.f32 %v1391, %v1563
        %v1565 = vpop.f32.mrb[0].mxu0
        %v1566 = vadd.f32 %v1387, %v1565
        %v1567 = vpop.f32.mrb[0].mxu0
        %v1568 = vadd.f32 %v1391, %v1567
        %1569 = vmatprep.mubr.bf16.mxu0 0
        %1570 = vmatmul.mubr.bf16.gmra.mrb[0].mxu0 %v1319
        %v1571 = vpop.f32.mrb[0].mxu0
        %v1572 = vadd.f32 %v1387, %v1571
        %v1573 = vpop.f32.mrb[0].mxu0
        %v1574 = vadd.f32 %v1391, %v1573
        %v1575 = vpop.f32.mrb[0].mxu0
        %v1576 = vadd.f32 %v1387, %v1575
        %v1577 = vpop.f32.mrb[0].mxu0
        %v1578 = vadd.f32 %v1391, %v1577
        %1579 = vmatprep.mubr.bf16.mxu0 0
        %1580 = vmatmul.mubr.bf16.gmra.mrb[0].mxu0 %v1320
        %v1581 = vpop.f32.mrb[0].mxu0
        %v1582 = vadd.f32 %v1387, %v1581
        %v1583 = vpop.f32.mrb[0].mxu0
        %v1584 = vadd.f32 %v1391, %v1583
        %v1585 = vpop.f32.mrb[0].mxu0
        %v1586 = vadd.f32 %v1387, %v1585
        %v1587 = vpop.f32.mrb[0].mxu0
        %v1588 = vadd.f32 %v1391, %v1587
        %1589 = vmatprep.mubr.bf16.mxu0 0
        %1590 = vmatmul.mubr.bf16.gmra.mrb[0].mxu0 %v1321
        %v1591 = vpop.f32.mrb[0].mxu0
        %v1592 = vadd.f32 %v1387, %v1591
        %v1593 = vpop.f32.mrb[0].mxu0
        %v1594 = vadd.f32 %v1391, %v1593
        %v1595 = vpop.f32.mrb[0].mxu0
        %v1596 = vadd.f32 %v1387, %v1595
        %v1597 = vpop.f32.mrb[0].mxu0
        %v1598 = vadd.f32 %v1391, %v1597
        %1599 = vmatprep.mubr.bf16.mxu0 0
        %1600 = vmatmul.mubr.bf16.gmra.mrb[0].mxu0 %v1322
        %v1601 = vpop.f32.mrb[0].mxu0
        %v1602 = vadd.f32 %v1387, %v1601
        %v1603 = vpop.f32.mrb[0].mxu0
        %v1604 = vadd.f32 %v1391, %v1603
        %v1605 = vpop.f32.mrb[0].mxu0
        %v1606 = vadd.f32 %v1387, %v1605
        %v1607 = vpop.f32.mrb[0].mxu0
        %v1608 = vadd.f32 %v1391, %v1607
        %1609 = vmatprep.mubr.bf16.mxu0 0
        %1610 = vmatmul.mubr.bf16.gmra.mrb[0].mxu0 %v1323
        %v1611 = vpop.f32.mrb[0].mxu0
        %v1612 = vadd.f32 %v1387, %v1611
        %v1613 = vpop.f32.mrb[0].mxu0
        %v1614 = vadd.f32 %v1391, %v1613
        %v1615 = vpop.f32.mrb[0].mxu0
        %v1616 = vadd.f32 %v1387, %v1615
        %v1617 = vpop.f32.mrb[0].mxu0
        %v1618 = vadd.f32 %v1391, %v1617
        %1619 = vmatprep.mubr.bf16.mxu0 0
        %1620 = vmatmul.mubr.bf16.gmra.mrb[0].mxu0 %v1324
        %v1621 = vpop.f32.mrb[0].mxu0
        %v1622 = vadd.f32 %v1387, %v1621
        %v1623 = vpop.f32.mrb[0].mxu0
        %v1624 = vadd.f32 %v1391, %v1623
        %v1625 = vpop.f32.mrb[0].mxu0
        %v1626 = vadd.f32 %v1387, %v1625
        %v1627 = vpop.f32.mrb[0].mxu0
        %v1628 = vadd.f32 %v1391, %v1627
        %1629 = vmatprep.mubr.bf16.mxu0 0
        %1630 = vmatmul.mubr.bf16.gmra.mrb[0].mxu0 %v1325
        %v1631 = vpop.f32.mrb[0].mxu0
        %v1632 = vadd.f32 %v1387, %v1631
        %v1633 = vpop.f32.mrb[0].mxu0
        %v1634 = vadd.f32 %v1391, %v1633
        %v1635 = vpop.f32.mrb[0].mxu0
        %v1636 = vadd.f32 %v1387, %v1635
        %v1637 = vpop.f32.mrb[0].mxu0
        %v1638 = vadd.f32 %v1391, %v1637
        %1639 = vmatprep.mubr.bf16.mxu0 0
        %1640 = vmatmul.mubr.bf16.gmra.mrb[0].mxu0 %v1326
        %v1641 = vpop.f32.mrb[0].mxu0
        %v1642 = vadd.f32 %v1387, %v1641
        %v1643 = vpop.f32.mrb[0].mxu0
        %v1644 = vadd.f32 %v1391, %v1643
        %v1645 = vpop.f32.mrb[0].mxu0
        %v1646 = vadd.f32 %v1387, %v1645
        %v1647 = vpop.f32.mrb[0].mxu0
        %v1648 = vadd.f32 %v1391, %v1647
        %1649 = vmatprep.mubr.bf16.mxu0 0
        %1650 = vmatmul.mubr.bf16.gmra.mrb[0].mxu0 %v1327
        %v1651 = vpop.f32.mrb[0].mxu0
        %v1652 = vadd.f32 %v1387, %v1651
        %v1653 = vpop.f32.mrb[0].mxu0
        %v1654 = vadd.f32 %v1391, %v1653
        %v1655 = vpop.f32.mrb[0].mxu0
        %v1656 = vadd.f32 %v1387, %v1655
        %v1657 = vpop.f32.mrb[0].mxu0
        %v1658 = vadd.f32 %v1391, %v1657
        %1659 = vmatprep.mubr.bf16.mxu0 0
        %1660 = vmatmul.mubr.bf16.gmra.mrb[0].mxu0 %v1328
        %v1661 = vpop.f32.mrb[0].mxu0
        %v1662 = vadd.f32 %v1387, %v1661
        %v1663 = vpop.f32.mrb[0].mxu0
        %v1664 = vadd.f32 %v1391, %v1663
        %v1665 = vpop.f32.mrb[0].mxu0
        %v1666 = vadd.f32 %v1387, %v1665
        %v1667 = vpop.f32.mrb[0].mxu0
        %v1668 = vadd.f32 %v1391, %v1667
        %1669 = vmatprep.mubr.bf16.mxu0 0
        %1670 = vmatmul.mubr.bf16.gmra.mrb[0].mxu0 %v1329
        %v1671 = vpop.f32.mrb[0].mxu0
        %v1672 = vadd.f32 %v1387, %v1671
        %v1673 = vpop.f32.mrb[0].mxu0
        %v1674 = vadd.f32 %v1391, %v1673
        %v1675 = vpop.f32.mrb[0].mxu0
        %v1676 = vadd.f32 %v1387, %v1675
        %v1677 = vpop.f32.mrb[0].mxu0
        %v1678 = vadd.f32 %v1391, %v1677
        %1679 = vmatprep.mubr.bf16.mxu0 0
        %1680 = vmatmul.mubr.bf16.gmra.mrb[0].mxu0 %v1330
        %v1681 = vpop.f32.mrb[0].mxu0
        %v1682 = vadd.f32 %v1387, %v1681
        %v1683 = vpop.f32.mrb[0].mxu0
        %v1684 = vadd.f32 %v1391, %v1683
        %v1685 = vpop.f32.mrb[0].mxu0
        %v1686 = vadd.f32 %v1387, %v1685
        %v1687 = vpop.f32.mrb[0].mxu0
        %v1688 = vadd.f32 %v1391, %v1687
        %1689 = vmatprep.mubr.bf16.mxu0 0
        %1690 = vmatmul.mubr.bf16.gmra.mrb[0].mxu0 %v1331
        %v1691 = vpop.f32.mrb[0].mxu0
        %v1692 = vadd.f32 %v1387, %v1691
        %v1693 = vpop.f32.mrb[0].mxu0
        %v1694 = vadd.f32 %v1391, %v1693
        %v1695 = vpop.f32.mrb[0].mxu0
        %v1696 = vadd.f32 %v1387, %v1695
        %v1697 = vpop.f32.mrb[0].mxu0
        %v1698 = vadd.f32 %v1391, %v1697
        %1699 = vmatprep.mubr.bf16.mxu0 0
        %1700 = vmatmul.mubr.bf16.gmra.mrb[0].mxu0 %v1332
        %v1701 = vpop.f32.mrb[0].mxu0
        %v1702 = vadd.f32 %v1387, %v1701
        %v1703 = vpop.f32.mrb[0].mxu0
        %v1704 = vadd.f32 %v1391, %v1703
        %v1705 = vpop.f32.mrb[0].mxu0
        %v1706 = vadd.f32 %v1387, %v1705
        %v1707 = vpop.f32.mrb[0].mxu0
        %v1708 = vadd.f32 %v1391, %v1707
        %1709 = vmatprep.mubr.bf16.mxu0 0
        %1710 = vmatmul.mubr.bf16.gmra.mrb[0].mxu0 %v1333
        %v1711 = vpop.f32.mrb[0].mxu0
        %v1712 = vadd.f32 %v1387, %v1711
        %v1713 = vpop.f32.mrb[0].mxu0
        %v1714 = vadd.f32 %v1391, %v1713
        %v1715 = vpop.f32.mrb[0].mxu0
        %v1716 = vadd.f32 %v1387, %v1715
        %v1717 = vpop.f32.mrb[0].mxu0
        %v1718 = vadd.f32 %v1391, %v1717
        %1719 = vmatprep.mubr.bf16.mxu0 0
        %1720 = vmatmul.mubr.bf16.gmra.mrb[0].mxu0 %v1334
        %v1721 = vpop.f32.mrb[0].mxu0
        %v1722 = vadd.f32 %v1387, %v1721
        %v1723 = vpop.f32.mrb[0].mxu0
        %v1724 = vadd.f32 %v1391, %v1723
        %v1725 = vpop.f32.mrb[0].mxu0
        %v1726 = vadd.f32 %v1387, %v1725
        %v1727 = vpop.f32.mrb[0].mxu0
        %v1728 = vadd.f32 %v1391, %v1727
        %1729 = vmatprep.mubr.bf16.mxu0 0
        %1730 = vmatmul.mubr.bf16.gmra.mrb[0].mxu0 %v1335
        %v1731 = vpop.f32.mrb[0].mxu0
        %v1732 = vadd.f32 %v1387, %v1731
        %v1733 = vpop.f32.mrb[0].mxu0
        %v1734 = vadd.f32 %v1391, %v1733
        %v1735 = vpop.f32.mrb[0].mxu0
        %v1736 = vadd.f32 %v1387, %v1735
        %v1737 = vpop.f32.mrb[0].mxu0
        %v1738 = vadd.f32 %v1391, %v1737
        %1739 = vmatprep.mubr.bf16.mxu0 0
        %1740 = vmatmul.mubr.bf16.gmra.mrb[0].mxu0 %v1336
        %v1741 = vpop.f32.mrb[0].mxu0
        %v1742 = vadd.f32 %v1387, %v1741
        %v1743 = vpop.f32.mrb[0].mxu0
        %v1744 = vadd.f32 %v1391, %v1743
        %v1745 = vpop.f32.mrb[0].mxu0
        %v1746 = vadd.f32 %v1387, %v1745
        %v1747 = vpop.f32.mrb[0].mxu0
        %v1748 = vadd.f32 %v1391, %v1747
        %1749 = vmatprep.mubr.bf16.mxu0 0
        %1750 = vmatmul.mubr.bf16.gmra.mrb[0].mxu0 %v1337
        %v1751 = vpop.f32.mrb[0].mxu0
        %v1752 = vadd.f32 %v1387, %v1751
        %v1753 = vpop.f32.mrb[0].mxu0
        %v1754 = vadd.f32 %v1391, %v1753
        %v1755 = vpop.f32.mrb[0].mxu0
        %v1756 = vadd.f32 %v1387, %v1755
        %v1757 = vpop.f32.mrb[0].mxu0
        %v1758 = vadd.f32 %v1391, %v1757
        %1759 = vmatprep.mubr.bf16.mxu0 0
        %1760 = vmatmul.mubr.bf16.gmra.mrb[0].mxu0 %v1338
        %v1761 = vpop.f32.mrb[0].mxu0
        %v1762 = vadd.f32 %v1387, %v1761
        %v1763 = vpop.f32.mrb[0].mxu0
        %v1764 = vadd.f32 %v1391, %v1763
        %v1765 = vpop.f32.mrb[0].mxu0
        %v1766 = vadd.f32 %v1387, %v1765
        %v1767 = vpop.f32.mrb[0].mxu0
        %v1768 = vadd.f32 %v1391, %v1767
        %1769 = vmatprep.mubr.bf16.mxu0 0
        %1770 = vmatmul.mubr.bf16.gmra.mrb[0].mxu0 %v1339
        %v1771 = vpop.f32.mrb[0].mxu0
        %v1772 = vadd.f32 %v1387, %v1771
        %v1773 = vpop.f32.mrb[0].mxu0
        %v1774 = vadd.f32 %v1391, %v1773
        %v1775 = vpop.f32.mrb[0].mxu0
        %v1776 = vadd.f32 %v1387, %v1775
        %v1777 = vpop.f32.mrb[0].mxu0
        %v1778 = vadd.f32 %v1391, %v1777
        %1779 = vmatprep.mubr.bf16.mxu0 0
        %1780 = vmatmul.mubr.bf16.gmra.mrb[0].mxu0 %v1340
        %v1781 = vpop.f32.mrb[0].mxu0
        %v1782 = vadd.f32 %v1387, %v1781
        %v1783 = vpop.f32.mrb[0].mxu0
        %v1784 = vadd.f32 %v1391, %v1783
        %v1785 = vpop.f32.mrb[0].mxu0
        %v1786 = vadd.f32 %v1387, %v1785
        %v1787 = vpop.f32.mrb[0].mxu0
        %v1788 = vadd.f32 %v1391, %v1787
        %1789 = vmatprep.mubr.bf16.mxu0 0
        %1790 = vmatmul.mubr.bf16.gmra.mrb[0].mxu0 %v1341
        %v1791 = vpop.f32.mrb[0].mxu0
        %v1792 = vadd.f32 %v1387, %v1791
        %v1793 = vpop.f32.mrb[0].mxu0
        %v1794 = vadd.f32 %v1391, %v1793
        %v1795 = vpop.f32.mrb[0].mxu0
        %v1796 = vadd.f32 %v1387, %v1795
        %v1797 = vpop.f32.mrb[0].mxu0
        %v1798 = vadd.f32 %v1391, %v1797
        %1799 = vmatprep.mubr.bf16.mxu0 0
        %1800 = vmatmul.mubr.bf16.gmra.mrb[0].mxu0 %v1342
        %v1801 = vpop.f32.mrb[0].mxu0
        %v1802 = vadd.f32 %v1387, %v1801
        %v1803 = vpop.f32.mrb[0].mxu0
        %v1804 = vadd.f32 %v1391, %v1803
        %v1805 = vpop.f32.mrb[0].mxu0
        %v1806 = vadd.f32 %v1387, %v1805
        %v1807 = vpop.f32.mrb[0].mxu0
        %v1808 = vadd.f32 %v1391, %v1807
        %1809 = vmatprep.mubr.bf16.mxu0 0
        %1810 = vmatmul.mubr.bf16.gmra.mrb[0].mxu0 %v1343
        %v1811 = vpop.f32.mrb[0].mxu0
        %v1812 = vadd.f32 %v1387, %v1811
        %v1813 = vpop.f32.mrb[0].mxu0
        %v1814 = vadd.f32 %v1391, %v1813
        %v1815 = vpop.f32.mrb[0].mxu0
        %v1816 = vadd.f32 %v1387, %v1815
        %v1817 = vpop.f32.mrb[0].mxu0
        %v1818 = vadd.f32 %v1391, %v1817
        %1819 = vmatprep.mubr.bf16.mxu0 0
        %1820 = vmatmul.mubr.bf16.gmra.mrb[0].mxu0 %v1344
        %v1821 = vpop.f32.mrb[0].mxu0
        %v1822 = vadd.f32 %v1387, %v1821
        %v1823 = vpop.f32.mrb[0].mxu0
        %v1824 = vadd.f32 %v1391, %v1823
        %v1825 = vpop.f32.mrb[0].mxu0
        %v1826 = vadd.f32 %v1387, %v1825
        %v1827 = vpop.f32.mrb[0].mxu0
        %v1828 = vadd.f32 %v1391, %v1827
        %1829 = vmatprep.mubr.bf16.mxu0 0
        %1830 = vmatmul.mubr.bf16.gmra.mrb[0].mxu0 %v1345
        %v1831 = vpop.f32.mrb[0].mxu0
        %v1832 = vadd.f32 %v1387, %v1831
        %v1833 = vpop.f32.mrb[0].mxu0
        %v1834 = vadd.f32 %v1391, %v1833
        %v1835 = vpop.f32.mrb[0].mxu0
        %v1836 = vadd.f32 %v1387, %v1835
        %v1837 = vpop.f32.mrb[0].mxu0
        %v1838 = vadd.f32 %v1391, %v1837
        %1839 = vmatprep.mubr.bf16.mxu0 0
        %1840 = vmatmul.mubr.bf16.gmra.mrb[0].mxu0 %v1346
        %v1841 = vpop.f32.mrb[0].mxu0
        %v1842 = vadd.f32 %v1387, %v1841
        %v1843 = vpop.f32.mrb[0].mxu0
        %v1844 = vadd.f32 %v1391, %v1843
        %v1845 = vpop.f32.mrb[0].mxu0
        %v1846 = vadd.f32 %v1387, %v1845
        %v1847 = vpop.f32.mrb[0].mxu0
        %v1848 = vadd.f32 %v1391, %v1847
        %1849 = vmatprep.mubr.bf16.mxu0 0
        %1850 = vmatmul.mubr.bf16.gmra.mrb[0].mxu0 %v1347
        %v1851 = vpop.f32.mrb[0].mxu0
        %v1852 = vadd.f32 %v1387, %v1851
        %v1853 = vpop.f32.mrb[0].mxu0
        %v1854 = vadd.f32 %v1391, %v1853
        %v1855 = vpop.f32.mrb[0].mxu0
        %v1856 = vadd.f32 %v1387, %v1855
        %v1857 = vpop.f32.mrb[0].mxu0
        %v1858 = vadd.f32 %v1391, %v1857
        %1859 = vmatprep.mubr.bf16.mxu0 0
        %1860 = vmatmul.mubr.bf16.gmra.mrb[0].mxu0 %v1348
        %v1861 = vpop.f32.mrb[0].mxu0
        %v1862 = vadd.f32 %v1387, %v1861
        %v1863 = vpop.f32.mrb[0].mxu0
        %v1864 = vadd.f32 %v1391, %v1863
        %v1865 = vpop.f32.mrb[0].mxu0
        %v1866 = vadd.f32 %v1387, %v1865
        %v1867 = vpop.f32.mrb[0].mxu0
        %v1868 = vadd.f32 %v1391, %v1867
        %1869 = vmatprep.mubr.bf16.mxu0 0
        %1870 = vmatmul.mubr.bf16.gmra.mrb[0].mxu0 %v1349
        %v1871 = vpop.f32.mrb[0].mxu0
        %v1872 = vadd.f32 %v1387, %v1871
        %v1873 = vpop.f32.mrb[0].mxu0
        %v1874 = vadd.f32 %v1391, %v1873
        %v1875 = vpop.f32.mrb[0].mxu0
        %v1876 = vadd.f32 %v1387, %v1875
        %v1877 = vpop.f32.mrb[0].mxu0
        %v1878 = vadd.f32 %v1391, %v1877
        %1879 = vdwg.mxu0
        %1880 = vmatprep.subr.bf16.mxu0 0
        %1881 = vmatpush1.bf16.msra.mxu0 %v1481
        %1882 = vmatprep.subr.bf16.mxu0 0
        %1883 = vmatpush1.bf16.msra.mxu0 %v1484
        %1884 = vmatprep.subr.bf16.mxu0 0
        %1885 = vmatpush1.bf16.msra.mxu0 %v1487
        %1886 = vmatprep.subr.bf16.mxu0 0
        %1887 = vmatpush1.bf16.msra.mxu0 %v1490
        %1888 = vmatprep.subr.bf16.mxu0 0
        %1889 = vmatpush1.bf16.msra.mxu0 %v1493
        %1890 = vmatprep.subr.bf16.mxu0 0
        %1891 = vmatpush1.bf16.msra.mxu0 %v1496
        %1892 = vmatprep.subr.bf16.mxu0 0
        %1893 = vmatpush1.bf16.msra.mxu0 %v1499
        %1894 = vmatprep.subr.bf16.mxu0 0
        %1895 = vmatpush1.bf16.msra.mxu0 %v1502
        %1896 = vmatprep.subr.bf16.mxu0 0
        %1897 = vmatpush1.bf16.msra.mxu0 0
        %1898 = vmatprep.subr.bf16.mxu0 0
        %1899 = vmatpush1.bf16.msra.mxu0 0
        %1900 = vmatprep.subr.bf16.mxu0 0
        %1901 = vmatpush1.bf16.msra.mxu0 0
        %1902 = vmatprep.subr.bf16.mxu0 0
        %1903 = vmatpush1.bf16.msra.mxu0 0
        %1904 = vmatprep.subr.bf16.mxu0 0
        %1905 = vmatpush1.bf16.msra.mxu0 0
        %1906 = vmatprep.subr.bf16.mxu0 0
        %1907 = vmatpush1.bf16.msra.mxu0 0
        %1908 = vmatprep.subr.bf16.mxu0 0
        %1909 = vmatpush1.bf16.msra.mxu0 0
        %1910 = vmatprep.subr.bf16.mxu0 0
        %1911 = vmatpush1.bf16.msra.mxu0 0
        %1912 = vmatprep.mubr.bf16.mxu0 0
        %1913 = vmatmul.mubr.bf16.gmra.mrb[0].mxu0 %v1318
        %v1914 = vpop.f32.mrb[0].mxu0
        %v1915 = vadd.f32 %v1395, %v1914
        %v1916 = vpop.f32.mrb[0].mxu0
        %v1917 = vpop.f32.mrb[0].mxu0
        %v1918 = vadd.f32 %v1395, %v1917
        %v1919 = vpop.f32.mrb[0].mxu0
        %1920 = vmatprep.mubr.bf16.mxu0 0
        %1921 = vmatmul.mubr.bf16.gmra.mrb[0].mxu0 %v1319
        %v1922 = vpop.f32.mrb[0].mxu0
        %v1923 = vadd.f32 %v1395, %v1922
        %v1924 = vpop.f32.mrb[0].mxu0
        %v1925 = vpop.f32.mrb[0].mxu0
        %v1926 = vadd.f32 %v1395, %v1925
        %v1927 = vpop.f32.mrb[0].mxu0
        %1928 = vmatprep.mubr.bf16.mxu0 0
        %1929 = vmatmul.mubr.bf16.gmra.mrb[0].mxu0 %v1320
        %v1930 = vpop.f32.mrb[0].mxu0
        %v1931 = vadd.f32 %v1395, %v1930
        %v1932 = vpop.f32.mrb[0].mxu0
        %v1933 = vpop.f32.mrb[0].mxu0
        %v1934 = vadd.f32 %v1395, %v1933
        %v1935 = vpop.f32.mrb[0].mxu0
        %1936 = vmatprep.mubr.bf16.mxu0 0
        %1937 = vmatmul.mubr.bf16.gmra.mrb[0].mxu0 %v1321
        %v1938 = vpop.f32.mrb[0].mxu0
        %v1939 = vadd.f32 %v1395, %v1938
        %v1940 = vpop.f32.mrb[0].mxu0
        %v1941 = vpop.f32.mrb[0].mxu0
        %v1942 = vadd.f32 %v1395, %v1941
        %v1943 = vpop.f32.mrb[0].mxu0
        %1944 = vmatprep.mubr.bf16.mxu0 0
        %1945 = vmatmul.mubr.bf16.gmra.mrb[0].mxu0 %v1322
        %v1946 = vpop.f32.mrb[0].mxu0
        %v1947 = vadd.f32 %v1395, %v1946
        %v1948 = vpop.f32.mrb[0].mxu0
        %v1949 = vpop.f32.mrb[0].mxu0
        %v1950 = vadd.f32 %v1395, %v1949
        %v1951 = vpop.f32.mrb[0].mxu0
        %1952 = vmatprep.mubr.bf16.mxu0 0
        %1953 = vmatmul.mubr.bf16.gmra.mrb[0].mxu0 %v1323
        %v1954 = vpop.f32.mrb[0].mxu0
        %v1955 = vadd.f32 %v1395, %v1954
        %v1956 = vpop.f32.mrb[0].mxu0
        %v1957 = vpop.f32.mrb[0].mxu0
        %v1958 = vadd.f32 %v1395, %v1957
        %v1959 = vpop.f32.mrb[0].mxu0
        %1960 = vmatprep.mubr.bf16.mxu0 0
        %1961 = vmatmul.mubr.bf16.gmra.mrb[0].mxu0 %v1324
        %v1962 = vpop.f32.mrb[0].mxu0
        %v1963 = vadd.f32 %v1395, %v1962
        %v1964 = vpop.f32.mrb[0].mxu0
        %v1965 = vpop.f32.mrb[0].mxu0
        %v1966 = vadd.f32 %v1395, %v1965
        %v1967 = vpop.f32.mrb[0].mxu0
        %1968 = vmatprep.mubr.bf16.mxu0 0
        %1969 = vmatmul.mubr.bf16.gmra.mrb[0].mxu0 %v1325
        %v1970 = vpop.f32.mrb[0].mxu0
        %v1971 = vadd.f32 %v1395, %v1970
        %v1972 = vpop.f32.mrb[0].mxu0
        %v1973 = vpop.f32.mrb[0].mxu0
        %v1974 = vadd.f32 %v1395, %v1973
        %v1975 = vpop.f32.mrb[0].mxu0
        %1976 = vmatprep.mubr.bf16.mxu0 0
        %1977 = vmatmul.mubr.bf16.gmra.mrb[0].mxu0 %v1326
        %v1978 = vpop.f32.mrb[0].mxu0
        %v1979 = vadd.f32 %v1395, %v1978
        %v1980 = vpop.f32.mrb[0].mxu0
        %v1981 = vpop.f32.mrb[0].mxu0
        %v1982 = vadd.f32 %v1395, %v1981
        %v1983 = vpop.f32.mrb[0].mxu0
        %1984 = vmatprep.mubr.bf16.mxu0 0
        %1985 = vmatmul.mubr.bf16.gmra.mrb[0].mxu0 %v1327
        %v1986 = vpop.f32.mrb[0].mxu0
        %v1987 = vadd.f32 %v1395, %v1986
        %v1988 = vpop.f32.mrb[0].mxu0
        %v1989 = vpop.f32.mrb[0].mxu0
        %v1990 = vadd.f32 %v1395, %v1989
        %v1991 = vpop.f32.mrb[0].mxu0
        %1992 = vmatprep.mubr.bf16.mxu0 0
        %1993 = vmatmul.mubr.bf16.gmra.mrb[0].mxu0 %v1328
        %v1994 = vpop.f32.mrb[0].mxu0
        %v1995 = vadd.f32 %v1395, %v1994
        %v1996 = vpop.f32.mrb[0].mxu0
        %v1997 = vpop.f32.mrb[0].mxu0
        %v1998 = vadd.f32 %v1395, %v1997
        %v1999 = vpop.f32.mrb[0].mxu0
        %2000 = vmatprep.mubr.bf16.mxu0 0
        %2001 = vmatmul.mubr.bf16.gmra.mrb[0].mxu0 %v1329
        %v2002 = vpop.f32.mrb[0].mxu0
        %v2003 = vadd.f32 %v1395, %v2002
        %v2004 = vpop.f32.mrb[0].mxu0
        %v2005 = vpop.f32.mrb[0].mxu0
        %v2006 = vadd.f32 %v1395, %v2005
        %v2007 = vpop.f32.mrb[0].mxu0
        %2008 = vmatprep.mubr.bf16.mxu0 0
        %2009 = vmatmul.mubr.bf16.gmra.mrb[0].mxu0 %v1330
        %v2010 = vpop.f32.mrb[0].mxu0
        %v2011 = vadd.f32 %v1395, %v2010
        %v2012 = vpop.f32.mrb[0].mxu0
        %v2013 = vpop.f32.mrb[0].mxu0
        %v2014 = vadd.f32 %v1395, %v2013
        %v2015 = vpop.f32.mrb[0].mxu0
        %2016 = vmatprep.mubr.bf16.mxu0 0
        %2017 = vmatmul.mubr.bf16.gmra.mrb[0].mxu0 %v1331
        %v2018 = vpop.f32.mrb[0].mxu0
        %v2019 = vadd.f32 %v1395, %v2018
        %v2020 = vpop.f32.mrb[0].mxu0
        %v2021 = vpop.f32.mrb[0].mxu0
        %v2022 = vadd.f32 %v1395, %v2021
        %v2023 = vpop.f32.mrb[0].mxu0
        %2024 = vmatprep.mubr.bf16.mxu0 0
        %2025 = vmatmul.mubr.bf16.gmra.mrb[0].mxu0 %v1332
        %v2026 = vpop.f32.mrb[0].mxu0
        %v2027 = vadd.f32 %v1395, %v2026
        %v2028 = vpop.f32.mrb[0].mxu0
        %v2029 = vpop.f32.mrb[0].mxu0
        %v2030 = vadd.f32 %v1395, %v2029
        %v2031 = vpop.f32.mrb[0].mxu0
        %2032 = vmatprep.mubr.bf16.mxu0 0
        %2033 = vmatmul.mubr.bf16.gmra.mrb[0].mxu0 %v1333
        %v2034 = vpop.f32.mrb[0].mxu0
        %v2035 = vadd.f32 %v1395, %v2034
        %v2036 = vpop.f32.mrb[0].mxu0
        %v2037 = vpop.f32.mrb[0].mxu0
        %v2038 = vadd.f32 %v1395, %v2037
        %v2039 = vpop.f32.mrb[0].mxu0
        %2040 = vmatprep.mubr.bf16.mxu0 0
        %2041 = vmatmul.mubr.bf16.gmra.mrb[0].mxu0 %v1334
        %v2042 = vpop.f32.mrb[0].mxu0
        %v2043 = vadd.f32 %v1395, %v2042
        %v2044 = vpop.f32.mrb[0].mxu0
        %v2045 = vpop.f32.mrb[0].mxu0
        %v2046 = vadd.f32 %v1395, %v2045
        %v2047 = vpop.f32.mrb[0].mxu0
        %2048 = vmatprep.mubr.bf16.mxu0 0
        %2049 = vmatmul.mubr.bf16.gmra.mrb[0].mxu0 %v1335
        %v2050 = vpop.f32.mrb[0].mxu0
        %v2051 = vadd.f32 %v1395, %v2050
        %v2052 = vpop.f32.mrb[0].mxu0
        %v2053 = vpop.f32.mrb[0].mxu0
        %v2054 = vadd.f32 %v1395, %v2053
        %v2055 = vpop.f32.mrb[0].mxu0
        %2056 = vmatprep.mubr.bf16.mxu0 0
        %2057 = vmatmul.mubr.bf16.gmra.mrb[0].mxu0 %v1336
        %v2058 = vpop.f32.mrb[0].mxu0
        %v2059 = vadd.f32 %v1395, %v2058
        %v2060 = vpop.f32.mrb[0].mxu0
        %v2061 = vpop.f32.mrb[0].mxu0
        %v2062 = vadd.f32 %v1395, %v2061
        %v2063 = vpop.f32.mrb[0].mxu0
        %2064 = vmatprep.mubr.bf16.mxu0 0
        %2065 = vmatmul.mubr.bf16.gmra.mrb[0].mxu0 %v1337
        %v2066 = vpop.f32.mrb[0].mxu0
        %v2067 = vadd.f32 %v1395, %v2066
        %v2068 = vpop.f32.mrb[0].mxu0
        %v2069 = vpop.f32.mrb[0].mxu0
        %v2070 = vadd.f32 %v1395, %v2069
        %v2071 = vpop.f32.mrb[0].mxu0
        %2072 = vmatprep.mubr.bf16.mxu0 0
        %2073 = vmatmul.mubr.bf16.gmra.mrb[0].mxu0 %v1338
        %v2074 = vpop.f32.mrb[0].mxu0
        %v2075 = vadd.f32 %v1395, %v2074
        %v2076 = vpop.f32.mrb[0].mxu0
        %v2077 = vpop.f32.mrb[0].mxu0
        %v2078 = vadd.f32 %v1395, %v2077
        %v2079 = vpop.f32.mrb[0].mxu0
        %2080 = vmatprep.mubr.bf16.mxu0 0
        %2081 = vmatmul.mubr.bf16.gmra.mrb[0].mxu0 %v1339
        %v2082 = vpop.f32.mrb[0].mxu0
        %v2083 = vadd.f32 %v1395, %v2082
        %v2084 = vpop.f32.mrb[0].mxu0
        %v2085 = vpop.f32.mrb[0].mxu0
        %v2086 = vadd.f32 %v1395, %v2085
        %v2087 = vpop.f32.mrb[0].mxu0
        %2088 = vmatprep.mubr.bf16.mxu0 0
        %2089 = vmatmul.mubr.bf16.gmra.mrb[0].mxu0 %v1340
        %v2090 = vpop.f32.mrb[0].mxu0
        %v2091 = vadd.f32 %v1395, %v2090
        %v2092 = vpop.f32.mrb[0].mxu0
        %v2093 = vpop.f32.mrb[0].mxu0
        %v2094 = vadd.f32 %v1395, %v2093
        %v2095 = vpop.f32.mrb[0].mxu0
        %2096 = vmatprep.mubr.bf16.mxu0 0
        %2097 = vmatmul.mubr.bf16.gmra.mrb[0].mxu0 %v1341
        %v2098 = vpop.f32.mrb[0].mxu0
        %v2099 = vadd.f32 %v1395, %v2098
        %v2100 = vpop.f32.mrb[0].mxu0
        %v2101 = vpop.f32.mrb[0].mxu0
        %v2102 = vadd.f32 %v1395, %v2101
        %v2103 = vpop.f32.mrb[0].mxu0
        %2104 = vmatprep.mubr.bf16.mxu0 0
        %2105 = vmatmul.mubr.bf16.gmra.mrb[0].mxu0 %v1342
        %v2106 = vpop.f32.mrb[0].mxu0
        %v2107 = vadd.f32 %v1395, %v2106
        %v2108 = vpop.f32.mrb[0].mxu0
        %v2109 = vpop.f32.mrb[0].mxu0
        %v2110 = vadd.f32 %v1395, %v2109
        %v2111 = vpop.f32.mrb[0].mxu0
        %2112 = vmatprep.mubr.bf16.mxu0 0
        %2113 = vmatmul.mubr.bf16.gmra.mrb[0].mxu0 %v1343
        %v2114 = vpop.f32.mrb[0].mxu0
        %v2115 = vadd.f32 %v1395, %v2114
        %v2116 = vpop.f32.mrb[0].mxu0
        %v2117 = vpop.f32.mrb[0].mxu0
        %v2118 = vadd.f32 %v1395, %v2117
        %v2119 = vpop.f32.mrb[0].mxu0
        %2120 = vmatprep.mubr.bf16.mxu0 0
        %2121 = vmatmul.mubr.bf16.gmra.mrb[0].mxu0 %v1344
        %v2122 = vpop.f32.mrb[0].mxu0
        %v2123 = vadd.f32 %v1395, %v2122
        %v2124 = vpop.f32.mrb[0].mxu0
        %v2125 = vpop.f32.mrb[0].mxu0
        %v2126 = vadd.f32 %v1395, %v2125
        %v2127 = vpop.f32.mrb[0].mxu0
        %2128 = vmatprep.mubr.bf16.mxu0 0
        %2129 = vmatmul.mubr.bf16.gmra.mrb[0].mxu0 %v1345
        %v2130 = vpop.f32.mrb[0].mxu0
        %v2131 = vadd.f32 %v1395, %v2130
        %v2132 = vpop.f32.mrb[0].mxu0
        %v2133 = vpop.f32.mrb[0].mxu0
        %v2134 = vadd.f32 %v1395, %v2133
        %v2135 = vpop.f32.mrb[0].mxu0
        %2136 = vmatprep.mubr.bf16.mxu0 0
        %2137 = vmatmul.mubr.bf16.gmra.mrb[0].mxu0 %v1346
        %v2138 = vpop.f32.mrb[0].mxu0
        %v2139 = vadd.f32 %v1395, %v2138
        %v2140 = vpop.f32.mrb[0].mxu0
        %v2141 = vpop.f32.mrb[0].mxu0
        %v2142 = vadd.f32 %v1395, %v2141
        %v2143 = vpop.f32.mrb[0].mxu0
        %2144 = vmatprep.mubr.bf16.mxu0 0
        %2145 = vmatmul.mubr.bf16.gmra.mrb[0].mxu0 %v1347
        %v2146 = vpop.f32.mrb[0].mxu0
        %v2147 = vadd.f32 %v1395, %v2146
        %v2148 = vpop.f32.mrb[0].mxu0
        %v2149 = vpop.f32.mrb[0].mxu0
        %v2150 = vadd.f32 %v1395, %v2149
        %v2151 = vpop.f32.mrb[0].mxu0
        %2152 = vmatprep.mubr.bf16.mxu0 0
        %2153 = vmatmul.mubr.bf16.gmra.mrb[0].mxu0 %v1348
        %v2154 = vpop.f32.mrb[0].mxu0
        %v2155 = vadd.f32 %v1395, %v2154
        %v2156 = vpop.f32.mrb[0].mxu0
        %v2157 = vpop.f32.mrb[0].mxu0
        %v2158 = vadd.f32 %v1395, %v2157
        %v2159 = vpop.f32.mrb[0].mxu0
        %2160 = vmatprep.mubr.bf16.mxu0 0
        %2161 = vmatmul.mubr.bf16.gmra.mrb[0].mxu0 %v1349
        %v2162 = vpop.f32.mrb[0].mxu0
        %v2163 = vadd.f32 %v1395, %v2162
        %v2164 = vpop.f32.mrb[0].mxu0
        %v2165 = vpop.f32.mrb[0].mxu0
        %v2166 = vadd.f32 %v1395, %v2165
        %v2167 = vpop.f32.mrb[0].mxu0
        %2168 = vdwg.mxu0
        %v2169 = vpack.c.bf16 %v1566, %v1562
        %v2170 = vpack.c.bf16 %v1576, %v1572
        %v2171 = vpack.c.bf16 %v1586, %v1582
        %v2172 = vpack.c.bf16 %v1596, %v1592
        %v2173 = vpack.c.bf16 %v1606, %v1602
        %v2174 = vpack.c.bf16 %v1616, %v1612
        %v2175 = vpack.c.bf16 %v1626, %v1622
        %v2176 = vpack.c.bf16 %v1636, %v1632
        %v2177 = vpack.c.bf16 %v1646, %v1642
        %v2178 = vpack.c.bf16 %v1656, %v1652
        %v2179 = vpack.c.bf16 %v1666, %v1662
        %v2180 = vpack.c.bf16 %v1676, %v1672
        %v2181 = vpack.c.bf16 %v1686, %v1682
        %v2182 = vpack.c.bf16 %v1696, %v1692
        %v2183 = vpack.c.bf16 %v1706, %v1702
        %v2184 = vpack.c.bf16 %v1716, %v1712
        %v2185 = vpack.c.bf16 %v1726, %v1722
        %v2186 = vpack.c.bf16 %v1736, %v1732
        %v2187 = vpack.c.bf16 %v1746, %v1742
        %v2188 = vpack.c.bf16 %v1756, %v1752
        %v2189 = vpack.c.bf16 %v1766, %v1762
        %v2190 = vpack.c.bf16 %v1776, %v1772
        %v2191 = vpack.c.bf16 %v1786, %v1782
        %v2192 = vpack.c.bf16 %v1796, %v1792
        %v2193 = vpack.c.bf16 %v1806, %v1802
        %v2194 = vpack.c.bf16 %v1816, %v1812
        %v2195 = vpack.c.bf16 %v1826, %v1822
        %v2196 = vpack.c.bf16 %v1836, %v1832
        %v2197 = vpack.c.bf16 %v1846, %v1842
        %v2198 = vpack.c.bf16 %v1856, %v1852
        %v2199 = vpack.c.bf16 %v1866, %v1862
        %v2200 = vpack.c.bf16 %v1876, %v1872
        %v2201 = vpack.c.bf16 %v1568, %v1564
        %v2202 = vpack.c.bf16 %v1578, %v1574
        %v2203 = vpack.c.bf16 %v1588, %v1584
        %v2204 = vpack.c.bf16 %v1598, %v1594
        %v2205 = vpack.c.bf16 %v1608, %v1604
        %v2206 = vpack.c.bf16 %v1618, %v1614
        %v2207 = vpack.c.bf16 %v1628, %v1624
        %v2208 = vpack.c.bf16 %v1638, %v1634
        %v2209 = vpack.c.bf16 %v1648, %v1644
        %v2210 = vpack.c.bf16 %v1658, %v1654
        %v2211 = vpack.c.bf16 %v1668, %v1664
        %v2212 = vpack.c.bf16 %v1678, %v1674
        %v2213 = vpack.c.bf16 %v1688, %v1684
        %v2214 = vpack.c.bf16 %v1698, %v1694
        %v2215 = vpack.c.bf16 %v1708, %v1704
        %v2216 = vpack.c.bf16 %v1718, %v1714
        %v2217 = vpack.c.bf16 %v1728, %v1724
        %v2218 = vpack.c.bf16 %v1738, %v1734
        %v2219 = vpack.c.bf16 %v1748, %v1744
        %v2220 = vpack.c.bf16 %v1758, %v1754
        %v2221 = vpack.c.bf16 %v1768, %v1764
        %v2222 = vpack.c.bf16 %v1778, %v1774
        %v2223 = vpack.c.bf16 %v1788, %v1784
        %v2224 = vpack.c.bf16 %v1798, %v1794
        %v2225 = vpack.c.bf16 %v1808, %v1804
        %v2226 = vpack.c.bf16 %v1818, %v1814
        %v2227 = vpack.c.bf16 %v1828, %v1824
        %v2228 = vpack.c.bf16 %v1838, %v1834
        %v2229 = vpack.c.bf16 %v1848, %v1844
        %v2230 = vpack.c.bf16 %v1858, %v1854
        %v2231 = vpack.c.bf16 %v1868, %v1864
        %v2232 = vpack.c.bf16 %v1878, %v1874
        %v2233 = vpack.c.bf16 %v1918, %v1915
        %v2234 = vpack.c.bf16 %v1926, %v1923
        %v2235 = vpack.c.bf16 %v1934, %v1931
        %v2236 = vpack.c.bf16 %v1942, %v1939
        %v2237 = vpack.c.bf16 %v1950, %v1947
        %v2238 = vpack.c.bf16 %v1958, %v1955
        %v2239 = vpack.c.bf16 %v1966, %v1963
        %v2240 = vpack.c.bf16 %v1974, %v1971
        %v2241 = vpack.c.bf16 %v1982, %v1979
        %v2242 = vpack.c.bf16 %v1990, %v1987
        %v2243 = vpack.c.bf16 %v1998, %v1995
        %v2244 = vpack.c.bf16 %v2006, %v2003
        %v2245 = vpack.c.bf16 %v2014, %v2011
        %v2246 = vpack.c.bf16 %v2022, %v2019
        %v2247 = vpack.c.bf16 %v2030, %v2027
        %v2248 = vpack.c.bf16 %v2038, %v2035
        %v2249 = vpack.c.bf16 %v2046, %v2043
        %v2250 = vpack.c.bf16 %v2054, %v2051
        %v2251 = vpack.c.bf16 %v2062, %v2059
        %v2252 = vpack.c.bf16 %v2070, %v2067
        %v2253 = vpack.c.bf16 %v2078, %v2075
        %v2254 = vpack.c.bf16 %v2086, %v2083
        %v2255 = vpack.c.bf16 %v2094, %v2091
        %v2256 = vpack.c.bf16 %v2102, %v2099
        %v2257 = vpack.c.bf16 %v2110, %v2107
        %v2258 = vpack.c.bf16 %v2118, %v2115
        %v2259 = vpack.c.bf16 %v2126, %v2123
        %v2260 = vpack.c.bf16 %v2134, %v2131
        %v2261 = vpack.c.bf16 %v2142, %v2139
        %v2262 = vpack.c.bf16 %v2150, %v2147
        %v2263 = vpack.c.bf16 %v2158, %v2155
        %v2264 = vpack.c.bf16 %v2166, %v2163
        %2265 = vmatprep.subr.bf16.mxu0 0
        %2266 = vmatpush1.bf16.xpose.msra.mxu0 %v2201
        %2267 = vmatprep.subr.bf16.mxu0 0
        %2268 = vmatpush1.bf16.xpose.msra.mxu0 %v2202
        %2269 = vmatprep.subr.bf16.mxu0 0
        %2270 = vmatpush1.bf16.xpose.msra.mxu0 %v2203
        %2271 = vmatprep.subr.bf16.mxu0 0
        %2272 = vmatpush1.bf16.xpose.msra.mxu0 %v2204
        %2273 = vmatprep.subr.bf16.mxu0 0
        %2274 = vmatpush1.bf16.xpose.msra.mxu0 %v2205
        %2275 = vmatprep.subr.bf16.mxu0 0
        %2276 = vmatpush1.bf16.xpose.msra.mxu0 %v2206
        %2277 = vmatprep.subr.bf16.mxu0 0
        %2278 = vmatpush1.bf16.xpose.msra.mxu0 %v2207
        %2279 = vmatprep.subr.bf16.mxu0 0
        %2280 = vmatpush1.bf16.xpose.msra.mxu0 %v2208
        %2281 = vmatprep.subr.bf16.mxu0 0
        %2282 = vmatpush1.bf16.xpose.msra.mxu0 0
        %2283 = vmatprep.subr.bf16.mxu0 0
        %2284 = vmatpush1.bf16.xpose.msra.mxu0 0
        %2285 = vmatprep.subr.bf16.mxu0 0
        %2286 = vmatpush1.bf16.xpose.msra.mxu0 0
        %2287 = vmatprep.subr.bf16.mxu0 0
        %2288 = vmatpush1.bf16.xpose.msra.mxu0 0
        %2289 = vmatprep.subr.bf16.mxu0 0
        %2290 = vmatpush1.bf16.xpose.msra.mxu0 0
        %2291 = vmatprep.subr.bf16.mxu0 0
        %2292 = vmatpush1.bf16.xpose.msra.mxu0 0
        %2293 = vmatprep.subr.bf16.mxu0 0
        %2294 = vmatpush1.bf16.xpose.msra.mxu0 0
        %2295 = vmatprep.subr.bf16.mxu0 0
        %2296 = vmatpush1.bf16.xpose.msra.mxu0 0
        %2297 = vmatprep.mubr.bf16.mxu0 0
        %2298 = vmatmul.mubr.bf16.gmra.mrb[0].mxu0 %v2169
        %v2299 = vpop.f32.mrb[0].mxu0
        %v2300 = vadd.f32 0.0, %v2299
        %v2301 = vpop.f32.mrb[0].mxu0
        %v2302 = vpop.f32.mrb[0].mxu0
        %v2303 = vadd.f32 0.0, %v2302
        %v2304 = vpop.f32.mrb[0].mxu0
        %2305 = vmatprep.mubr.bf16.mxu0 0
        %2306 = vmatmul.mubr.bf16.gmra.mrb[0].mxu0 %v2170
        %v2307 = vpop.f32.mrb[0].mxu0
        %v2308 = vadd.f32 0.0, %v2307
        %v2309 = vpop.f32.mrb[0].mxu0
        %v2310 = vpop.f32.mrb[0].mxu0
        %v2311 = vadd.f32 0.0, %v2310
        %v2312 = vpop.f32.mrb[0].mxu0
        %2313 = vmatprep.mubr.bf16.mxu0 0
        %2314 = vmatmul.mubr.bf16.gmra.mrb[0].mxu0 %v2171
        %v2315 = vpop.f32.mrb[0].mxu0
        %v2316 = vadd.f32 0.0, %v2315
        %v2317 = vpop.f32.mrb[0].mxu0
        %v2318 = vpop.f32.mrb[0].mxu0
        %v2319 = vadd.f32 0.0, %v2318
        %v2320 = vpop.f32.mrb[0].mxu0
        %2321 = vmatprep.mubr.bf16.mxu0 0
        %2322 = vmatmul.mubr.bf16.gmra.mrb[0].mxu0 %v2172
        %v2323 = vpop.f32.mrb[0].mxu0
        %v2324 = vadd.f32 0.0, %v2323
        %v2325 = vpop.f32.mrb[0].mxu0
        %v2326 = vpop.f32.mrb[0].mxu0
        %v2327 = vadd.f32 0.0, %v2326
        %v2328 = vpop.f32.mrb[0].mxu0
        %2329 = vmatprep.mubr.bf16.mxu0 0
        %2330 = vmatmul.mubr.bf16.gmra.mrb[0].mxu0 %v2173
        %v2331 = vpop.f32.mrb[0].mxu0
        %v2332 = vadd.f32 0.0, %v2331
        %v2333 = vpop.f32.mrb[0].mxu0
        %v2334 = vpop.f32.mrb[0].mxu0
        %v2335 = vadd.f32 0.0, %v2334
        %v2336 = vpop.f32.mrb[0].mxu0
        %2337 = vmatprep.mubr.bf16.mxu0 0
        %2338 = vmatmul.mubr.bf16.gmra.mrb[0].mxu0 %v2174
        %v2339 = vpop.f32.mrb[0].mxu0
        %v2340 = vadd.f32 0.0, %v2339
        %v2341 = vpop.f32.mrb[0].mxu0
        %v2342 = vpop.f32.mrb[0].mxu0
        %v2343 = vadd.f32 0.0, %v2342
        %v2344 = vpop.f32.mrb[0].mxu0
        %2345 = vmatprep.mubr.bf16.mxu0 0
        %2346 = vmatmul.mubr.bf16.gmra.mrb[0].mxu0 %v2175
        %v2347 = vpop.f32.mrb[0].mxu0
        %v2348 = vadd.f32 0.0, %v2347
        %v2349 = vpop.f32.mrb[0].mxu0
        %v2350 = vpop.f32.mrb[0].mxu0
        %v2351 = vadd.f32 0.0, %v2350
        %v2352 = vpop.f32.mrb[0].mxu0
        %2353 = vmatprep.mubr.bf16.mxu0 0
        %2354 = vmatmul.mubr.bf16.gmra.mrb[0].mxu0 %v2176
        %v2355 = vpop.f32.mrb[0].mxu0
        %v2356 = vadd.f32 0.0, %v2355
        %v2357 = vpop.f32.mrb[0].mxu0
        %v2358 = vpop.f32.mrb[0].mxu0
        %v2359 = vadd.f32 0.0, %v2358
        %v2360 = vpop.f32.mrb[0].mxu0
        %2361 = vdwg.mxu0
        %2362 = vmatprep.subr.bf16.mxu0 0
        %2363 = vmatpush1.bf16.xpose.msra.mxu0 %v2209
        %2364 = vmatprep.subr.bf16.mxu0 0
        %2365 = vmatpush1.bf16.xpose.msra.mxu0 %v2210
        %2366 = vmatprep.subr.bf16.mxu0 0
        %2367 = vmatpush1.bf16.xpose.msra.mxu0 %v2211
        %2368 = vmatprep.subr.bf16.mxu0 0
        %2369 = vmatpush1.bf16.xpose.msra.mxu0 %v2212
        %2370 = vmatprep.subr.bf16.mxu0 0
        %2371 = vmatpush1.bf16.xpose.msra.mxu0 %v2213
        %2372 = vmatprep.subr.bf16.mxu0 0
        %2373 = vmatpush1.bf16.xpose.msra.mxu0 %v2214
        %2374 = vmatprep.subr.bf16.mxu0 0
        %2375 = vmatpush1.bf16.xpose.msra.mxu0 %v2215
        %2376 = vmatprep.subr.bf16.mxu0 0
        %2377 = vmatpush1.bf16.xpose.msra.mxu0 %v2216
        %2378 = vmatprep.subr.bf16.mxu0 0
        %2379 = vmatpush1.bf16.xpose.msra.mxu0 0
        %2380 = vmatprep.subr.bf16.mxu0 0
        %2381 = vmatpush1.bf16.xpose.msra.mxu0 0
        %2382 = vmatprep.subr.bf16.mxu0 0
        %2383 = vmatpush1.bf16.xpose.msra.mxu0 0
        %2384 = vmatprep.subr.bf16.mxu0 0
        %2385 = vmatpush1.bf16.xpose.msra.mxu0 0
        %2386 = vmatprep.subr.bf16.mxu0 0
        %2387 = vmatpush1.bf16.xpose.msra.mxu0 0
        %2388 = vmatprep.subr.bf16.mxu0 0
        %2389 = vmatpush1.bf16.xpose.msra.mxu0 0
        %2390 = vmatprep.subr.bf16.mxu0 0
        %2391 = vmatpush1.bf16.xpose.msra.mxu0 0
        %2392 = vmatprep.subr.bf16.mxu0 0
        %2393 = vmatpush1.bf16.xpose.msra.mxu0 0
        %2394 = vmatprep.mubr.bf16.mxu0 0
        %2395 = vmatmul.mubr.bf16.gmra.mrb[0].mxu0 %v2177
        %v2396 = vpop.f32.mrb[0].mxu0
        %v2397 = vadd.f32 0.0, %v2396
        %v2398 = vpop.f32.mrb[0].mxu0
        %v2399 = vpop.f32.mrb[0].mxu0
        %v2400 = vadd.f32 0.0, %v2399
        %v2401 = vpop.f32.mrb[0].mxu0
        %2402 = vmatprep.mubr.bf16.mxu0 0
        %2403 = vmatmul.mubr.bf16.gmra.mrb[0].mxu0 %v2178
        %v2404 = vpop.f32.mrb[0].mxu0
        %v2405 = vadd.f32 0.0, %v2404
        %v2406 = vpop.f32.mrb[0].mxu0
        %v2407 = vpop.f32.mrb[0].mxu0
        %v2408 = vadd.f32 0.0, %v2407
        %v2409 = vpop.f32.mrb[0].mxu0
        %2410 = vmatprep.mubr.bf16.mxu0 0
        %2411 = vmatmul.mubr.bf16.gmra.mrb[0].mxu0 %v2179
        %v2412 = vpop.f32.mrb[0].mxu0
        %v2413 = vadd.f32 0.0, %v2412
        %v2414 = vpop.f32.mrb[0].mxu0
        %v2415 = vpop.f32.mrb[0].mxu0
        %v2416 = vadd.f32 0.0, %v2415
        %v2417 = vpop.f32.mrb[0].mxu0
        %2418 = vmatprep.mubr.bf16.mxu0 0
        %2419 = vmatmul.mubr.bf16.gmra.mrb[0].mxu0 %v2180
        %v2420 = vpop.f32.mrb[0].mxu0
        %v2421 = vadd.f32 0.0, %v2420
        %v2422 = vpop.f32.mrb[0].mxu0
        %v2423 = vpop.f32.mrb[0].mxu0
        %v2424 = vadd.f32 0.0, %v2423
        %v2425 = vpop.f32.mrb[0].mxu0
        %2426 = vmatprep.mubr.bf16.mxu0 0
        %2427 = vmatmul.mubr.bf16.gmra.mrb[0].mxu0 %v2181
        %v2428 = vpop.f32.mrb[0].mxu0
        %v2429 = vadd.f32 0.0, %v2428
        %v2430 = vpop.f32.mrb[0].mxu0
        %v2431 = vpop.f32.mrb[0].mxu0
        %v2432 = vadd.f32 0.0, %v2431
        %v2433 = vpop.f32.mrb[0].mxu0
        %2434 = vmatprep.mubr.bf16.mxu0 0
        %2435 = vmatmul.mubr.bf16.gmra.mrb[0].mxu0 %v2182
        %v2436 = vpop.f32.mrb[0].mxu0
        %v2437 = vadd.f32 0.0, %v2436
        %v2438 = vpop.f32.mrb[0].mxu0
        %v2439 = vpop.f32.mrb[0].mxu0
        %v2440 = vadd.f32 0.0, %v2439
        %v2441 = vpop.f32.mrb[0].mxu0
        %2442 = vmatprep.mubr.bf16.mxu0 0
        %2443 = vmatmul.mubr.bf16.gmra.mrb[0].mxu0 %v2183
        %v2444 = vpop.f32.mrb[0].mxu0
        %v2445 = vadd.f32 0.0, %v2444
        %v2446 = vpop.f32.mrb[0].mxu0
        %v2447 = vpop.f32.mrb[0].mxu0
        %v2448 = vadd.f32 0.0, %v2447
        %v2449 = vpop.f32.mrb[0].mxu0
        %2450 = vmatprep.mubr.bf16.mxu0 0
        %2451 = vmatmul.mubr.bf16.gmra.mrb[0].mxu0 %v2184
        %v2452 = vpop.f32.mrb[0].mxu0
        %v2453 = vadd.f32 0.0, %v2452
        %v2454 = vpop.f32.mrb[0].mxu0
        %v2455 = vpop.f32.mrb[0].mxu0
        %v2456 = vadd.f32 0.0, %v2455
        %v2457 = vpop.f32.mrb[0].mxu0
        %2458 = vdwg.mxu0
        %2459 = vmatprep.subr.bf16.mxu0 0
        %2460 = vmatpush1.bf16.xpose.msra.mxu0 %v2217
        %2461 = vmatprep.subr.bf16.mxu0 0
        %2462 = vmatpush1.bf16.xpose.msra.mxu0 %v2218
        %2463 = vmatprep.subr.bf16.mxu0 0
        %2464 = vmatpush1.bf16.xpose.msra.mxu0 %v2219
        %2465 = vmatprep.subr.bf16.mxu0 0
        %2466 = vmatpush1.bf16.xpose.msra.mxu0 %v2220
        %2467 = vmatprep.subr.bf16.mxu0 0
        %2468 = vmatpush1.bf16.xpose.msra.mxu0 %v2221
        %2469 = vmatprep.subr.bf16.mxu0 0
        %2470 = vmatpush1.bf16.xpose.msra.mxu0 %v2222
        %2471 = vmatprep.subr.bf16.mxu0 0
        %2472 = vmatpush1.bf16.xpose.msra.mxu0 %v2223
        %2473 = vmatprep.subr.bf16.mxu0 0
        %2474 = vmatpush1.bf16.xpose.msra.mxu0 %v2224
        %2475 = vmatprep.subr.bf16.mxu0 0
        %2476 = vmatpush1.bf16.xpose.msra.mxu0 0
        %2477 = vmatprep.subr.bf16.mxu0 0
        %2478 = vmatpush1.bf16.xpose.msra.mxu0 0
        %2479 = vmatprep.subr.bf16.mxu0 0
        %2480 = vmatpush1.bf16.xpose.msra.mxu0 0
        %2481 = vmatprep.subr.bf16.mxu0 0
        %2482 = vmatpush1.bf16.xpose.msra.mxu0 0
        %2483 = vmatprep.subr.bf16.mxu0 0
        %2484 = vmatpush1.bf16.xpose.msra.mxu0 0
        %2485 = vmatprep.subr.bf16.mxu0 0
        %2486 = vmatpush1.bf16.xpose.msra.mxu0 0
        %2487 = vmatprep.subr.bf16.mxu0 0
        %2488 = vmatpush1.bf16.xpose.msra.mxu0 0
        %2489 = vmatprep.subr.bf16.mxu0 0
        %2490 = vmatpush1.bf16.xpose.msra.mxu0 0
        %2491 = vmatprep.mubr.bf16.mxu0 0
        %2492 = vmatmul.mubr.bf16.gmra.mrb[0].mxu0 %v2185
        %v2493 = vpop.f32.mrb[0].mxu0
        %v2494 = vadd.f32 0.0, %v2493
        %v2495 = vpop.f32.mrb[0].mxu0
        %v2496 = vpop.f32.mrb[0].mxu0
        %v2497 = vadd.f32 0.0, %v2496
        %v2498 = vpop.f32.mrb[0].mxu0
        %2499 = vmatprep.mubr.bf16.mxu0 0
        %2500 = vmatmul.mubr.bf16.gmra.mrb[0].mxu0 %v2186
        %v2501 = vpop.f32.mrb[0].mxu0
        %v2502 = vadd.f32 0.0, %v2501
        %v2503 = vpop.f32.mrb[0].mxu0
        %v2504 = vpop.f32.mrb[0].mxu0
        %v2505 = vadd.f32 0.0, %v2504
        %v2506 = vpop.f32.mrb[0].mxu0
        %2507 = vmatprep.mubr.bf16.mxu0 0
        %2508 = vmatmul.mubr.bf16.gmra.mrb[0].mxu0 %v2187
        %v2509 = vpop.f32.mrb[0].mxu0
        %v2510 = vadd.f32 0.0, %v2509
        %v2511 = vpop.f32.mrb[0].mxu0
        %v2512 = vpop.f32.mrb[0].mxu0
        %v2513 = vadd.f32 0.0, %v2512
        %v2514 = vpop.f32.mrb[0].mxu0
        %2515 = vmatprep.mubr.bf16.mxu0 0
        %2516 = vmatmul.mubr.bf16.gmra.mrb[0].mxu0 %v2188
        %v2517 = vpop.f32.mrb[0].mxu0
        %v2518 = vadd.f32 0.0, %v2517
        %v2519 = vpop.f32.mrb[0].mxu0
        %v2520 = vpop.f32.mrb[0].mxu0
        %v2521 = vadd.f32 0.0, %v2520
        %v2522 = vpop.f32.mrb[0].mxu0
        %2523 = vmatprep.mubr.bf16.mxu0 0
        %2524 = vmatmul.mubr.bf16.gmra.mrb[0].mxu0 %v2189
        %v2525 = vpop.f32.mrb[0].mxu0
        %v2526 = vadd.f32 0.0, %v2525
        %v2527 = vpop.f32.mrb[0].mxu0
        %v2528 = vpop.f32.mrb[0].mxu0
        %v2529 = vadd.f32 0.0, %v2528
        %v2530 = vpop.f32.mrb[0].mxu0
        %2531 = vmatprep.mubr.bf16.mxu0 0
        %2532 = vmatmul.mubr.bf16.gmra.mrb[0].mxu0 %v2190
        %v2533 = vpop.f32.mrb[0].mxu0
        %v2534 = vadd.f32 0.0, %v2533
        %v2535 = vpop.f32.mrb[0].mxu0
        %v2536 = vpop.f32.mrb[0].mxu0
        %v2537 = vadd.f32 0.0, %v2536
        %v2538 = vpop.f32.mrb[0].mxu0
        %2539 = vmatprep.mubr.bf16.mxu0 0
        %2540 = vmatmul.mubr.bf16.gmra.mrb[0].mxu0 %v2191
        %v2541 = vpop.f32.mrb[0].mxu0
        %v2542 = vadd.f32 0.0, %v2541
        %v2543 = vpop.f32.mrb[0].mxu0
        %v2544 = vpop.f32.mrb[0].mxu0
        %v2545 = vadd.f32 0.0, %v2544
        %v2546 = vpop.f32.mrb[0].mxu0
        %2547 = vmatprep.mubr.bf16.mxu0 0
        %2548 = vmatmul.mubr.bf16.gmra.mrb[0].mxu0 %v2192
        %v2549 = vpop.f32.mrb[0].mxu0
        %v2550 = vadd.f32 0.0, %v2549
        %v2551 = vpop.f32.mrb[0].mxu0
        %v2552 = vpop.f32.mrb[0].mxu0
        %v2553 = vadd.f32 0.0, %v2552
        %v2554 = vpop.f32.mrb[0].mxu0
        %2555 = vdwg.mxu0
        %2556 = vmatprep.subr.bf16.mxu0 0
        %2557 = vmatpush1.bf16.xpose.msra.mxu0 %v2225
        %2558 = vmatprep.subr.bf16.mxu0 0
        %2559 = vmatpush1.bf16.xpose.msra.mxu0 %v2226
        %2560 = vmatprep.subr.bf16.mxu0 0
        %2561 = vmatpush1.bf16.xpose.msra.mxu0 %v2227
        %2562 = vmatprep.subr.bf16.mxu0 0
        %2563 = vmatpush1.bf16.xpose.msra.mxu0 %v2228
        %2564 = vmatprep.subr.bf16.mxu0 0
        %2565 = vmatpush1.bf16.xpose.msra.mxu0 %v2229
        %2566 = vmatprep.subr.bf16.mxu0 0
        %2567 = vmatpush1.bf16.xpose.msra.mxu0 %v2230
        %2568 = vmatprep.subr.bf16.mxu0 0
        %2569 = vmatpush1.bf16.xpose.msra.mxu0 %v2231
        %2570 = vmatprep.subr.bf16.mxu0 0
        %2571 = vmatpush1.bf16.xpose.msra.mxu0 %v2232
        %2572 = vmatprep.subr.bf16.mxu0 0
        %2573 = vmatpush1.bf16.xpose.msra.mxu0 0
        %2574 = vmatprep.subr.bf16.mxu0 0
        %2575 = vmatpush1.bf16.xpose.msra.mxu0 0
        %2576 = vmatprep.subr.bf16.mxu0 0
        %2577 = vmatpush1.bf16.xpose.msra.mxu0 0
        %2578 = vmatprep.subr.bf16.mxu0 0
        %2579 = vmatpush1.bf16.xpose.msra.mxu0 0
        %2580 = vmatprep.subr.bf16.mxu0 0
        %2581 = vmatpush1.bf16.xpose.msra.mxu0 0
        %2582 = vmatprep.subr.bf16.mxu0 0
        %2583 = vmatpush1.bf16.xpose.msra.mxu0 0
        %2584 = vmatprep.subr.bf16.mxu0 0
        %2585 = vmatpush1.bf16.xpose.msra.mxu0 0
        %2586 = vmatprep.subr.bf16.mxu0 0
        %2587 = vmatpush1.bf16.xpose.msra.mxu0 0
        %2588 = vmatprep.mubr.bf16.mxu0 0
        %2589 = vmatmul.mubr.bf16.gmra.mrb[0].mxu0 %v2193
        %v2590 = vpop.f32.mrb[0].mxu0
        %v2591 = vadd.f32 0.0, %v2590
        %v2592 = vpop.f32.mrb[0].mxu0
        %v2593 = vpop.f32.mrb[0].mxu0
        %v2594 = vadd.f32 0.0, %v2593
        %v2595 = vpop.f32.mrb[0].mxu0
        %2596 = vmatprep.mubr.bf16.mxu0 0
        %2597 = vmatmul.mubr.bf16.gmra.mrb[0].mxu0 %v2194
        %v2598 = vpop.f32.mrb[0].mxu0
        %v2599 = vadd.f32 0.0, %v2598
        %v2600 = vpop.f32.mrb[0].mxu0
        %v2601 = vpop.f32.mrb[0].mxu0
        %v2602 = vadd.f32 0.0, %v2601
        %v2603 = vpop.f32.mrb[0].mxu0
        %2604 = vmatprep.mubr.bf16.mxu0 0
        %2605 = vmatmul.mubr.bf16.gmra.mrb[0].mxu0 %v2195
        %v2606 = vpop.f32.mrb[0].mxu0
        %v2607 = vadd.f32 0.0, %v2606
        %v2608 = vpop.f32.mrb[0].mxu0
        %v2609 = vpop.f32.mrb[0].mxu0
        %v2610 = vadd.f32 0.0, %v2609
        %v2611 = vpop.f32.mrb[0].mxu0
        %2612 = vmatprep.mubr.bf16.mxu0 0
        %2613 = vmatmul.mubr.bf16.gmra.mrb[0].mxu0 %v2196
        %v2614 = vpop.f32.mrb[0].mxu0
        %v2615 = vadd.f32 0.0, %v2614
        %v2616 = vpop.f32.mrb[0].mxu0
        %v2617 = vpop.f32.mrb[0].mxu0
        %v2618 = vadd.f32 0.0, %v2617
        %v2619 = vpop.f32.mrb[0].mxu0
        %2620 = vmatprep.mubr.bf16.mxu0 0
        %2621 = vmatmul.mubr.bf16.gmra.mrb[0].mxu0 %v2197
        %v2622 = vpop.f32.mrb[0].mxu0
        %v2623 = vadd.f32 0.0, %v2622
        %v2624 = vpop.f32.mrb[0].mxu0
        %v2625 = vpop.f32.mrb[0].mxu0
        %v2626 = vadd.f32 0.0, %v2625
        %v2627 = vpop.f32.mrb[0].mxu0
        %2628 = vmatprep.mubr.bf16.mxu0 0
        %2629 = vmatmul.mubr.bf16.gmra.mrb[0].mxu0 %v2198
        %v2630 = vpop.f32.mrb[0].mxu0
        %v2631 = vadd.f32 0.0, %v2630
        %v2632 = vpop.f32.mrb[0].mxu0
        %v2633 = vpop.f32.mrb[0].mxu0
        %v2634 = vadd.f32 0.0, %v2633
        %v2635 = vpop.f32.mrb[0].mxu0
        %2636 = vmatprep.mubr.bf16.mxu0 0
        %2637 = vmatmul.mubr.bf16.gmra.mrb[0].mxu0 %v2199
        %v2638 = vpop.f32.mrb[0].mxu0
        %v2639 = vadd.f32 0.0, %v2638
        %v2640 = vpop.f32.mrb[0].mxu0
        %v2641 = vpop.f32.mrb[0].mxu0
        %v2642 = vadd.f32 0.0, %v2641
        %v2643 = vpop.f32.mrb[0].mxu0
        %2644 = vmatprep.mubr.bf16.mxu0 0
        %2645 = vmatmul.mubr.bf16.gmra.mrb[0].mxu0 %v2200
        %v2646 = vpop.f32.mrb[0].mxu0
        %v2647 = vadd.f32 0.0, %v2646
        %v2648 = vpop.f32.mrb[0].mxu0
        %v2649 = vpop.f32.mrb[0].mxu0
        %v2650 = vadd.f32 0.0, %v2649
        %v2651 = vpop.f32.mrb[0].mxu0
        %2652 = vdwg.mxu0
        %2653 = vmax.xlane.f32.xlu0 %v2300
        %v2654 = vpop.xlane.xlu0 %2653
        %2655 = vmax.xlane.f32.xlu0 %v2303
        %v2656 = vpop.xlane.xlu0 %2655
        %2657 = vmax.xlane.f32.xlu0 %v2308
        %v2658 = vpop.xlane.xlu0 %2657
        %2659 = vmax.xlane.f32.xlu0 %v2311
        %v2660 = vpop.xlane.xlu0 %2659
        %2661 = vmax.xlane.f32.xlu0 %v2316
        %v2662 = vpop.xlane.xlu0 %2661
        %2663 = vmax.xlane.f32.xlu0 %v2319
        %v2664 = vpop.xlane.xlu0 %2663
        %2665 = vmax.xlane.f32.xlu0 %v2324
        %v2666 = vpop.xlane.xlu0 %2665
        %2667 = vmax.xlane.f32.xlu0 %v2327
        %v2668 = vpop.xlane.xlu0 %2667
        %2669 = vmax.xlane.f32.xlu0 %v2332
        %v2670 = vpop.xlane.xlu0 %2669
        %2671 = vmax.xlane.f32.xlu0 %v2335
        %v2672 = vpop.xlane.xlu0 %2671
        %2673 = vmax.xlane.f32.xlu0 %v2340
        %v2674 = vpop.xlane.xlu0 %2673
        %2675 = vmax.xlane.f32.xlu0 %v2343
        %v2676 = vpop.xlane.xlu0 %2675
        %2677 = vmax.xlane.f32.xlu0 %v2348
        %v2678 = vpop.xlane.xlu0 %2677
        %2679 = vmax.xlane.f32.xlu0 %v2351
        %v2680 = vpop.xlane.xlu0 %2679
        %2681 = vmax.xlane.f32.xlu0 %v2356
        %v2682 = vpop.xlane.xlu0 %2681
        %2683 = vmax.xlane.f32.xlu0 %v2359
        %v2684 = vpop.xlane.xlu0 %2683
        %2685 = vmax.xlane.f32.xlu0 %v2397
        %v2686 = vpop.xlane.xlu0 %2685
        %2687 = vmax.xlane.f32.xlu0 %v2400
        %v2688 = vpop.xlane.xlu0 %2687
        %2689 = vmax.xlane.f32.xlu0 %v2405
        %v2690 = vpop.xlane.xlu0 %2689
        %2691 = vmax.xlane.f32.xlu0 %v2408
        %v2692 = vpop.xlane.xlu0 %2691
        %2693 = vmax.xlane.f32.xlu0 %v2413
        %v2694 = vpop.xlane.xlu0 %2693
        %2695 = vmax.xlane.f32.xlu0 %v2416
        %v2696 = vpop.xlane.xlu0 %2695
        %2697 = vmax.xlane.f32.xlu0 %v2421
        %v2698 = vpop.xlane.xlu0 %2697
        %2699 = vmax.xlane.f32.xlu0 %v2424
        %v2700 = vpop.xlane.xlu0 %2699
        %2701 = vmax.xlane.f32.xlu0 %v2429
        %v2702 = vpop.xlane.xlu0 %2701
        %2703 = vmax.xlane.f32.xlu0 %v2432
        %v2704 = vpop.xlane.xlu0 %2703
        %2705 = vmax.xlane.f32.xlu0 %v2437
        %v2706 = vpop.xlane.xlu0 %2705
        %2707 = vmax.xlane.f32.xlu0 %v2440
        %v2708 = vpop.xlane.xlu0 %2707
        %2709 = vmax.xlane.f32.xlu0 %v2445
        %v2710 = vpop.xlane.xlu0 %2709
        %2711 = vmax.xlane.f32.xlu0 %v2448
        %v2712 = vpop.xlane.xlu0 %2711
        %2713 = vmax.xlane.f32.xlu0 %v2453
        %v2714 = vpop.xlane.xlu0 %2713
        %2715 = vmax.xlane.f32.xlu0 %v2456
        %v2716 = vpop.xlane.xlu0 %2715
        %2717 = vmax.xlane.f32.xlu0 %v2494
        %v2718 = vpop.xlane.xlu0 %2717
        %2719 = vmax.xlane.f32.xlu0 %v2497
        %v2720 = vpop.xlane.xlu0 %2719
        %2721 = vmax.xlane.f32.xlu0 %v2502
        %v2722 = vpop.xlane.xlu0 %2721
        %2723 = vmax.xlane.f32.xlu0 %v2505
        %v2724 = vpop.xlane.xlu0 %2723
        %2725 = vmax.xlane.f32.xlu0 %v2510
        %v2726 = vpop.xlane.xlu0 %2725
        %2727 = vmax.xlane.f32.xlu0 %v2513
        %v2728 = vpop.xlane.xlu0 %2727
        %2729 = vmax.xlane.f32.xlu0 %v2518
        %v2730 = vpop.xlane.xlu0 %2729
        %2731 = vmax.xlane.f32.xlu0 %v2521
        %v2732 = vpop.xlane.xlu0 %2731
        %2733 = vmax.xlane.f32.xlu0 %v2526
        %v2734 = vpop.xlane.xlu0 %2733
        %2735 = vmax.xlane.f32.xlu0 %v2529
        %v2736 = vpop.xlane.xlu0 %2735
        %2737 = vmax.xlane.f32.xlu0 %v2534
        %v2738 = vpop.xlane.xlu0 %2737
        %2739 = vmax.xlane.f32.xlu0 %v2537
        %v2740 = vpop.xlane.xlu0 %2739
        %2741 = vmax.xlane.f32.xlu0 %v2542
        %v2742 = vpop.xlane.xlu0 %2741
        %2743 = vmax.xlane.f32.xlu0 %v2545
        %v2744 = vpop.xlane.xlu0 %2743
        %2745 = vmax.xlane.f32.xlu0 %v2550
        %v2746 = vpop.xlane.xlu0 %2745
        %2747 = vmax.xlane.f32.xlu0 %v2553
        %v2748 = vpop.xlane.xlu0 %2747
        %2749 = vmax.xlane.f32.xlu0 %v2591
        %v2750 = vpop.xlane.xlu0 %2749
        %2751 = vmax.xlane.f32.xlu0 %v2594
        %v2752 = vpop.xlane.xlu0 %2751
        %2753 = vmax.xlane.f32.xlu0 %v2599
        %v2754 = vpop.xlane.xlu0 %2753
        %2755 = vmax.xlane.f32.xlu0 %v2602
        %v2756 = vpop.xlane.xlu0 %2755
        %2757 = vmax.xlane.f32.xlu0 %v2607
        %v2758 = vpop.xlane.xlu0 %2757
        %2759 = vmax.xlane.f32.xlu0 %v2610
        %v2760 = vpop.xlane.xlu0 %2759
        %2761 = vmax.xlane.f32.xlu0 %v2615
        %v2762 = vpop.xlane.xlu0 %2761
        %2763 = vmax.xlane.f32.xlu0 %v2618
        %v2764 = vpop.xlane.xlu0 %2763
        %2765 = vmax.xlane.f32.xlu0 %v2623
        %v2766 = vpop.xlane.xlu0 %2765
        %2767 = vmax.xlane.f32.xlu0 %v2626
        %v2768 = vpop.xlane.xlu0 %2767
        %2769 = vmax.xlane.f32.xlu0 %v2631
        %v2770 = vpop.xlane.xlu0 %2769
        %2771 = vmax.xlane.f32.xlu0 %v2634
        %v2772 = vpop.xlane.xlu0 %2771
        %2773 = vmax.xlane.f32.xlu0 %v2639
        %v2774 = vpop.xlane.xlu0 %2773
        %2775 = vmax.xlane.f32.xlu0 %v2642
        %v2776 = vpop.xlane.xlu0 %2775
        %2777 = vmax.xlane.f32.xlu0 %v2647
        %v2778 = vpop.xlane.xlu0 %2777
        %2779 = vmax.xlane.f32.xlu0 %v2650
        %v2780 = vpop.xlane.xlu0 %2779
        %v2781 = vsub.f32 %v2300, %v2654
        %v2782 = vsub.f32 %v2303, %v2656
        %v2783 = vsub.f32 %v2308, %v2658
        %v2784 = vsub.f32 %v2311, %v2660
        %v2785 = vsub.f32 %v2316, %v2662
        %v2786 = vsub.f32 %v2319, %v2664
        %v2787 = vsub.f32 %v2324, %v2666
        %v2788 = vsub.f32 %v2327, %v2668
        %v2789 = vsub.f32 %v2332, %v2670
        %v2790 = vsub.f32 %v2335, %v2672
        %v2791 = vsub.f32 %v2340, %v2674
        %v2792 = vsub.f32 %v2343, %v2676
        %v2793 = vsub.f32 %v2348, %v2678
        %v2794 = vsub.f32 %v2351, %v2680
        %v2795 = vsub.f32 %v2356, %v2682
        %v2796 = vsub.f32 %v2359, %v2684
        %v2797 = vsub.f32 %v2397, %v2686
        %v2798 = vsub.f32 %v2400, %v2688
        %v2799 = vsub.f32 %v2405, %v2690
        %v2800 = vsub.f32 %v2408, %v2692
        %v2801 = vsub.f32 %v2413, %v2694
        %v2802 = vsub.f32 %v2416, %v2696
        %v2803 = vsub.f32 %v2421, %v2698
        %v2804 = vsub.f32 %v2424, %v2700
        %v2805 = vsub.f32 %v2429, %v2702
        %v2806 = vsub.f32 %v2432, %v2704
        %v2807 = vsub.f32 %v2437, %v2706
        %v2808 = vsub.f32 %v2440, %v2708
        %v2809 = vsub.f32 %v2445, %v2710
        %v2810 = vsub.f32 %v2448, %v2712
        %v2811 = vsub.f32 %v2453, %v2714
        %v2812 = vsub.f32 %v2456, %v2716
        %v2813 = vsub.f32 %v2494, %v2718
        %v2814 = vsub.f32 %v2497, %v2720
        %v2815 = vsub.f32 %v2502, %v2722
        %v2816 = vsub.f32 %v2505, %v2724
        %v2817 = vsub.f32 %v2510, %v2726
        %v2818 = vsub.f32 %v2513, %v2728
        %v2819 = vsub.f32 %v2518, %v2730
        %v2820 = vsub.f32 %v2521, %v2732
        %v2821 = vsub.f32 %v2526, %v2734
        %v2822 = vsub.f32 %v2529, %v2736
        %v2823 = vsub.f32 %v2534, %v2738
        %v2824 = vsub.f32 %v2537, %v2740
        %v2825 = vsub.f32 %v2542, %v2742
        %v2826 = vsub.f32 %v2545, %v2744
        %v2827 = vsub.f32 %v2550, %v2746
        %v2828 = vsub.f32 %v2553, %v2748
        %v2829 = vsub.f32 %v2591, %v2750
        %v2830 = vsub.f32 %v2594, %v2752
        %v2831 = vsub.f32 %v2599, %v2754
        %v2832 = vsub.f32 %v2602, %v2756
        %v2833 = vsub.f32 %v2607, %v2758
        %v2834 = vsub.f32 %v2610, %v2760
        %v2835 = vsub.f32 %v2615, %v2762
        %v2836 = vsub.f32 %v2618, %v2764
        %v2837 = vsub.f32 %v2623, %v2766
        %v2838 = vsub.f32 %v2626, %v2768
        %v2839 = vsub.f32 %v2631, %v2770
        %v2840 = vsub.f32 %v2634, %v2772
        %v2841 = vsub.f32 %v2639, %v2774
        %v2842 = vsub.f32 %v2642, %v2776
        %v2843 = vsub.f32 %v2647, %v2778
        %v2844 = vsub.f32 %v2650, %v2780
        %v2845 = vmul.f32 %v2781, 1.442695
        %v2846 = vpow.pop %v2845
        %v2847 = vmul.f32 %v2782, 1.442695
        %v2848 = vpow.pop %v2847
        %v2849 = vmul.f32 %v2783, 1.442695
        %v2850 = vpow.pop %v2849
        %v2851 = vmul.f32 %v2784, 1.442695
        %v2852 = vpow.pop %v2851
        %v2853 = vmul.f32 %v2785, 1.442695
        %v2854 = vpow.pop %v2853
        %v2855 = vmul.f32 %v2786, 1.442695
        %v2856 = vpow.pop %v2855
        %v2857 = vmul.f32 %v2787, 1.442695
        %v2858 = vpow.pop %v2857
        %v2859 = vmul.f32 %v2788, 1.442695
        %v2860 = vpow.pop %v2859
        %v2861 = vmul.f32 %v2789, 1.442695
        %v2862 = vpow.pop %v2861
        %v2863 = vmul.f32 %v2790, 1.442695
        %v2864 = vpow.pop %v2863
        %v2865 = vmul.f32 %v2791, 1.442695
        %v2866 = vpow.pop %v2865
        %v2867 = vmul.f32 %v2792, 1.442695
        %v2868 = vpow.pop %v2867
        %v2869 = vmul.f32 %v2793, 1.442695
        %v2870 = vpow.pop %v2869
        %v2871 = vmul.f32 %v2794, 1.442695
        %v2872 = vpow.pop %v2871
        %v2873 = vmul.f32 %v2795, 1.442695
        %v2874 = vpow.pop %v2873
        %v2875 = vmul.f32 %v2796, 1.442695
        %v2876 = vpow.pop %v2875
        %v2877 = vmul.f32 %v2797, 1.442695
        %v2878 = vpow.pop %v2877
        %v2879 = vmul.f32 %v2798, 1.442695
        %v2880 = vpow.pop %v2879
        %v2881 = vmul.f32 %v2799, 1.442695
        %v2882 = vpow.pop %v2881
        %v2883 = vmul.f32 %v2800, 1.442695
        %v2884 = vpow.pop %v2883
        %v2885 = vmul.f32 %v2801, 1.442695
        %v2886 = vpow.pop %v2885
        %v2887 = vmul.f32 %v2802, 1.442695
        %v2888 = vpow.pop %v2887
        %v2889 = vmul.f32 %v2803, 1.442695
        %v2890 = vpow.pop %v2889
        %v2891 = vmul.f32 %v2804, 1.442695
        %v2892 = vpow.pop %v2891
        %v2893 = vmul.f32 %v2805, 1.442695
        %v2894 = vpow.pop %v2893
        %v2895 = vmul.f32 %v2806, 1.442695
        %v2896 = vpow.pop %v2895
        %v2897 = vmul.f32 %v2807, 1.442695
        %v2898 = vpow.pop %v2897
        %v2899 = vmul.f32 %v2808, 1.442695
        %v2900 = vpow.pop %v2899
        %v2901 = vmul.f32 %v2809, 1.442695
        %v2902 = vpow.pop %v2901
        %v2903 = vmul.f32 %v2810, 1.442695
        %v2904 = vpow.pop %v2903
        %v2905 = vmul.f32 %v2811, 1.442695
        %v2906 = vpow.pop %v2905
        %v2907 = vmul.f32 %v2812, 1.442695
        %v2908 = vpow.pop %v2907
        %v2909 = vmul.f32 %v2813, 1.442695
        %v2910 = vpow.pop %v2909
        %v2911 = vmul.f32 %v2814, 1.442695
        %v2912 = vpow.pop %v2911
        %v2913 = vmul.f32 %v2815, 1.442695
        %v2914 = vpow.pop %v2913
        %v2915 = vmul.f32 %v2816, 1.442695
        %v2916 = vpow.pop %v2915
        %v2917 = vmul.f32 %v2817, 1.442695
        %v2918 = vpow.pop %v2917
        %v2919 = vmul.f32 %v2818, 1.442695
        %v2920 = vpow.pop %v2919
        %v2921 = vmul.f32 %v2819, 1.442695
        %v2922 = vpow.pop %v2921
        %v2923 = vmul.f32 %v2820, 1.442695
        %v2924 = vpow.pop %v2923
        %v2925 = vmul.f32 %v2821, 1.442695
        %v2926 = vpow.pop %v2925
        %v2927 = vmul.f32 %v2822, 1.442695
        %v2928 = vpow.pop %v2927
        %v2929 = vmul.f32 %v2823, 1.442695
        %v2930 = vpow.pop %v2929
        %v2931 = vmul.f32 %v2824, 1.442695
        %v2932 = vpow.pop %v2931
        %v2933 = vmul.f32 %v2825, 1.442695
        %v2934 = vpow.pop %v2933
        %v2935 = vmul.f32 %v2826, 1.442695
        %v2936 = vpow.pop %v2935
        %v2937 = vmul.f32 %v2827, 1.442695
        %v2938 = vpow.pop %v2937
        %v2939 = vmul.f32 %v2828, 1.442695
        %v2940 = vpow.pop %v2939
        %v2941 = vmul.f32 %v2829, 1.442695
        %v2942 = vpow.pop %v2941
        %v2943 = vmul.f32 %v2830, 1.442695
        %v2944 = vpow.pop %v2943
        %v2945 = vmul.f32 %v2831, 1.442695
        %v2946 = vpow.pop %v2945
        %v2947 = vmul.f32 %v2832, 1.442695
        %v2948 = vpow.pop %v2947
        %v2949 = vmul.f32 %v2833, 1.442695
        %v2950 = vpow.pop %v2949
        %v2951 = vmul.f32 %v2834, 1.442695
        %v2952 = vpow.pop %v2951
        %v2953 = vmul.f32 %v2835, 1.442695
        %v2954 = vpow.pop %v2953
        %v2955 = vmul.f32 %v2836, 1.442695
        %v2956 = vpow.pop %v2955
        %v2957 = vmul.f32 %v2837, 1.442695
        %v2958 = vpow.pop %v2957
        %v2959 = vmul.f32 %v2838, 1.442695
        %v2960 = vpow.pop %v2959
        %v2961 = vmul.f32 %v2839, 1.442695
        %v2962 = vpow.pop %v2961
        %v2963 = vmul.f32 %v2840, 1.442695
        %v2964 = vpow.pop %v2963
        %v2965 = vmul.f32 %v2841, 1.442695
        %v2966 = vpow.pop %v2965
        %v2967 = vmul.f32 %v2842, 1.442695
        %v2968 = vpow.pop %v2967
        %v2969 = vmul.f32 %v2843, 1.442695
        %v2970 = vpow.pop %v2969
        %v2971 = vmul.f32 %v2844, 1.442695
        %v2972 = vpow.pop %v2971
        %2973 = vadd.xlane.f32.xlu0 %v2846
        %v2974 = vpop.xlane.xlu0 %2973
        %2975 = vadd.xlane.f32.xlu0 %v2848
        %v2976 = vpop.xlane.xlu0 %2975
        %2977 = vadd.xlane.f32.xlu0 %v2850
        %v2978 = vpop.xlane.xlu0 %2977
        %2979 = vadd.xlane.f32.xlu0 %v2852
        %v2980 = vpop.xlane.xlu0 %2979
        %2981 = vadd.xlane.f32.xlu0 %v2854
        %v2982 = vpop.xlane.xlu0 %2981
        %2983 = vadd.xlane.f32.xlu0 %v2856
        %v2984 = vpop.xlane.xlu0 %2983
        %2985 = vadd.xlane.f32.xlu0 %v2858
        %v2986 = vpop.xlane.xlu0 %2985
        %2987 = vadd.xlane.f32.xlu0 %v2860
        %v2988 = vpop.xlane.xlu0 %2987
        %2989 = vadd.xlane.f32.xlu0 %v2862
        %v2990 = vpop.xlane.xlu0 %2989
        %2991 = vadd.xlane.f32.xlu0 %v2864
        %v2992 = vpop.xlane.xlu0 %2991
        %2993 = vadd.xlane.f32.xlu0 %v2866
        %v2994 = vpop.xlane.xlu0 %2993
        %2995 = vadd.xlane.f32.xlu0 %v2868
        %v2996 = vpop.xlane.xlu0 %2995
        %2997 = vadd.xlane.f32.xlu0 %v2870
        %v2998 = vpop.xlane.xlu0 %2997
        %2999 = vadd.xlane.f32.xlu0 %v2872
        %v3000 = vpop.xlane.xlu0 %2999
        %3001 = vadd.xlane.f32.xlu0 %v2874
        %v3002 = vpop.xlane.xlu0 %3001
        %3003 = vadd.xlane.f32.xlu0 %v2876
        %v3004 = vpop.xlane.xlu0 %3003
        %3005 = vadd.xlane.f32.xlu0 %v2878
        %v3006 = vpop.xlane.xlu0 %3005
        %3007 = vadd.xlane.f32.xlu0 %v2880
        %v3008 = vpop.xlane.xlu0 %3007
        %3009 = vadd.xlane.f32.xlu0 %v2882
        %v3010 = vpop.xlane.xlu0 %3009
        %3011 = vadd.xlane.f32.xlu0 %v2884
        %v3012 = vpop.xlane.xlu0 %3011
        %3013 = vadd.xlane.f32.xlu0 %v2886
        %v3014 = vpop.xlane.xlu0 %3013
        %3015 = vadd.xlane.f32.xlu0 %v2888
        %v3016 = vpop.xlane.xlu0 %3015
        %3017 = vadd.xlane.f32.xlu0 %v2890
        %v3018 = vpop.xlane.xlu0 %3017
        %3019 = vadd.xlane.f32.xlu0 %v2892
        %v3020 = vpop.xlane.xlu0 %3019
        %3021 = vadd.xlane.f32.xlu0 %v2894
        %v3022 = vpop.xlane.xlu0 %3021
        %3023 = vadd.xlane.f32.xlu0 %v2896
        %v3024 = vpop.xlane.xlu0 %3023
        %3025 = vadd.xlane.f32.xlu0 %v2898
        %v3026 = vpop.xlane.xlu0 %3025
        %3027 = vadd.xlane.f32.xlu0 %v2900
        %v3028 = vpop.xlane.xlu0 %3027
        %3029 = vadd.xlane.f32.xlu0 %v2902
        %v3030 = vpop.xlane.xlu0 %3029
        %3031 = vadd.xlane.f32.xlu0 %v2904
        %v3032 = vpop.xlane.xlu0 %3031
        %3033 = vadd.xlane.f32.xlu0 %v2906
        %v3034 = vpop.xlane.xlu0 %3033
        %3035 = vadd.xlane.f32.xlu0 %v2908
        %v3036 = vpop.xlane.xlu0 %3035
        %3037 = vadd.xlane.f32.xlu0 %v2910
        %v3038 = vpop.xlane.xlu0 %3037
        %3039 = vadd.xlane.f32.xlu0 %v2912
        %v3040 = vpop.xlane.xlu0 %3039
        %3041 = vadd.xlane.f32.xlu0 %v2914
        %v3042 = vpop.xlane.xlu0 %3041
        %3043 = vadd.xlane.f32.xlu0 %v2916
        %v3044 = vpop.xlane.xlu0 %3043
        %3045 = vadd.xlane.f32.xlu0 %v2918
        %v3046 = vpop.xlane.xlu0 %3045
        %3047 = vadd.xlane.f32.xlu0 %v2920
        %v3048 = vpop.xlane.xlu0 %3047
        %3049 = vadd.xlane.f32.xlu0 %v2922
        %v3050 = vpop.xlane.xlu0 %3049
        %3051 = vadd.xlane.f32.xlu0 %v2924
        %v3052 = vpop.xlane.xlu0 %3051
        %3053 = vadd.xlane.f32.xlu0 %v2926
        %v3054 = vpop.xlane.xlu0 %3053
        %3055 = vadd.xlane.f32.xlu0 %v2928
        %v3056 = vpop.xlane.xlu0 %3055
        %3057 = vadd.xlane.f32.xlu0 %v2930
        %v3058 = vpop.xlane.xlu0 %3057
        %3059 = vadd.xlane.f32.xlu0 %v2932
        %v3060 = vpop.xlane.xlu0 %3059
        %3061 = vadd.xlane.f32.xlu0 %v2934
        %v3062 = vpop.xlane.xlu0 %3061
        %3063 = vadd.xlane.f32.xlu0 %v2936
        %v3064 = vpop.xlane.xlu0 %3063
        %3065 = vadd.xlane.f32.xlu0 %v2938
        %v3066 = vpop.xlane.xlu0 %3065
        %3067 = vadd.xlane.f32.xlu0 %v2940
        %v3068 = vpop.xlane.xlu0 %3067
        %3069 = vadd.xlane.f32.xlu0 %v2942
        %v3070 = vpop.xlane.xlu0 %3069
        %3071 = vadd.xlane.f32.xlu0 %v2944
        %v3072 = vpop.xlane.xlu0 %3071
        %3073 = vadd.xlane.f32.xlu0 %v2946
        %v3074 = vpop.xlane.xlu0 %3073
        %3075 = vadd.xlane.f32.xlu0 %v2948
        %v3076 = vpop.xlane.xlu0 %3075
        %3077 = vadd.xlane.f32.xlu0 %v2950
        %v3078 = vpop.xlane.xlu0 %3077
        %3079 = vadd.xlane.f32.xlu0 %v2952
        %v3080 = vpop.xlane.xlu0 %3079
        %3081 = vadd.xlane.f32.xlu0 %v2954
        %v3082 = vpop.xlane.xlu0 %3081
        %3083 = vadd.xlane.f32.xlu0 %v2956
        %v3084 = vpop.xlane.xlu0 %3083
        %3085 = vadd.xlane.f32.xlu0 %v2958
        %v3086 = vpop.xlane.xlu0 %3085
        %3087 = vadd.xlane.f32.xlu0 %v2960
        %v3088 = vpop.xlane.xlu0 %3087
        %3089 = vadd.xlane.f32.xlu0 %v2962
        %v3090 = vpop.xlane.xlu0 %3089
        %3091 = vadd.xlane.f32.xlu0 %v2964
        %v3092 = vpop.xlane.xlu0 %3091
        %3093 = vadd.xlane.f32.xlu0 %v2966
        %v3094 = vpop.xlane.xlu0 %3093
        %3095 = vadd.xlane.f32.xlu0 %v2968
        %v3096 = vpop.xlane.xlu0 %3095
        %3097 = vadd.xlane.f32.xlu0 %v2970
        %v3098 = vpop.xlane.xlu0 %3097
        %3099 = vadd.xlane.f32.xlu0 %v2972
        %v3100 = vpop.xlane.xlu0 %3099
        %v3101 = vrcp.pop %v2974
        %v3102 = vrcp.pop %v2976
        %v3103 = vrcp.pop %v2978
        %v3104 = vrcp.pop %v2980
        %v3105 = vrcp.pop %v2982
        %v3106 = vrcp.pop %v2984
        %v3107 = vrcp.pop %v2986
        %v3108 = vrcp.pop %v2988
        %v3109 = vrcp.pop %v2990
        %v3110 = vrcp.pop %v2992
        %v3111 = vrcp.pop %v2994
        %v3112 = vrcp.pop %v2996
        %v3113 = vrcp.pop %v2998
        %v3114 = vrcp.pop %v3000
        %v3115 = vrcp.pop %v3002
        %v3116 = vrcp.pop %v3004
        %v3117 = vrcp.pop %v3006
        %v3118 = vrcp.pop %v3008
        %v3119 = vrcp.pop %v3010
        %v3120 = vrcp.pop %v3012
        %v3121 = vrcp.pop %v3014
        %v3122 = vrcp.pop %v3016
        %v3123 = vrcp.pop %v3018
        %v3124 = vrcp.pop %v3020
        %v3125 = vrcp.pop %v3022
        %v3126 = vrcp.pop %v3024
        %v3127 = vrcp.pop %v3026
        %v3128 = vrcp.pop %v3028
        %v3129 = vrcp.pop %v3030
        %v3130 = vrcp.pop %v3032
        %v3131 = vrcp.pop %v3034
        %v3132 = vrcp.pop %v3036
        %v3133 = vrcp.pop %v3038
        %v3134 = vrcp.pop %v3040
        %v3135 = vrcp.pop %v3042
        %v3136 = vrcp.pop %v3044
        %v3137 = vrcp.pop %v3046
        %v3138 = vrcp.pop %v3048
        %v3139 = vrcp.pop %v3050
        %v3140 = vrcp.pop %v3052
        %v3141 = vrcp.pop %v3054
        %v3142 = vrcp.pop %v3056
        %v3143 = vrcp.pop %v3058
        %v3144 = vrcp.pop %v3060
        %v3145 = vrcp.pop %v3062
        %v3146 = vrcp.pop %v3064
        %v3147 = vrcp.pop %v3066
        %v3148 = vrcp.pop %v3068
        %v3149 = vrcp.pop %v3070
        %v3150 = vrcp.pop %v3072
        %v3151 = vrcp.pop %v3074
        %v3152 = vrcp.pop %v3076
        %v3153 = vrcp.pop %v3078
        %v3154 = vrcp.pop %v3080
        %v3155 = vrcp.pop %v3082
        %v3156 = vrcp.pop %v3084
        %v3157 = vrcp.pop %v3086
        %v3158 = vrcp.pop %v3088
        %v3159 = vrcp.pop %v3090
        %v3160 = vrcp.pop %v3092
        %v3161 = vrcp.pop %v3094
        %v3162 = vrcp.pop %v3096
        %v3163 = vrcp.pop %v3098
        %v3164 = vrcp.pop %v3100
        %v3165 = vmul.f32 %v2846, %v3101
        %v3166 = vmul.f32 %v2848, %v3102
        %v3167 = vmul.f32 %v2850, %v3103
        %v3168 = vmul.f32 %v2852, %v3104
        %v3169 = vmul.f32 %v2854, %v3105
        %v3170 = vmul.f32 %v2856, %v3106
        %v3171 = vmul.f32 %v2858, %v3107
        %v3172 = vmul.f32 %v2860, %v3108
        %v3173 = vmul.f32 %v2862, %v3109
        %v3174 = vmul.f32 %v2864, %v3110
        %v3175 = vmul.f32 %v2866, %v3111
        %v3176 = vmul.f32 %v2868, %v3112
        %v3177 = vmul.f32 %v2870, %v3113
        %v3178 = vmul.f32 %v2872, %v3114
        %v3179 = vmul.f32 %v2874, %v3115
        %v3180 = vmul.f32 %v2876, %v3116
        %v3181 = vmul.f32 %v2878, %v3117
        %v3182 = vmul.f32 %v2880, %v3118
        %v3183 = vmul.f32 %v2882, %v3119
        %v3184 = vmul.f32 %v2884, %v3120
        %v3185 = vmul.f32 %v2886, %v3121
        %v3186 = vmul.f32 %v2888, %v3122
        %v3187 = vmul.f32 %v2890, %v3123
        %v3188 = vmul.f32 %v2892, %v3124
        %v3189 = vmul.f32 %v2894, %v3125
        %v3190 = vmul.f32 %v2896, %v3126
        %v3191 = vmul.f32 %v2898, %v3127
        %v3192 = vmul.f32 %v2900, %v3128
        %v3193 = vmul.f32 %v2902, %v3129
        %v3194 = vmul.f32 %v2904, %v3130
        %v3195 = vmul.f32 %v2906, %v3131
        %v3196 = vmul.f32 %v2908, %v3132
        %v3197 = vmul.f32 %v2910, %v3133
        %v3198 = vmul.f32 %v2912, %v3134
        %v3199 = vmul.f32 %v2914, %v3135
        %v3200 = vmul.f32 %v2916, %v3136
        %v3201 = vmul.f32 %v2918, %v3137
        %v3202 = vmul.f32 %v2920, %v3138
        %v3203 = vmul.f32 %v2922, %v3139
        %v3204 = vmul.f32 %v2924, %v3140
        %v3205 = vmul.f32 %v2926, %v3141
        %v3206 = vmul.f32 %v2928, %v3142
        %v3207 = vmul.f32 %v2930, %v3143
        %v3208 = vmul.f32 %v2932, %v3144
        %v3209 = vmul.f32 %v2934, %v3145
        %v3210 = vmul.f32 %v2936, %v3146
        %v3211 = vmul.f32 %v2938, %v3147
        %v3212 = vmul.f32 %v2940, %v3148
        %v3213 = vmul.f32 %v2942, %v3149
        %v3214 = vmul.f32 %v2944, %v3150
        %v3215 = vmul.f32 %v2946, %v3151
        %v3216 = vmul.f32 %v2948, %v3152
        %v3217 = vmul.f32 %v2950, %v3153
        %v3218 = vmul.f32 %v2952, %v3154
        %v3219 = vmul.f32 %v2954, %v3155
        %v3220 = vmul.f32 %v2956, %v3156
        %v3221 = vmul.f32 %v2958, %v3157
        %v3222 = vmul.f32 %v2960, %v3158
        %v3223 = vmul.f32 %v2962, %v3159
        %v3224 = vmul.f32 %v2964, %v3160
        %v3225 = vmul.f32 %v2966, %v3161
        %v3226 = vmul.f32 %v2968, %v3162
        %v3227 = vmul.f32 %v2970, %v3163
        %v3228 = vmul.f32 %v2972, %v3164
        %v3229 = vpack.c.bf16 %v3166, %v3165
        %v3230 = vpack.c.bf16 %v3168, %v3167
        %v3231 = vpack.c.bf16 %v3170, %v3169
        %v3232 = vpack.c.bf16 %v3172, %v3171
        %v3233 = vpack.c.bf16 %v3174, %v3173
        %v3234 = vpack.c.bf16 %v3176, %v3175
        %v3235 = vpack.c.bf16 %v3178, %v3177
        %v3236 = vpack.c.bf16 %v3180, %v3179
        %v3237 = vpack.c.bf16 %v3182, %v3181
        %v3238 = vpack.c.bf16 %v3184, %v3183
        %v3239 = vpack.c.bf16 %v3186, %v3185
        %v3240 = vpack.c.bf16 %v3188, %v3187
        %v3241 = vpack.c.bf16 %v3190, %v3189
        %v3242 = vpack.c.bf16 %v3192, %v3191
        %v3243 = vpack.c.bf16 %v3194, %v3193
        %v3244 = vpack.c.bf16 %v3196, %v3195
        %v3245 = vpack.c.bf16 %v3198, %v3197
        %v3246 = vpack.c.bf16 %v3200, %v3199
        %v3247 = vpack.c.bf16 %v3202, %v3201
        %v3248 = vpack.c.bf16 %v3204, %v3203
        %v3249 = vpack.c.bf16 %v3206, %v3205
        %v3250 = vpack.c.bf16 %v3208, %v3207
        %v3251 = vpack.c.bf16 %v3210, %v3209
        %v3252 = vpack.c.bf16 %v3212, %v3211
        %v3253 = vpack.c.bf16 %v3214, %v3213
        %v3254 = vpack.c.bf16 %v3216, %v3215
        %v3255 = vpack.c.bf16 %v3218, %v3217
        %v3256 = vpack.c.bf16 %v3220, %v3219
        %v3257 = vpack.c.bf16 %v3222, %v3221
        %v3258 = vpack.c.bf16 %v3224, %v3223
        %v3259 = vpack.c.bf16 %v3226, %v3225
        %v3260 = vpack.c.bf16 %v3228, %v3227
        %3261 = vmatprep.subr.bf16.mxu0 0
        %3262 = vmatpush1.bf16.msra.mxu0 %v2233
        %3263 = vmatprep.subr.bf16.mxu0 0
        %3264 = vmatpush1.bf16.msra.mxu0 %v2234
        %3265 = vmatprep.subr.bf16.mxu0 0
        %3266 = vmatpush1.bf16.msra.mxu0 %v2235
        %3267 = vmatprep.subr.bf16.mxu0 0
        %3268 = vmatpush1.bf16.msra.mxu0 %v2236
        %3269 = vmatprep.subr.bf16.mxu0 0
        %3270 = vmatpush1.bf16.msra.mxu0 %v2237
        %3271 = vmatprep.subr.bf16.mxu0 0
        %3272 = vmatpush1.bf16.msra.mxu0 %v2238
        %3273 = vmatprep.subr.bf16.mxu0 0
        %3274 = vmatpush1.bf16.msra.mxu0 %v2239
        %3275 = vmatprep.subr.bf16.mxu0 0
        %3276 = vmatpush1.bf16.msra.mxu0 %v2240
        %3277 = vmatprep.subr.bf16.mxu0 0
        %3278 = vmatpush1.bf16.msra.mxu0 0
        %3279 = vmatprep.subr.bf16.mxu0 0
        %3280 = vmatpush1.bf16.msra.mxu0 0
        %3281 = vmatprep.subr.bf16.mxu0 0
        %3282 = vmatpush1.bf16.msra.mxu0 0
        %3283 = vmatprep.subr.bf16.mxu0 0
        %3284 = vmatpush1.bf16.msra.mxu0 0
        %3285 = vmatprep.subr.bf16.mxu0 0
        %3286 = vmatpush1.bf16.msra.mxu0 0
        %3287 = vmatprep.subr.bf16.mxu0 0
        %3288 = vmatpush1.bf16.msra.mxu0 0
        %3289 = vmatprep.subr.bf16.mxu0 0
        %3290 = vmatpush1.bf16.msra.mxu0 0
        %3291 = vmatprep.subr.bf16.mxu0 0
        %3292 = vmatpush1.bf16.msra.mxu0 0
        %3293 = vmatprep.mubr.bf16.mxu0 0
        %3294 = vmatmul.mubr.bf16.gmra.mrb[0].mxu0 %v3229
        %v3295 = vpop.f32.mrb[0].mxu0
        %v3296 = vadd.f32 0.0, %v3295
        %v3297 = vpop.f32.mrb[0].mxu0
        %v3298 = vpop.f32.mrb[0].mxu0
        %v3299 = vadd.f32 0.0, %v3298
        %v3300 = vpop.f32.mrb[0].mxu0
        %3301 = vmatprep.mubr.bf16.mxu0 0
        %3302 = vmatmul.mubr.bf16.gmra.mrb[0].mxu0 %v3230
        %v3303 = vpop.f32.mrb[0].mxu0
        %v3304 = vadd.f32 0.0, %v3303
        %v3305 = vpop.f32.mrb[0].mxu0
        %v3306 = vpop.f32.mrb[0].mxu0
        %v3307 = vadd.f32 0.0, %v3306
        %v3308 = vpop.f32.mrb[0].mxu0
        %3309 = vmatprep.mubr.bf16.mxu0 0
        %3310 = vmatmul.mubr.bf16.gmra.mrb[0].mxu0 %v3231
        %v3311 = vpop.f32.mrb[0].mxu0
        %v3312 = vadd.f32 0.0, %v3311
        %v3313 = vpop.f32.mrb[0].mxu0
        %v3314 = vpop.f32.mrb[0].mxu0
        %v3315 = vadd.f32 0.0, %v3314
        %v3316 = vpop.f32.mrb[0].mxu0
        %3317 = vmatprep.mubr.bf16.mxu0 0
        %3318 = vmatmul.mubr.bf16.gmra.mrb[0].mxu0 %v3232
        %v3319 = vpop.f32.mrb[0].mxu0
        %v3320 = vadd.f32 0.0, %v3319
        %v3321 = vpop.f32.mrb[0].mxu0
        %v3322 = vpop.f32.mrb[0].mxu0
        %v3323 = vadd.f32 0.0, %v3322
        %v3324 = vpop.f32.mrb[0].mxu0
        %3325 = vmatprep.mubr.bf16.mxu0 0
        %3326 = vmatmul.mubr.bf16.gmra.mrb[0].mxu0 %v3233
        %v3327 = vpop.f32.mrb[0].mxu0
        %v3328 = vadd.f32 0.0, %v3327
        %v3329 = vpop.f32.mrb[0].mxu0
        %v3330 = vpop.f32.mrb[0].mxu0
        %v3331 = vadd.f32 0.0, %v3330
        %v3332 = vpop.f32.mrb[0].mxu0
        %3333 = vmatprep.mubr.bf16.mxu0 0
        %3334 = vmatmul.mubr.bf16.gmra.mrb[0].mxu0 %v3234
        %v3335 = vpop.f32.mrb[0].mxu0
        %v3336 = vadd.f32 0.0, %v3335
        %v3337 = vpop.f32.mrb[0].mxu0
        %v3338 = vpop.f32.mrb[0].mxu0
        %v3339 = vadd.f32 0.0, %v3338
        %v3340 = vpop.f32.mrb[0].mxu0
        %3341 = vmatprep.mubr.bf16.mxu0 0
        %3342 = vmatmul.mubr.bf16.gmra.mrb[0].mxu0 %v3235
        %v3343 = vpop.f32.mrb[0].mxu0
        %v3344 = vadd.f32 0.0, %v3343
        %v3345 = vpop.f32.mrb[0].mxu0
        %v3346 = vpop.f32.mrb[0].mxu0
        %v3347 = vadd.f32 0.0, %v3346
        %v3348 = vpop.f32.mrb[0].mxu0
        %3349 = vmatprep.mubr.bf16.mxu0 0
        %3350 = vmatmul.mubr.bf16.gmra.mrb[0].mxu0 %v3236
        %v3351 = vpop.f32.mrb[0].mxu0
        %v3352 = vadd.f32 0.0, %v3351
        %v3353 = vpop.f32.mrb[0].mxu0
        %v3354 = vpop.f32.mrb[0].mxu0
        %v3355 = vadd.f32 0.0, %v3354
        %v3356 = vpop.f32.mrb[0].mxu0
        %3357 = vdwg.mxu0
        %3358 = vmatprep.subr.bf16.mxu0 0
        %3359 = vmatpush1.bf16.msra.mxu0 %v2241
        %3360 = vmatprep.subr.bf16.mxu0 0
        %3361 = vmatpush1.bf16.msra.mxu0 %v2242
        %3362 = vmatprep.subr.bf16.mxu0 0
        %3363 = vmatpush1.bf16.msra.mxu0 %v2243
        %3364 = vmatprep.subr.bf16.mxu0 0
        %3365 = vmatpush1.bf16.msra.mxu0 %v2244
        %3366 = vmatprep.subr.bf16.mxu0 0
        %3367 = vmatpush1.bf16.msra.mxu0 %v2245
        %3368 = vmatprep.subr.bf16.mxu0 0
        %3369 = vmatpush1.bf16.msra.mxu0 %v2246
        %3370 = vmatprep.subr.bf16.mxu0 0
        %3371 = vmatpush1.bf16.msra.mxu0 %v2247
        %3372 = vmatprep.subr.bf16.mxu0 0
        %3373 = vmatpush1.bf16.msra.mxu0 %v2248
        %3374 = vmatprep.subr.bf16.mxu0 0
        %3375 = vmatpush1.bf16.msra.mxu0 0
        %3376 = vmatprep.subr.bf16.mxu0 0
        %3377 = vmatpush1.bf16.msra.mxu0 0
        %3378 = vmatprep.subr.bf16.mxu0 0
        %3379 = vmatpush1.bf16.msra.mxu0 0
        %3380 = vmatprep.subr.bf16.mxu0 0
        %3381 = vmatpush1.bf16.msra.mxu0 0
        %3382 = vmatprep.subr.bf16.mxu0 0
        %3383 = vmatpush1.bf16.msra.mxu0 0
        %3384 = vmatprep.subr.bf16.mxu0 0
        %3385 = vmatpush1.bf16.msra.mxu0 0
        %3386 = vmatprep.subr.bf16.mxu0 0
        %3387 = vmatpush1.bf16.msra.mxu0 0
        %3388 = vmatprep.subr.bf16.mxu0 0
        %3389 = vmatpush1.bf16.msra.mxu0 0
        %3390 = vmatprep.mubr.bf16.mxu0 0
        %3391 = vmatmul.mubr.bf16.gmra.mrb[0].mxu0 %v3237
        %v3392 = vpop.f32.mrb[0].mxu0
        %v3393 = vadd.f32 0.0, %v3392
        %v3394 = vpop.f32.mrb[0].mxu0
        %v3395 = vpop.f32.mrb[0].mxu0
        %v3396 = vadd.f32 0.0, %v3395
        %v3397 = vpop.f32.mrb[0].mxu0
        %3398 = vmatprep.mubr.bf16.mxu0 0
        %3399 = vmatmul.mubr.bf16.gmra.mrb[0].mxu0 %v3238
        %v3400 = vpop.f32.mrb[0].mxu0
        %v3401 = vadd.f32 0.0, %v3400
        %v3402 = vpop.f32.mrb[0].mxu0
        %v3403 = vpop.f32.mrb[0].mxu0
        %v3404 = vadd.f32 0.0, %v3403
        %v3405 = vpop.f32.mrb[0].mxu0
        %3406 = vmatprep.mubr.bf16.mxu0 0
        %3407 = vmatmul.mubr.bf16.gmra.mrb[0].mxu0 %v3239
        %v3408 = vpop.f32.mrb[0].mxu0
        %v3409 = vadd.f32 0.0, %v3408
        %v3410 = vpop.f32.mrb[0].mxu0
        %v3411 = vpop.f32.mrb[0].mxu0
        %v3412 = vadd.f32 0.0, %v3411
        %v3413 = vpop.f32.mrb[0].mxu0
        %3414 = vmatprep.mubr.bf16.mxu0 0
        %3415 = vmatmul.mubr.bf16.gmra.mrb[0].mxu0 %v3240
        %v3416 = vpop.f32.mrb[0].mxu0
        %v3417 = vadd.f32 0.0, %v3416
        %v3418 = vpop.f32.mrb[0].mxu0
        %v3419 = vpop.f32.mrb[0].mxu0
        %v3420 = vadd.f32 0.0, %v3419
        %v3421 = vpop.f32.mrb[0].mxu0
        %3422 = vmatprep.mubr.bf16.mxu0 0
        %3423 = vmatmul.mubr.bf16.gmra.mrb[0].mxu0 %v3241
        %v3424 = vpop.f32.mrb[0].mxu0
        %v3425 = vadd.f32 0.0, %v3424
        %v3426 = vpop.f32.mrb[0].mxu0
        %v3427 = vpop.f32.mrb[0].mxu0
        %v3428 = vadd.f32 0.0, %v3427
        %v3429 = vpop.f32.mrb[0].mxu0
        %3430 = vmatprep.mubr.bf16.mxu0 0
        %3431 = vmatmul.mubr.bf16.gmra.mrb[0].mxu0 %v3242
        %v3432 = vpop.f32.mrb[0].mxu0
        %v3433 = vadd.f32 0.0, %v3432
        %v3434 = vpop.f32.mrb[0].mxu0
        %v3435 = vpop.f32.mrb[0].mxu0
        %v3436 = vadd.f32 0.0, %v3435
        %v3437 = vpop.f32.mrb[0].mxu0
        %3438 = vmatprep.mubr.bf16.mxu0 0
        %3439 = vmatmul.mubr.bf16.gmra.mrb[0].mxu0 %v3243
        %v3440 = vpop.f32.mrb[0].mxu0
        %v3441 = vadd.f32 0.0, %v3440
        %v3442 = vpop.f32.mrb[0].mxu0
        %v3443 = vpop.f32.mrb[0].mxu0
        %v3444 = vadd.f32 0.0, %v3443
        %v3445 = vpop.f32.mrb[0].mxu0
        %3446 = vmatprep.mubr.bf16.mxu0 0
        %3447 = vmatmul.mubr.bf16.gmra.mrb[0].mxu0 %v3244
        %v3448 = vpop.f32.mrb[0].mxu0
        %v3449 = vadd.f32 0.0, %v3448
        %v3450 = vpop.f32.mrb[0].mxu0
        %v3451 = vpop.f32.mrb[0].mxu0
        %v3452 = vadd.f32 0.0, %v3451
        %v3453 = vpop.f32.mrb[0].mxu0
        %3454 = vdwg.mxu0
        %3455 = vmatprep.subr.bf16.mxu0 0
        %3456 = vmatpush1.bf16.msra.mxu0 %v2249
        %3457 = vmatprep.subr.bf16.mxu0 0
        %3458 = vmatpush1.bf16.msra.mxu0 %v2250
        %3459 = vmatprep.subr.bf16.mxu0 0
        %3460 = vmatpush1.bf16.msra.mxu0 %v2251
        %3461 = vmatprep.subr.bf16.mxu0 0
        %3462 = vmatpush1.bf16.msra.mxu0 %v2252
        %3463 = vmatprep.subr.bf16.mxu0 0
        %3464 = vmatpush1.bf16.msra.mxu0 %v2253
        %3465 = vmatprep.subr.bf16.mxu0 0
        %3466 = vmatpush1.bf16.msra.mxu0 %v2254
        %3467 = vmatprep.subr.bf16.mxu0 0
        %3468 = vmatpush1.bf16.msra.mxu0 %v2255
        %3469 = vmatprep.subr.bf16.mxu0 0
        %3470 = vmatpush1.bf16.msra.mxu0 %v2256
        %3471 = vmatprep.subr.bf16.mxu0 0
        %3472 = vmatpush1.bf16.msra.mxu0 0
        %3473 = vmatprep.subr.bf16.mxu0 0
        %3474 = vmatpush1.bf16.msra.mxu0 0
        %3475 = vmatprep.subr.bf16.mxu0 0
        %3476 = vmatpush1.bf16.msra.mxu0 0
        %3477 = vmatprep.subr.bf16.mxu0 0
        %3478 = vmatpush1.bf16.msra.mxu0 0
        %3479 = vmatprep.subr.bf16.mxu0 0
        %3480 = vmatpush1.bf16.msra.mxu0 0
        %3481 = vmatprep.subr.bf16.mxu0 0
        %3482 = vmatpush1.bf16.msra.mxu0 0
        %3483 = vmatprep.subr.bf16.mxu0 0
        %3484 = vmatpush1.bf16.msra.mxu0 0
        %3485 = vmatprep.subr.bf16.mxu0 0
        %3486 = vmatpush1.bf16.msra.mxu0 0
        %3487 = vmatprep.mubr.bf16.mxu0 0
        %3488 = vmatmul.mubr.bf16.gmra.mrb[0].mxu0 %v3245
        %v3489 = vpop.f32.mrb[0].mxu0
        %v3490 = vadd.f32 0.0, %v3489
        %v3491 = vpop.f32.mrb[0].mxu0
        %v3492 = vpop.f32.mrb[0].mxu0
        %v3493 = vadd.f32 0.0, %v3492
        %v3494 = vpop.f32.mrb[0].mxu0
        %3495 = vmatprep.mubr.bf16.mxu0 0
        %3496 = vmatmul.mubr.bf16.gmra.mrb[0].mxu0 %v3246
        %v3497 = vpop.f32.mrb[0].mxu0
        %v3498 = vadd.f32 0.0, %v3497
        %v3499 = vpop.f32.mrb[0].mxu0
        %v3500 = vpop.f32.mrb[0].mxu0
        %v3501 = vadd.f32 0.0, %v3500
        %v3502 = vpop.f32.mrb[0].mxu0
        %3503 = vmatprep.mubr.bf16.mxu0 0
        %3504 = vmatmul.mubr.bf16.gmra.mrb[0].mxu0 %v3247
        %v3505 = vpop.f32.mrb[0].mxu0
        %v3506 = vadd.f32 0.0, %v3505
        %v3507 = vpop.f32.mrb[0].mxu0
        %v3508 = vpop.f32.mrb[0].mxu0
        %v3509 = vadd.f32 0.0, %v3508
        %v3510 = vpop.f32.mrb[0].mxu0
        %3511 = vmatprep.mubr.bf16.mxu0 0
        %3512 = vmatmul.mubr.bf16.gmra.mrb[0].mxu0 %v3248
        %v3513 = vpop.f32.mrb[0].mxu0
        %v3514 = vadd.f32 0.0, %v3513
        %v3515 = vpop.f32.mrb[0].mxu0
        %v3516 = vpop.f32.mrb[0].mxu0
        %v3517 = vadd.f32 0.0, %v3516
        %v3518 = vpop.f32.mrb[0].mxu0
        %3519 = vmatprep.mubr.bf16.mxu0 0
        %3520 = vmatmul.mubr.bf16.gmra.mrb[0].mxu0 %v3249
        %v3521 = vpop.f32.mrb[0].mxu0
        %v3522 = vadd.f32 0.0, %v3521
        %v3523 = vpop.f32.mrb[0].mxu0
        %v3524 = vpop.f32.mrb[0].mxu0
        %v3525 = vadd.f32 0.0, %v3524
        %v3526 = vpop.f32.mrb[0].mxu0
        %3527 = vmatprep.mubr.bf16.mxu0 0
        %3528 = vmatmul.mubr.bf16.gmra.mrb[0].mxu0 %v3250
        %v3529 = vpop.f32.mrb[0].mxu0
        %v3530 = vadd.f32 0.0, %v3529
        %v3531 = vpop.f32.mrb[0].mxu0
        %v3532 = vpop.f32.mrb[0].mxu0
        %v3533 = vadd.f32 0.0, %v3532
        %v3534 = vpop.f32.mrb[0].mxu0
        %3535 = vmatprep.mubr.bf16.mxu0 0
        %3536 = vmatmul.mubr.bf16.gmra.mrb[0].mxu0 %v3251
        %v3537 = vpop.f32.mrb[0].mxu0
        %v3538 = vadd.f32 0.0, %v3537
        %v3539 = vpop.f32.mrb[0].mxu0
        %v3540 = vpop.f32.mrb[0].mxu0
        %v3541 = vadd.f32 0.0, %v3540
        %v3542 = vpop.f32.mrb[0].mxu0
        %3543 = vmatprep.mubr.bf16.mxu0 0
        %3544 = vmatmul.mubr.bf16.gmra.mrb[0].mxu0 %v3252
        %v3545 = vpop.f32.mrb[0].mxu0
        %v3546 = vadd.f32 0.0, %v3545
        %v3547 = vpop.f32.mrb[0].mxu0
        %v3548 = vpop.f32.mrb[0].mxu0
        %v3549 = vadd.f32 0.0, %v3548
        %v3550 = vpop.f32.mrb[0].mxu0
        %3551 = vdwg.mxu0
        %3552 = vmatprep.subr.bf16.mxu0 0
        %3553 = vmatpush1.bf16.msra.mxu0 %v2257
        %3554 = vmatprep.subr.bf16.mxu0 0
        %3555 = vmatpush1.bf16.msra.mxu0 %v2258
        %3556 = vmatprep.subr.bf16.mxu0 0
        %3557 = vmatpush1.bf16.msra.mxu0 %v2259
        %3558 = vmatprep.subr.bf16.mxu0 0
        %3559 = vmatpush1.bf16.msra.mxu0 %v2260
        %3560 = vmatprep.subr.bf16.mxu0 0
        %3561 = vmatpush1.bf16.msra.mxu0 %v2261
        %3562 = vmatprep.subr.bf16.mxu0 0
        %3563 = vmatpush1.bf16.msra.mxu0 %v2262
        %3564 = vmatprep.subr.bf16.mxu0 0
        %3565 = vmatpush1.bf16.msra.mxu0 %v2263
        %3566 = vmatprep.subr.bf16.mxu0 0
        %3567 = vmatpush1.bf16.msra.mxu0 %v2264
        %3568 = vmatprep.subr.bf16.mxu0 0
        %3569 = vmatpush1.bf16.msra.mxu0 0
        %3570 = vmatprep.subr.bf16.mxu0 0
        %3571 = vmatpush1.bf16.msra.mxu0 0
        %3572 = vmatprep.subr.bf16.mxu0 0
        %3573 = vmatpush1.bf16.msra.mxu0 0
        %3574 = vmatprep.subr.bf16.mxu0 0
        %3575 = vmatpush1.bf16.msra.mxu0 0
        %3576 = vmatprep.subr.bf16.mxu0 0
        %3577 = vmatpush1.bf16.msra.mxu0 0
        %3578 = vmatprep.subr.bf16.mxu0 0
        %3579 = vmatpush1.bf16.msra.mxu0 0
        %3580 = vmatprep.subr.bf16.mxu0 0
        %3581 = vmatpush1.bf16.msra.mxu0 0
        %3582 = vmatprep.subr.bf16.mxu0 0
        %3583 = vmatpush1.bf16.msra.mxu0 0
        %3584 = vmatprep.mubr.bf16.mxu0 0
        %3585 = vmatmul.mubr.bf16.gmra.mrb[0].mxu0 %v3253
        %v3586 = vpop.f32.mrb[0].mxu0
        %v3587 = vadd.f32 0.0, %v3586
        %v3588 = vpop.f32.mrb[0].mxu0
        %v3589 = vpop.f32.mrb[0].mxu0
        %v3590 = vadd.f32 0.0, %v3589
        %v3591 = vpop.f32.mrb[0].mxu0
        %3592 = vmatprep.mubr.bf16.mxu0 0
        %3593 = vmatmul.mubr.bf16.gmra.mrb[0].mxu0 %v3254
        %v3594 = vpop.f32.mrb[0].mxu0
        %v3595 = vadd.f32 0.0, %v3594
        %v3596 = vpop.f32.mrb[0].mxu0
        %v3597 = vpop.f32.mrb[0].mxu0
        %v3598 = vadd.f32 0.0, %v3597
        %v3599 = vpop.f32.mrb[0].mxu0
        %3600 = vmatprep.mubr.bf16.mxu0 0
        %3601 = vmatmul.mubr.bf16.gmra.mrb[0].mxu0 %v3255
        %v3602 = vpop.f32.mrb[0].mxu0
        %v3603 = vadd.f32 0.0, %v3602
        %v3604 = vpop.f32.mrb[0].mxu0
        %v3605 = vpop.f32.mrb[0].mxu0
        %v3606 = vadd.f32 0.0, %v3605
        %v3607 = vpop.f32.mrb[0].mxu0
        %3608 = vmatprep.mubr.bf16.mxu0 0
        %3609 = vmatmul.mubr.bf16.gmra.mrb[0].mxu0 %v3256
        %v3610 = vpop.f32.mrb[0].mxu0
        %v3611 = vadd.f32 0.0, %v3610
        %v3612 = vpop.f32.mrb[0].mxu0
        %v3613 = vpop.f32.mrb[0].mxu0
        %v3614 = vadd.f32 0.0, %v3613
        %v3615 = vpop.f32.mrb[0].mxu0
        %3616 = vmatprep.mubr.bf16.mxu0 0
        %3617 = vmatmul.mubr.bf16.gmra.mrb[0].mxu0 %v3257
        %v3618 = vpop.f32.mrb[0].mxu0
        %v3619 = vadd.f32 0.0, %v3618
        %v3620 = vpop.f32.mrb[0].mxu0
        %v3621 = vpop.f32.mrb[0].mxu0
        %v3622 = vadd.f32 0.0, %v3621
        %v3623 = vpop.f32.mrb[0].mxu0
        %3624 = vmatprep.mubr.bf16.mxu0 0
        %3625 = vmatmul.mubr.bf16.gmra.mrb[0].mxu0 %v3258
        %v3626 = vpop.f32.mrb[0].mxu0
        %v3627 = vadd.f32 0.0, %v3626
        %v3628 = vpop.f32.mrb[0].mxu0
        %v3629 = vpop.f32.mrb[0].mxu0
        %v3630 = vadd.f32 0.0, %v3629
        %v3631 = vpop.f32.mrb[0].mxu0
        %3632 = vmatprep.mubr.bf16.mxu0 0
        %3633 = vmatmul.mubr.bf16.gmra.mrb[0].mxu0 %v3259
        %v3634 = vpop.f32.mrb[0].mxu0
        %v3635 = vadd.f32 0.0, %v3634
        %v3636 = vpop.f32.mrb[0].mxu0
        %v3637 = vpop.f32.mrb[0].mxu0
        %v3638 = vadd.f32 0.0, %v3637
        %v3639 = vpop.f32.mrb[0].mxu0
        %3640 = vmatprep.mubr.bf16.mxu0 0
        %3641 = vmatmul.mubr.bf16.gmra.mrb[0].mxu0 %v3260
        %v3642 = vpop.f32.mrb[0].mxu0
        %v3643 = vadd.f32 0.0, %v3642
        %v3644 = vpop.f32.mrb[0].mxu0
        %v3645 = vpop.f32.mrb[0].mxu0
        %v3646 = vadd.f32 0.0, %v3645
        %v3647 = vpop.f32.mrb[0].mxu0
        %3648 = vdwg.mxu0
        %v3649 = vpack.c.bf16 %v3299, %v3296
        %v3650 = vpack.c.bf16 %v3307, %v3304
        %v3651 = vpack.c.bf16 %v3315, %v3312
        %v3652 = vpack.c.bf16 %v3323, %v3320
        %v3653 = vpack.c.bf16 %v3331, %v3328
        %v3654 = vpack.c.bf16 %v3339, %v3336
        %v3655 = vpack.c.bf16 %v3347, %v3344
        %v3656 = vpack.c.bf16 %v3355, %v3352
        %v3657 = vpack.c.bf16 %v3396, %v3393
        %v3658 = vpack.c.bf16 %v3404, %v3401
        %v3659 = vpack.c.bf16 %v3412, %v3409
        %v3660 = vpack.c.bf16 %v3420, %v3417
        %v3661 = vpack.c.bf16 %v3428, %v3425
        %v3662 = vpack.c.bf16 %v3436, %v3433
        %v3663 = vpack.c.bf16 %v3444, %v3441
        %v3664 = vpack.c.bf16 %v3452, %v3449
        %v3665 = vpack.c.bf16 %v3493, %v3490
        %v3666 = vpack.c.bf16 %v3501, %v3498
        %v3667 = vpack.c.bf16 %v3509, %v3506
        %v3668 = vpack.c.bf16 %v3517, %v3514
        %v3669 = vpack.c.bf16 %v3525, %v3522
        %v3670 = vpack.c.bf16 %v3533, %v3530
        %v3671 = vpack.c.bf16 %v3541, %v3538
        %v3672 = vpack.c.bf16 %v3549, %v3546
        %v3673 = vpack.c.bf16 %v3590, %v3587
        %v3674 = vpack.c.bf16 %v3598, %v3595
        %v3675 = vpack.c.bf16 %v3606, %v3603
        %v3676 = vpack.c.bf16 %v3614, %v3611
        %v3677 = vpack.c.bf16 %v3622, %v3619
        %v3678 = vpack.c.bf16 %v3630, %v3627
        %v3679 = vpack.c.bf16 %v3638, %v3635
        %v3680 = vpack.c.bf16 %v3646, %v3643
        %v3681 = vld [vmem:[%s5] sm:$0xf]
        %v3682 = vld [vmem:[%s5 + $0x4] sm:$0xf]
        %v3683 = vld [vmem:[%s5 + $0x8] sm:$0xf]
        %v3684 = vld [vmem:[%s5 + $0xc] sm:$0xf]
        %v3685 = vld [vmem:[%s5 + $0x10] sm:$0xf]
        %v3686 = vld [vmem:[%s5 + $0x14] sm:$0xf]
        %v3687 = vld [vmem:[%s5 + $0x18] sm:$0xf]
        %v3688 = vld [vmem:[%s5 + $0x1c] sm:$0xf]
        %v3689 = vld [vmem:[%s5 + $0x20] sm:$0xf]
        %v3690 = vld [vmem:[%s5 + $0x24] sm:$0xf]
        %v3691 = vld [vmem:[%s5 + $0x28] sm:$0xf]
        %v3692 = vld [vmem:[%s5 + $0x2c] sm:$0xf]
        %v3693 = vld [vmem:[%s5 + $0x30] sm:$0xf]
        %v3694 = vld [vmem:[%s5 + $0x34] sm:$0xf]
        %v3695 = vld [vmem:[%s5 + $0x38] sm:$0xf]
        %v3696 = vld [vmem:[%s5 + $0x3c] sm:$0xf]
        %v3697 = vld [vmem:[%s6] sm:$0x1]
        %v3699 = vlaneseq
        %v3700 = vshrl.u32 %v3699, 7
        %v3701 = vsub.s32 0, %v3700
        %v3702 = vrot.slane %v3697, %v3701
        %v3720 = vunpack.c.l.b16 %v3681
        %v3721 = vunpack.c.l.b16 %v3682
        %v3722 = vunpack.c.l.b16 %v3683
        %v3723 = vunpack.c.l.b16 %v3684
        %v3724 = vunpack.c.l.b16 %v3685
        %v3725 = vunpack.c.l.b16 %v3686
        %v3726 = vunpack.c.l.b16 %v3687
        %v3727 = vunpack.c.l.b16 %v3688
        %v3728 = vunpack.c.l.b16 %v3689
        %v3729 = vunpack.c.l.b16 %v3690
        %v3730 = vunpack.c.l.b16 %v3691
        %v3731 = vunpack.c.l.b16 %v3692
        %v3732 = vunpack.c.l.b16 %v3693
        %v3733 = vunpack.c.l.b16 %v3694
        %v3734 = vunpack.c.l.b16 %v3695
        %v3735 = vunpack.c.l.b16 %v3696
        %v3736 = vpack.c.b16 %v3721, %v3720
        %v3737 = vpack.c.b16 %v3723, %v3722
        %v3738 = vpack.c.b16 %v3725, %v3724
        %v3739 = vpack.c.b16 %v3727, %v3726
        %v3740 = vpack.c.b16 %v3729, %v3728
        %v3741 = vpack.c.b16 %v3731, %v3730
        %v3742 = vpack.c.b16 %v3733, %v3732
        %v3743 = vpack.c.b16 %v3735, %v3734
        %3752 = vmatprep.subr.bf16.mxu0 0
        %3753 = vmatpush1.bf16.msra.mxu0 %v3736
        %3754 = vmatprep.subr.bf16.mxu0 0
        %3755 = vmatpush1.bf16.msra.mxu0 %v3737
        %3756 = vmatprep.subr.bf16.mxu0 0
        %3757 = vmatpush1.bf16.msra.mxu0 %v3738
        %3758 = vmatprep.subr.bf16.mxu0 0
        %3759 = vmatpush1.bf16.msra.mxu0 %v3739
        %3760 = vmatprep.subr.bf16.mxu0 0
        %3761 = vmatpush1.bf16.msra.mxu0 %v3740
        %3762 = vmatprep.subr.bf16.mxu0 0
        %3763 = vmatpush1.bf16.msra.mxu0 %v3741
        %3764 = vmatprep.subr.bf16.mxu0 0
        %3765 = vmatpush1.bf16.msra.mxu0 %v3742
        %3766 = vmatprep.subr.bf16.mxu0 0
        %3767 = vmatpush1.bf16.msra.mxu0 %v3743
        %3768 = vmatprep.subr.bf16.mxu0 0
        %3769 = vmatpush1.bf16.msra.mxu0 0
        %3770 = vmatprep.subr.bf16.mxu0 0
        %3771 = vmatpush1.bf16.msra.mxu0 0
        %3772 = vmatprep.subr.bf16.mxu0 0
        %3773 = vmatpush1.bf16.msra.mxu0 0
        %3774 = vmatprep.subr.bf16.mxu0 0
        %3775 = vmatpush1.bf16.msra.mxu0 0
        %3776 = vmatprep.subr.bf16.mxu0 0
        %3777 = vmatpush1.bf16.msra.mxu0 0
        %3778 = vmatprep.subr.bf16.mxu0 0
        %3779 = vmatpush1.bf16.msra.mxu0 0
        %3780 = vmatprep.subr.bf16.mxu0 0
        %3781 = vmatpush1.bf16.msra.mxu0 0
        %3782 = vmatprep.subr.bf16.mxu0 0
        %3783 = vmatpush1.bf16.msra.mxu0 0
        %3784 = vmatprep.mubr.bf16.mxu0 0
        %3785 = vmatmul.mubr.bf16.gmra.mrb[0].mxu0 %v3649
        %v3786 = vpop.f32.mrb[0].mxu0
        %v3787 = vadd.f32 %v3702, %v3786
        %v3788 = vpop.f32.mrb[0].mxu0
        %v3789 = vpop.f32.mrb[0].mxu0
        %v3790 = vadd.f32 %v3702, %v3789
        %v3791 = vpop.f32.mrb[0].mxu0
        %3792 = vmatprep.mubr.bf16.mxu0 0
        %3793 = vmatmul.mubr.bf16.gmra.mrb[0].mxu0 %v3650
        %v3794 = vpop.f32.mrb[0].mxu0
        %v3795 = vadd.f32 %v3702, %v3794
        %v3796 = vpop.f32.mrb[0].mxu0
        %v3797 = vpop.f32.mrb[0].mxu0
        %v3798 = vadd.f32 %v3702, %v3797
        %v3799 = vpop.f32.mrb[0].mxu0
        %3800 = vmatprep.mubr.bf16.mxu0 0
        %3801 = vmatmul.mubr.bf16.gmra.mrb[0].mxu0 %v3651
        %v3802 = vpop.f32.mrb[0].mxu0
        %v3803 = vadd.f32 %v3702, %v3802
        %v3804 = vpop.f32.mrb[0].mxu0
        %v3805 = vpop.f32.mrb[0].mxu0
        %v3806 = vadd.f32 %v3702, %v3805
        %v3807 = vpop.f32.mrb[0].mxu0
        %3808 = vmatprep.mubr.bf16.mxu0 0
        %3809 = vmatmul.mubr.bf16.gmra.mrb[0].mxu0 %v3652
        %v3810 = vpop.f32.mrb[0].mxu0
        %v3811 = vadd.f32 %v3702, %v3810
        %v3812 = vpop.f32.mrb[0].mxu0
        %v3813 = vpop.f32.mrb[0].mxu0
        %v3814 = vadd.f32 %v3702, %v3813
        %v3815 = vpop.f32.mrb[0].mxu0
        %3816 = vmatprep.mubr.bf16.mxu0 0
        %3817 = vmatmul.mubr.bf16.gmra.mrb[0].mxu0 %v3653
        %v3818 = vpop.f32.mrb[0].mxu0
        %v3819 = vadd.f32 %v3702, %v3818
        %v3820 = vpop.f32.mrb[0].mxu0
        %v3821 = vpop.f32.mrb[0].mxu0
        %v3822 = vadd.f32 %v3702, %v3821
        %v3823 = vpop.f32.mrb[0].mxu0
        %3824 = vmatprep.mubr.bf16.mxu0 0
        %3825 = vmatmul.mubr.bf16.gmra.mrb[0].mxu0 %v3654
        %v3826 = vpop.f32.mrb[0].mxu0
        %v3827 = vadd.f32 %v3702, %v3826
        %v3828 = vpop.f32.mrb[0].mxu0
        %v3829 = vpop.f32.mrb[0].mxu0
        %v3830 = vadd.f32 %v3702, %v3829
        %v3831 = vpop.f32.mrb[0].mxu0
        %3832 = vmatprep.mubr.bf16.mxu0 0
        %3833 = vmatmul.mubr.bf16.gmra.mrb[0].mxu0 %v3655
        %v3834 = vpop.f32.mrb[0].mxu0
        %v3835 = vadd.f32 %v3702, %v3834
        %v3836 = vpop.f32.mrb[0].mxu0
        %v3837 = vpop.f32.mrb[0].mxu0
        %v3838 = vadd.f32 %v3702, %v3837
        %v3839 = vpop.f32.mrb[0].mxu0
        %3840 = vmatprep.mubr.bf16.mxu0 0
        %3841 = vmatmul.mubr.bf16.gmra.mrb[0].mxu0 %v3656
        %v3842 = vpop.f32.mrb[0].mxu0
        %v3843 = vadd.f32 %v3702, %v3842
        %v3844 = vpop.f32.mrb[0].mxu0
        %v3845 = vpop.f32.mrb[0].mxu0
        %v3846 = vadd.f32 %v3702, %v3845
        %v3847 = vpop.f32.mrb[0].mxu0
        %3848 = vmatprep.mubr.bf16.mxu0 0
        %3849 = vmatmul.mubr.bf16.gmra.mrb[0].mxu0 %v3657
        %v3850 = vpop.f32.mrb[0].mxu0
        %v3851 = vadd.f32 %v3702, %v3850
        %v3852 = vpop.f32.mrb[0].mxu0
        %v3853 = vpop.f32.mrb[0].mxu0
        %v3854 = vadd.f32 %v3702, %v3853
        %v3855 = vpop.f32.mrb[0].mxu0
        %3856 = vmatprep.mubr.bf16.mxu0 0
        %3857 = vmatmul.mubr.bf16.gmra.mrb[0].mxu0 %v3658
        %v3858 = vpop.f32.mrb[0].mxu0
        %v3859 = vadd.f32 %v3702, %v3858
        %v3860 = vpop.f32.mrb[0].mxu0
        %v3861 = vpop.f32.mrb[0].mxu0
        %v3862 = vadd.f32 %v3702, %v3861
        %v3863 = vpop.f32.mrb[0].mxu0
        %3864 = vmatprep.mubr.bf16.mxu0 0
        %3865 = vmatmul.mubr.bf16.gmra.mrb[0].mxu0 %v3659
        %v3866 = vpop.f32.mrb[0].mxu0
        %v3867 = vadd.f32 %v3702, %v3866
        %v3868 = vpop.f32.mrb[0].mxu0
        %v3869 = vpop.f32.mrb[0].mxu0
        %v3870 = vadd.f32 %v3702, %v3869
        %v3871 = vpop.f32.mrb[0].mxu0
        %3872 = vmatprep.mubr.bf16.mxu0 0
        %3873 = vmatmul.mubr.bf16.gmra.mrb[0].mxu0 %v3660
        %v3874 = vpop.f32.mrb[0].mxu0
        %v3875 = vadd.f32 %v3702, %v3874
        %v3876 = vpop.f32.mrb[0].mxu0
        %v3877 = vpop.f32.mrb[0].mxu0
        %v3878 = vadd.f32 %v3702, %v3877
        %v3879 = vpop.f32.mrb[0].mxu0
        %3880 = vmatprep.mubr.bf16.mxu0 0
        %3881 = vmatmul.mubr.bf16.gmra.mrb[0].mxu0 %v3661
        %v3882 = vpop.f32.mrb[0].mxu0
        %v3883 = vadd.f32 %v3702, %v3882
        %v3884 = vpop.f32.mrb[0].mxu0
        %v3885 = vpop.f32.mrb[0].mxu0
        %v3886 = vadd.f32 %v3702, %v3885
        %v3887 = vpop.f32.mrb[0].mxu0
        %3888 = vmatprep.mubr.bf16.mxu0 0
        %3889 = vmatmul.mubr.bf16.gmra.mrb[0].mxu0 %v3662
        %v3890 = vpop.f32.mrb[0].mxu0
        %v3891 = vadd.f32 %v3702, %v3890
        %v3892 = vpop.f32.mrb[0].mxu0
        %v3893 = vpop.f32.mrb[0].mxu0
        %v3894 = vadd.f32 %v3702, %v3893
        %v3895 = vpop.f32.mrb[0].mxu0
        %3896 = vmatprep.mubr.bf16.mxu0 0
        %3897 = vmatmul.mubr.bf16.gmra.mrb[0].mxu0 %v3663
        %v3898 = vpop.f32.mrb[0].mxu0
        %v3899 = vadd.f32 %v3702, %v3898
        %v3900 = vpop.f32.mrb[0].mxu0
        %v3901 = vpop.f32.mrb[0].mxu0
        %v3902 = vadd.f32 %v3702, %v3901
        %v3903 = vpop.f32.mrb[0].mxu0
        %3904 = vmatprep.mubr.bf16.mxu0 0
        %3905 = vmatmul.mubr.bf16.gmra.mrb[0].mxu0 %v3664
        %v3906 = vpop.f32.mrb[0].mxu0
        %v3907 = vadd.f32 %v3702, %v3906
        %v3908 = vpop.f32.mrb[0].mxu0
        %v3909 = vpop.f32.mrb[0].mxu0
        %v3910 = vadd.f32 %v3702, %v3909
        %v3911 = vpop.f32.mrb[0].mxu0
        %3912 = vmatprep.mubr.bf16.mxu0 0
        %3913 = vmatmul.mubr.bf16.gmra.mrb[0].mxu0 %v3665
        %v3914 = vpop.f32.mrb[0].mxu0
        %v3915 = vadd.f32 %v3702, %v3914
        %v3916 = vpop.f32.mrb[0].mxu0
        %v3917 = vpop.f32.mrb[0].mxu0
        %v3918 = vadd.f32 %v3702, %v3917
        %v3919 = vpop.f32.mrb[0].mxu0
        %3920 = vmatprep.mubr.bf16.mxu0 0
        %3921 = vmatmul.mubr.bf16.gmra.mrb[0].mxu0 %v3666
        %v3922 = vpop.f32.mrb[0].mxu0
        %v3923 = vadd.f32 %v3702, %v3922
        %v3924 = vpop.f32.mrb[0].mxu0
        %v3925 = vpop.f32.mrb[0].mxu0
        %v3926 = vadd.f32 %v3702, %v3925
        %v3927 = vpop.f32.mrb[0].mxu0
        %3928 = vmatprep.mubr.bf16.mxu0 0
        %3929 = vmatmul.mubr.bf16.gmra.mrb[0].mxu0 %v3667
        %v3930 = vpop.f32.mrb[0].mxu0
        %v3931 = vadd.f32 %v3702, %v3930
        %v3932 = vpop.f32.mrb[0].mxu0
        %v3933 = vpop.f32.mrb[0].mxu0
        %v3934 = vadd.f32 %v3702, %v3933
        %v3935 = vpop.f32.mrb[0].mxu0
        %3936 = vmatprep.mubr.bf16.mxu0 0
        %3937 = vmatmul.mubr.bf16.gmra.mrb[0].mxu0 %v3668
        %v3938 = vpop.f32.mrb[0].mxu0
        %v3939 = vadd.f32 %v3702, %v3938
        %v3940 = vpop.f32.mrb[0].mxu0
        %v3941 = vpop.f32.mrb[0].mxu0
        %v3942 = vadd.f32 %v3702, %v3941
        %v3943 = vpop.f32.mrb[0].mxu0
        %3944 = vmatprep.mubr.bf16.mxu0 0
        %3945 = vmatmul.mubr.bf16.gmra.mrb[0].mxu0 %v3669
        %v3946 = vpop.f32.mrb[0].mxu0
        %v3947 = vadd.f32 %v3702, %v3946
        %v3948 = vpop.f32.mrb[0].mxu0
        %v3949 = vpop.f32.mrb[0].mxu0
        %v3950 = vadd.f32 %v3702, %v3949
        %v3951 = vpop.f32.mrb[0].mxu0
        %3952 = vmatprep.mubr.bf16.mxu0 0
        %3953 = vmatmul.mubr.bf16.gmra.mrb[0].mxu0 %v3670
        %v3954 = vpop.f32.mrb[0].mxu0
        %v3955 = vadd.f32 %v3702, %v3954
        %v3956 = vpop.f32.mrb[0].mxu0
        %v3957 = vpop.f32.mrb[0].mxu0
        %v3958 = vadd.f32 %v3702, %v3957
        %v3959 = vpop.f32.mrb[0].mxu0
        %3960 = vmatprep.mubr.bf16.mxu0 0
        %3961 = vmatmul.mubr.bf16.gmra.mrb[0].mxu0 %v3671
        %v3962 = vpop.f32.mrb[0].mxu0
        %v3963 = vadd.f32 %v3702, %v3962
        %v3964 = vpop.f32.mrb[0].mxu0
        %v3965 = vpop.f32.mrb[0].mxu0
        %v3966 = vadd.f32 %v3702, %v3965
        %v3967 = vpop.f32.mrb[0].mxu0
        %3968 = vmatprep.mubr.bf16.mxu0 0
        %3969 = vmatmul.mubr.bf16.gmra.mrb[0].mxu0 %v3672
        %v3970 = vpop.f32.mrb[0].mxu0
        %v3971 = vadd.f32 %v3702, %v3970
        %v3972 = vpop.f32.mrb[0].mxu0
        %v3973 = vpop.f32.mrb[0].mxu0
        %v3974 = vadd.f32 %v3702, %v3973
        %v3975 = vpop.f32.mrb[0].mxu0
        %3976 = vmatprep.mubr.bf16.mxu0 0
        %3977 = vmatmul.mubr.bf16.gmra.mrb[0].mxu0 %v3673
        %v3978 = vpop.f32.mrb[0].mxu0
        %v3979 = vadd.f32 %v3702, %v3978
        %v3980 = vpop.f32.mrb[0].mxu0
        %v3981 = vpop.f32.mrb[0].mxu0
        %v3982 = vadd.f32 %v3702, %v3981
        %v3983 = vpop.f32.mrb[0].mxu0
        %3984 = vmatprep.mubr.bf16.mxu0 0
        %3985 = vmatmul.mubr.bf16.gmra.mrb[0].mxu0 %v3674
        %v3986 = vpop.f32.mrb[0].mxu0
        %v3987 = vadd.f32 %v3702, %v3986
        %v3988 = vpop.f32.mrb[0].mxu0
        %v3989 = vpop.f32.mrb[0].mxu0
        %v3990 = vadd.f32 %v3702, %v3989
        %v3991 = vpop.f32.mrb[0].mxu0
        %3992 = vmatprep.mubr.bf16.mxu0 0
        %3993 = vmatmul.mubr.bf16.gmra.mrb[0].mxu0 %v3675
        %v3994 = vpop.f32.mrb[0].mxu0
        %v3995 = vadd.f32 %v3702, %v3994
        %v3996 = vpop.f32.mrb[0].mxu0
        %v3997 = vpop.f32.mrb[0].mxu0
        %v3998 = vadd.f32 %v3702, %v3997
        %v3999 = vpop.f32.mrb[0].mxu0
        %4000 = vmatprep.mubr.bf16.mxu0 0
        %4001 = vmatmul.mubr.bf16.gmra.mrb[0].mxu0 %v3676
        %v4002 = vpop.f32.mrb[0].mxu0
        %v4003 = vadd.f32 %v3702, %v4002
        %v4004 = vpop.f32.mrb[0].mxu0
        %v4005 = vpop.f32.mrb[0].mxu0
        %v4006 = vadd.f32 %v3702, %v4005
        %v4007 = vpop.f32.mrb[0].mxu0
        %4008 = vmatprep.mubr.bf16.mxu0 0
        %4009 = vmatmul.mubr.bf16.gmra.mrb[0].mxu0 %v3677
        %v4010 = vpop.f32.mrb[0].mxu0
        %v4011 = vadd.f32 %v3702, %v4010
        %v4012 = vpop.f32.mrb[0].mxu0
        %v4013 = vpop.f32.mrb[0].mxu0
        %v4014 = vadd.f32 %v3702, %v4013
        %v4015 = vpop.f32.mrb[0].mxu0
        %4016 = vmatprep.mubr.bf16.mxu0 0
        %4017 = vmatmul.mubr.bf16.gmra.mrb[0].mxu0 %v3678
        %v4018 = vpop.f32.mrb[0].mxu0
        %v4019 = vadd.f32 %v3702, %v4018
        %v4020 = vpop.f32.mrb[0].mxu0
        %v4021 = vpop.f32.mrb[0].mxu0
        %v4022 = vadd.f32 %v3702, %v4021
        %v4023 = vpop.f32.mrb[0].mxu0
        %4024 = vmatprep.mubr.bf16.mxu0 0
        %4025 = vmatmul.mubr.bf16.gmra.mrb[0].mxu0 %v3679
        %v4026 = vpop.f32.mrb[0].mxu0
        %v4027 = vadd.f32 %v3702, %v4026
        %v4028 = vpop.f32.mrb[0].mxu0
        %v4029 = vpop.f32.mrb[0].mxu0
        %v4030 = vadd.f32 %v3702, %v4029
        %v4031 = vpop.f32.mrb[0].mxu0
        %4032 = vmatprep.mubr.bf16.mxu0 0
        %4033 = vmatmul.mubr.bf16.gmra.mrb[0].mxu0 %v3680
        %v4034 = vpop.f32.mrb[0].mxu0
        %v4035 = vadd.f32 %v3702, %v4034
        %v4036 = vpop.f32.mrb[0].mxu0
        %v4037 = vpop.f32.mrb[0].mxu0
        %v4038 = vadd.f32 %v3702, %v4037
        %v4039 = vpop.f32.mrb[0].mxu0
        %4040 = vdwg.mxu0
        %4041 = vst [vmem:[%s311] sm:$0xff] %v3787
        %4042 = vst [vmem:[%s311 + $0x8] sm:$0xff] %v3790
        %4043 = vst [vmem:[%s311 + $0x10] sm:$0xff] %v3795
        %4044 = vst [vmem:[%s311 + $0x18] sm:$0xff] %v3798
        %4045 = vst [vmem:[%s311 + $0x20] sm:$0xff] %v3803
        %4046 = vst [vmem:[%s311 + $0x28] sm:$0xff] %v3806
        %4047 = vst [vmem:[%s311 + $0x30] sm:$0xff] %v3811
        %4048 = vst [vmem:[%s311 + $0x38] sm:$0xff] %v3814
        %4049 = vst [vmem:[%s311 + $0x40] sm:$0xff] %v3819
        %4050 = vst [vmem:[%s311 + $0x48] sm:$0xff] %v3822
        %4051 = vst [vmem:[%s311 + $0x50] sm:$0xff] %v3827
        %4052 = vst [vmem:[%s311 + $0x58] sm:$0xff] %v3830
        %4053 = vst [vmem:[%s311 + $0x60] sm:$0xff] %v3835
        %4054 = vst [vmem:[%s311 + $0x68] sm:$0xff] %v3838
        %4055 = vst [vmem:[%s311 + $0x70] sm:$0xff] %v3843
        %4056 = vst [vmem:[%s311 + $0x78] sm:$0xff] %v3846
        %4057 = vst [vmem:[%s311 + $0x80] sm:$0xff] %v3851
        %4058 = vst [vmem:[%s311 + $0x88] sm:$0xff] %v3854
        %4059 = vst [vmem:[%s311 + $0x90] sm:$0xff] %v3859
        %4060 = vst [vmem:[%s311 + $0x98] sm:$0xff] %v3862
        %4061 = vst [vmem:[%s311 + $0xa0] sm:$0xff] %v3867
        %4062 = vst [vmem:[%s311 + $0xa8] sm:$0xff] %v3870
        %4063 = vst [vmem:[%s311 + $0xb0] sm:$0xff] %v3875
        %4064 = vst [vmem:[%s311 + $0xb8] sm:$0xff] %v3878
        %4065 = vst [vmem:[%s311 + $0xc0] sm:$0xff] %v3883
        %4066 = vst [vmem:[%s311 + $0xc8] sm:$0xff] %v3886
        %4067 = vst [vmem:[%s311 + $0xd0] sm:$0xff] %v3891
        %4068 = vst [vmem:[%s311 + $0xd8] sm:$0xff] %v3894
        %4069 = vst [vmem:[%s311 + $0xe0] sm:$0xff] %v3899
        %4070 = vst [vmem:[%s311 + $0xe8] sm:$0xff] %v3902
        %4071 = vst [vmem:[%s311 + $0xf0] sm:$0xff] %v3907
        %4072 = vst [vmem:[%s311 + $0xf8] sm:$0xff] %v3910
        %4073 = vst [vmem:[%s311 + $0x100] sm:$0xff] %v3915
        %4074 = vst [vmem:[%s311 + $0x108] sm:$0xff] %v3918
        %4075 = vst [vmem:[%s311 + $0x110] sm:$0xff] %v3923
        %4076 = vst [vmem:[%s311 + $0x118] sm:$0xff] %v3926
        %4077 = vst [vmem:[%s311 + $0x120] sm:$0xff] %v3931
        %4078 = vst [vmem:[%s311 + $0x128] sm:$0xff] %v3934
        %4079 = vst [vmem:[%s311 + $0x130] sm:$0xff] %v3939
        %4080 = vst [vmem:[%s311 + $0x138] sm:$0xff] %v3942
        %4081 = vst [vmem:[%s311 + $0x140] sm:$0xff] %v3947
        %4082 = vst [vmem:[%s311 + $0x148] sm:$0xff] %v3950
        %4083 = vst [vmem:[%s311 + $0x150] sm:$0xff] %v3955
        %4084 = vst [vmem:[%s311 + $0x158] sm:$0xff] %v3958
        %4085 = vst [vmem:[%s311 + $0x160] sm:$0xff] %v3963
        %4086 = vst [vmem:[%s311 + $0x168] sm:$0xff] %v3966
        %4087 = vst [vmem:[%s311 + $0x170] sm:$0xff] %v3971
        %4088 = vst [vmem:[%s311 + $0x178] sm:$0xff] %v3974
        %4089 = vst [vmem:[%s311 + $0x180] sm:$0xff] %v3979
        %4090 = vst [vmem:[%s311 + $0x188] sm:$0xff] %v3982
        %4091 = vst [vmem:[%s311 + $0x190] sm:$0xff] %v3987
        %4092 = vst [vmem:[%s311 + $0x198] sm:$0xff] %v3990
        %4093 = vst [vmem:[%s311 + $0x1a0] sm:$0xff] %v3995
        %4094 = vst [vmem:[%s311 + $0x1a8] sm:$0xff] %v3998
        %4095 = vst [vmem:[%s311 + $0x1b0] sm:$0xff] %v4003
        %4096 = vst [vmem:[%s311 + $0x1b8] sm:$0xff] %v4006
        %4097 = vst [vmem:[%s311 + $0x1c0] sm:$0xff] %v4011
        %4098 = vst [vmem:[%s311 + $0x1c8] sm:$0xff] %v4014
        %4099 = vst [vmem:[%s311 + $0x1d0] sm:$0xff] %v4019
        %4100 = vst [vmem:[%s311 + $0x1d8] sm:$0xff] %v4022
        %4101 = vst [vmem:[%s311 + $0x1e0] sm:$0xff] %v4027
        %4102 = vst [vmem:[%s311 + $0x1e8] sm:$0xff] %v4030
        %4103 = vst [vmem:[%s311 + $0x1f0] sm:$0xff] %v4035
        %4104 = vst [vmem:[%s311 + $0x1f8] sm:$0xff] %v4038
        %s4105 = sand.u32 %s185, 1
        %s4106 = scalar_lea.sflag [#allocation4], %s4105
        %s4107 = sand.u32 %s185, 1
        %s4108 = smul.addr %s4107, 512
        %s4109 = scalar_lea.vmem [#allocation7], %s4108
        // Predicated region
        $region57: #{tpu_custom_call.1} parent=47 // pred_check
          %p4110 = pneg %p195
        $region58: #{tpu_custom_call.1} parent=47 // pred_check_branch
          %4112 = sbr.rel (%p4110) target = $region60
        $region59: #{tpu_custom_call.1} parent=47 // pred_region
          %s4114 = ssub.s32 8192, 8192
          %4115 = vsyncadd %s4106, %s4114
          %s4116 = smul.addr %s25, 64
          %s4117 = smul.addr %s4116, 128
          %s4118 = scalar_lea.hbm %s7, %s4117
          %s4119 = sshll.u32 %s4109, 4
          %s4120 = int_to_ptr.vmem [resolvable:$true] %s4119
          %4125 = dma.vmem_to_hbm [thread:$0]  %s4120, 8192, %s4118, %s4106, 128, 128, 8
        $region60: #{tpu_custom_call.1} parent=47 // pred_fallthru
          _
      $region48: #{tpu_custom_call.1} parent=5 // pred_fallthru
        _
      %p4126 = scmp.le.s32.totalorder 2, %s20
      // Predicated region
      $region61: #{tpu_custom_call.1} parent=5 // pred_check
        %p4127 = pneg %p4126
      $region62: #{tpu_custom_call.1} parent=5 // pred_check_branch
        %4129 = sbr.rel (%p4127) target = $region64
      $region63: #{tpu_custom_call.1} parent=5 // pred_region
        %s4130 = ssub.s32 %s20, 2
        // Predicated region
        $region65: #{tpu_custom_call.1} parent=63 // pred_check
          %p4131 = pneg %p201
        $region66: #{tpu_custom_call.1} parent=63 // pred_check_branch
          %4133 = sbr.rel (%p4131) target = $region68
        $region67: #{tpu_custom_call.1} parent=63 // pred_region
          %s4134 = sand.u32 %s186, 1
          %s4135 = scalar_lea.sflag [#allocation4], %s4134
          %s4136 = sand.u32 %s186, 1
          %s4137 = smul.addr %s4136, 512
          %s4138 = scalar_lea.vmem [#allocation7], %s4137
          %4139 = dma.done %s4135, 8192
        $region68: #{tpu_custom_call.1} parent=63 // pred_fallthru
          _
      $region64: #{tpu_custom_call.1} parent=5 // pred_fallthru
        _
    $region6: #{tpu_custom_call.1} parent=1 // loop_footer
      %s24 = sadd.s32 1, %s20
    $region7: #{tpu_custom_call.1} parent=1 // loop_footer_branch
      %19 = sbr.rel target = $region3
    $region8: #{tpu_custom_call.1} parent=1 // loop_exit
      _
    %4140 = vsyncpa [#allocation3], 1
    %s4141 = scalar_lea.sflag [#allocation3], 1
    %4142 = vsyncpa %s4141, 1
    %4143 = vsyncpa [#allocation6], 1
    %4144 = vsyncpa [#allocation4], 1
    %s4145 = scalar_lea.sflag [#allocation4], 1
    %4146 = vsyncpa %s4145, 1

</llo_original>
